<compile_context>
chip_gen: v6e
topology: v6e:2x2x1
jax: 0.10.0
libtpu: 0.0.40
codegen_flags: <defaults>
</compile_context>

<pallas_src>
import jax
import jax.numpy as jnp
from jax.experimental import pallas as pl
from jax.experimental.pallas import tpu as pltpu


def _la_mlp_kernel(x_ref, wf_ref, bf_ref, wa_ref, ba_ref,
                   wl1_ref, wl2_ref, bl_ref, bns_ref, bnb_ref,
                   wout_ref, bout_ref, w1_ref, b1_ref, w2_ref, b2_ref,
                   w3_ref, b3_ref, logits_ref, emb_ref):
    f32 = jnp.float32
    ksize = wf_ref.shape[0]
    Lp = x_ref.shape[1]                 # padded sequence length (L + ksize - 1)
    L = Lp - (ksize - 1)
    E = x_ref.shape[2]

    # --- two Conv1d(E, E, k) layers as k shifted matmuls, L on sublanes, E on lanes ---
    o = jnp.zeros((L, E), f32)
    a = jnp.zeros((L, E), f32)
    for t in range(ksize):
        xs = x_ref[0, t:t + L, :]       # shifted (L, E) window of the zero-padded input
        o = o + jnp.dot(xs, wf_ref[t], preferred_element_type=f32)
        a = a + jnp.dot(xs, wa_ref[t], preferred_element_type=f32)
    o = o + bf_ref[...]                 # feature conv bias (1, E) broadcast over L
    a = a + ba_ref[...]                 # attention conv bias
    # conv dropout: identity (eval mode)

    # --- softmax over the sequence axis (axis 0 here == dim=-1 in the NCL reference) ---
    a = a - jnp.max(a, axis=0, keepdims=True)
    pexp = jnp.exp(a)
    soft = pexp / jnp.sum(pexp, axis=0, keepdims=True)

    o1 = jnp.sum(o * soft, axis=0, keepdims=True)     # (1, E) attention-pooled
    o2 = jnp.max(o, axis=0, keepdims=True)            # (1, E) max-pooled

    # --- Linear(2E, 32) (split into o1/o2 halves), Dropout=id, ReLU, BatchNorm1d (eval) ---
    h = (jnp.dot(o1, wl1_ref[...], preferred_element_type=f32)
         + jnp.dot(o2, wl2_ref[...], preferred_element_type=f32)
         + bl_ref[...])
    h = jnp.maximum(h, 0.0)
    h = h * bns_ref[...] + bnb_ref[...]                # folded BN scale/shift

    # --- Linear(32, 128): LightAttention output == LA_emb ---
    emb = jnp.dot(h, wout_ref[...], preferred_element_type=f32) + bout_ref[...]   # (1, 128)

    # --- FFNN: Flatten (no-op) -> 128->128 -> LeakyReLU(0.1) -> 128->64 -> LeakyReLU -> 64->out ---
    f = jnp.dot(emb, w1_ref[...], preferred_element_type=f32) + b1_ref[...]
    f = jnp.where(f > 0, f, 0.1 * f)
    f = jnp.dot(f, w2_ref[...], preferred_element_type=f32) + b2_ref[...]
    f = jnp.where(f > 0, f, 0.1 * f)
    logits = jnp.dot(f, w3_ref[...], preferred_element_type=f32) + b3_ref[...]     # (1, 128 padded)

    emb_ref[0] = emb.astype(emb_ref.dtype)
    logits_ref[0] = logits.astype(logits_ref.dtype)


def la_mlp_geometric_forward(x, params, *, conv_dtype=jnp.float32):
    """x: (B, L, E) float32.  Returns (logits (B, output_dim), LA_emb (B, 128))."""
    B, L, E = x.shape
    f32 = jnp.float32
    ksize = params["wf"].shape[-1]
    pad = ksize // 2
    hid = params["w_lin"].shape[0]          # 32
    emb_dim = params["w_out"].shape[0]      # 128
    out_dim = params["w3"].shape[0]         # e.g. 2
    out_pad = 128                           # lane-dense logits block, sliced below

    # x stays in its native (B, L, E) layout; only zero-pad the sequence axis for the conv.
    x_pad = jnp.pad(x, ((0, 0), (pad, pad), (0, 0))).astype(conv_dtype)

    # Conv weights tap-major: (K, E_in, E_out) so the kernel computes xs @ w[t].
    wf_t = jnp.transpose(params["wf"], (2, 1, 0)).astype(conv_dtype)
    wa_t = jnp.transpose(params["wa"], (2, 1, 0)).astype(conv_dtype)
    bf = params["bf"].reshape(1, E).astype(f32)
    ba = params["ba"].reshape(1, E).astype(f32)

    # Linear(2E, 32) split into the o1 / o2 halves (avoids an in-kernel concat).
    w_lin = params["w_lin"]
    wl1 = w_lin[:, :E].T.astype(f32)        # (E, 32)
    wl2 = w_lin[:, E:].T.astype(f32)        # (E, 32)
    bl = params["b_lin"].reshape(1, hid).astype(f32)

    # BatchNorm1d (eval) folded to scale/shift.
    bn_scale = params["bn_gamma"] / jnp.sqrt(params["bn_var"] + 1e-5)
    bn_shift = params["bn_beta"] - params["bn_mean"] * bn_scale
    bn_scale = bn_scale.reshape(1, hid).astype(f32)
    bn_shift = bn_shift.reshape(1, hid).astype(f32)

    wout = params["w_out"].T.astype(f32)            # (32, 128)
    bout = params["b_out"].reshape(1, emb_dim).astype(f32)
    w1 = params["w1"].T.astype(f32)                 # (128, 128)
    b1 = params["b1"].reshape(1, -1).astype(f32)
    w2 = params["w2"].T.astype(f32)                 # (128, 64)
    b2 = params["b2"].reshape(1, -1).astype(f32)

    # Zero-pad the final Linear(64, out_dim) to 128 output lanes (lane-dense store).
    w3p = jnp.zeros((out_pad, params["w3"].shape[1]), f32).at[:out_dim].set(
        params["w3"].astype(f32)).T                 # (64, 128)
    b3p = jnp.zeros((1, out_pad), f32).at[0, :out_dim].set(params["b3"].astype(f32))

    inputs = (x_pad, wf_t, bf, wa_t, ba, wl1, wl2, bl, bn_scale, bn_shift,
              wout, bout, w1, b1, w2, b2, w3p, b3p)

    def _resident(arr):
        n = arr.ndim

        def idx(b):
            return (0,) * n
        return pl.BlockSpec(arr.shape, idx)

    in_specs = [pl.BlockSpec((1, L + 2 * pad, E), lambda b: (b, 0, 0))]
    in_specs += [_resident(arr) for arr in inputs[1:]]

    # Advisory cost estimate (per review feedback).
    conv_flops = 2 * 2 * L * E * E * ksize
    head_flops = 2 * (2 * E * hid + hid * emb_dim + emb_dim * emb_dim
                      + emb_dim * w2.shape[1] + w2.shape[1] * out_pad)
    flops = B * (conv_flops + head_flops + 8 * L * E)
    bytes_accessed = sum(int(a.size) * a.dtype.itemsize for a in inputs)
    bytes_accessed += B * (out_pad + emb_dim) * 4

    logits_pad, la_emb = pl.pallas_call(
        _la_mlp_kernel,
        out_shape=(jax.ShapeDtypeStruct((B, 1, out_pad), f32),
                   jax.ShapeDtypeStruct((B, 1, emb_dim), f32)),
        grid=(B,),
        in_specs=in_specs,
        out_specs=(pl.BlockSpec((1, 1, out_pad), lambda b: (b, 0, 0)),
                   pl.BlockSpec((1, 1, emb_dim), lambda b: (b, 0, 0))),
        compiler_params=pltpu.CompilerParams(dimension_semantics=("parallel",)),
        cost_estimate=pl.CostEstimate(flops=int(flops),
                                      transcendentals=int(B * L * E),
                                      bytes_accessed=int(bytes_accessed)),
    )(*inputs)

    return logits_pad[:, 0, :out_dim], la_emb[:, 0, :]


def _reference_forward(x, p):
    """Pure-JAX eval-mode reference of LA_MLP_Geometric.forward (same math as PyTorch)."""
    PH = jax.lax.Precision.HIGHEST
    ksize = p["wf"].shape[-1]
    pad = ksize // 2
    xt = jnp.transpose(x, (0, 2, 1))        # == x.permute(0, 2, 1) -> (B, E, L)

    def conv1d(inp, w, b):
        out = jax.lax.conv_general_dilated(
            inp, w, window_strides=(1,), padding=[(pad, pad)],
            dimension_numbers=("NCH", "OIH", "NCH"), precision=PH)
        return out + b[None, :, None]

    o = conv1d(xt, p["wf"], p["bf"])
    a = conv1d(xt, p["wa"], p["ba"])
    soft = jax.nn.softmax(a, axis=-1)
    o1 = jnp.sum(o * soft, axis=-1)
    o2 = jnp.max(o, axis=-1)
    feat = jnp.concatenate([o1, o2], axis=-1)
    h = jnp.maximum(jnp.dot(feat, p["w_lin"].T, precision=PH) + p["b_lin"], 0.0)
    h = (h - p["bn_mean"]) / jnp.sqrt(p["bn_var"] + 1e-5) * p["bn_gamma"] + p["bn_beta"]
    emb = jnp.dot(h, p["w_out"].T, precision=PH) + p["b_out"]

    def leaky(v):
        return jnp.where(v > 0, v, 0.1 * v)

    f = leaky(jnp.dot(emb, p["w1"].T, precision=PH) + p["b1"])
    f = leaky(jnp.dot(f, p["w2"].T, precision=PH) + p["b2"])
    logits = jnp.dot(f, p["w3"].T, precision=PH) + p["b3"]
    return logits, emb


if __name__ == "__main__":
    # Small shapes consistent with the module: x is (batch, seq_len, embeddings_dim)
    # (the module permutes it to NCL itself); embeddings_dim kept modest, LA output=128.
    B, L, E = 2, 16, 128
    KS, HID, EMB, OUT_DIM = 9, 32, 128, 2

    key = jax.random.PRNGKey(0)
    ks = jax.random.split(key, 19)

    def u(k, shape, bound):
        return jax.random.uniform(k, shape, jnp.float32, -bound, bound)

    cb = (E * KS) ** -0.5
    params = {
        "wf": u(ks[0], (E, E, KS), cb), "bf": u(ks[1], (E,), cb),
        "wa": u(ks[2], (E, E, KS), cb), "ba": u(ks[3], (E,), cb),
        "w_lin": u(ks[4], (HID, 2 * E), (2 * E) ** -0.5),
        "b_lin": u(ks[5], (HID,), (2 * E) ** -0.5),
        "bn_gamma": jax.random.uniform(ks[6], (HID,), jnp.float32, 0.5, 1.5),
        "bn_beta": u(ks[7], (HID,), 0.1),
        "bn_mean": u(ks[8], (HID,), 0.1),
        "bn_var": jax.random.uniform(ks[9], (HID,), jnp.float32, 0.5, 1.5),
        "w_out": u(ks[10], (EMB, HID), HID ** -0.5),
        "b_out": u(ks[11], (EMB,), HID ** -0.5),
        "w1": u(ks[12], (EMB, EMB), EMB ** -0.5),
        "b1": u(ks[13], (EMB,), EMB ** -0.5),
        "w2": u(ks[14], (64, EMB), EMB ** -0.5),
        "b2": u(ks[15], (64,), EMB ** -0.5),
        "w3": u(ks[16], (OUT_DIM, 64), 64 ** -0.5),
        "b3": u(ks[17], (OUT_DIM,), 64 ** -0.5),
    }
    x = jax.random.normal(ks[18], (B, L, E), dtype=jnp.float32)

    logits, la_emb = la_mlp_geometric_forward(x, params)
    jax.block_until_ready((logits, la_emb))

    ref_logits, ref_emb = _reference_forward(x, params)
    assert logits.shape == (B, OUT_DIM)
    assert la_emb.shape == (B, EMB)
    assert jnp.allclose(la_emb, ref_emb, atol=2e-3, rtol=2e-3)
    assert jnp.allclose(logits, ref_logits, atol=2e-3, rtol=2e-3)

    print("KERNEL_OK")
</pallas_src>

<mosaic_0001>
module attributes {stable_mosaic.version = 11 : i64} {
  func.func @_la_mlp_kernel(%arg0: i32, %arg1: memref<1x24x128xf32, #tpu.memory_space<vmem>>, %arg2: memref<9x128x128xf32, #tpu.memory_space<vmem>>, %arg3: memref<1x128xf32, #tpu.memory_space<vmem>>, %arg4: memref<9x128x128xf32, #tpu.memory_space<vmem>>, %arg5: memref<1x128xf32, #tpu.memory_space<vmem>>, %arg6: memref<128x32xf32, #tpu.memory_space<vmem>>, %arg7: memref<128x32xf32, #tpu.memory_space<vmem>>, %arg8: memref<1x32xf32, #tpu.memory_space<vmem>>, %arg9: memref<1x32xf32, #tpu.memory_space<vmem>>, %arg10: memref<1x32xf32, #tpu.memory_space<vmem>>, %arg11: memref<32x128xf32, #tpu.memory_space<vmem>>, %arg12: memref<1x128xf32, #tpu.memory_space<vmem>>, %arg13: memref<128x128xf32, #tpu.memory_space<vmem>>, %arg14: memref<1x128xf32, #tpu.memory_space<vmem>>, %arg15: memref<128x64xf32, #tpu.memory_space<vmem>>, %arg16: memref<1x64xf32, #tpu.memory_space<vmem>>, %arg17: memref<64x128xf32, #tpu.memory_space<vmem>>, %arg18: memref<1x128xf32, #tpu.memory_space<vmem>>, %arg19: memref<1x1x128xf32, #tpu.memory_space<vmem>>, %arg20: memref<1x1x128xf32, #tpu.memory_space<vmem>>) attributes {dimension_semantics = [#tpu.dimension_semantics<parallel>], iteration_bounds = array<i64: 2>, scalar_prefetch = 0 : i64, scratch_operands = 0 : i64, tpu.core_type = #tpu.core_type<tc>, window_params = [{transform_indices = @transform_0, window_bounds = array<i64: 1, 24, 128>}, {pipeline_mode = #tpu.pipeline_mode<synchronous>, transform_indices = @transform_1, window_bounds = array<i64: 9, 128, 128>}, {pipeline_mode = #tpu.pipeline_mode<synchronous>, transform_indices = @transform_2, window_bounds = array<i64: 1, 128>}, {pipeline_mode = #tpu.pipeline_mode<synchronous>, transform_indices = @transform_3, window_bounds = array<i64: 9, 128, 128>}, {pipeline_mode = #tpu.pipeline_mode<synchronous>, transform_indices = @transform_4, window_bounds = array<i64: 1, 128>}, {pipeline_mode = #tpu.pipeline_mode<synchronous>, transform_indices = @transform_5, window_bounds = array<i64: 128, 32>}, {pipeline_mode = #tpu.pipeline_mode<synchronous>, transform_indices = @transform_6, window_bounds = array<i64: 128, 32>}, {pipeline_mode = #tpu.pipeline_mode<synchronous>, transform_indices = @transform_7, window_bounds = array<i64: 1, 32>}, {pipeline_mode = #tpu.pipeline_mode<synchronous>, transform_indices = @transform_8, window_bounds = array<i64: 1, 32>}, {pipeline_mode = #tpu.pipeline_mode<synchronous>, transform_indices = @transform_9, window_bounds = array<i64: 1, 32>}, {pipeline_mode = #tpu.pipeline_mode<synchronous>, transform_indices = @transform_10, window_bounds = array<i64: 32, 128>}, {pipeline_mode = #tpu.pipeline_mode<synchronous>, transform_indices = @transform_11, window_bounds = array<i64: 1, 128>}, {pipeline_mode = #tpu.pipeline_mode<synchronous>, transform_indices = @transform_12, window_bounds = array<i64: 128, 128>}, {pipeline_mode = #tpu.pipeline_mode<synchronous>, transform_indices = @transform_13, window_bounds = array<i64: 1, 128>}, {pipeline_mode = #tpu.pipeline_mode<synchronous>, transform_indices = @transform_14, window_bounds = array<i64: 128, 64>}, {pipeline_mode = #tpu.pipeline_mode<synchronous>, transform_indices = @transform_15, window_bounds = array<i64: 1, 64>}, {pipeline_mode = #tpu.pipeline_mode<synchronous>, transform_indices = @transform_16, window_bounds = array<i64: 64, 128>}, {pipeline_mode = #tpu.pipeline_mode<synchronous>, transform_indices = @transform_17, window_bounds = array<i64: 1, 128>}, {transform_indices = @transform_18, window_bounds = array<i64: 1, 1, 128>}, {transform_indices = @transform_19, window_bounds = array<i64: 1, 1, 128>}]} {
    %cst = arith.constant 0.000000e+00 : f32
    %0 = vector.broadcast %cst : f32 to vector<16x128xf32>
    %cst_0 = arith.constant 0.000000e+00 : f32
    %1 = vector.broadcast %cst_0 : f32 to vector<16x128xf32>
    %c0 = arith.constant 0 : index
    %c0_1 = arith.constant 0 : index
    %c0_2 = arith.constant 0 : index
    %2 = vector.load %arg1[%c0, %c0_1, %c0_2] : memref<1x24x128xf32, #tpu.memory_space<vmem>>, vector<1x16x128xf32>
    %3 = vector.shape_cast %2 : vector<1x16x128xf32> to vector<16x128xf32>
    %c0_3 = arith.constant 0 : index
    %c0_4 = arith.constant 0 : index
    %c0_5 = arith.constant 0 : index
    %4 = vector.load %arg2[%c0_3, %c0_4, %c0_5] : memref<9x128x128xf32, #tpu.memory_space<vmem>>, vector<1x128x128xf32>
    %5 = vector.shape_cast %4 : vector<1x128x128xf32> to vector<128x128xf32>
    %cst_6 = arith.constant dense<0.000000e+00> : vector<16x128xf32>
    %6 = tpu.matmul %3, %5, %cst_6 {dimension_numbers = #tpu.dot_dimension_numbers<[1], [0], [0], [1], [0, 0, 1, 1], [], []>} : vector<16x128xf32>, vector<128x128xf32>, vector<16x128xf32> -> vector<16x128xf32>
    %7 = arith.addf %0, %6 : vector<16x128xf32>
    %c0_7 = arith.constant 0 : index
    %c0_8 = arith.constant 0 : index
    %c0_9 = arith.constant 0 : index
    %8 = vector.load %arg4[%c0_7, %c0_8, %c0_9] : memref<9x128x128xf32, #tpu.memory_space<vmem>>, vector<1x128x128xf32>
    %9 = vector.shape_cast %8 : vector<1x128x128xf32> to vector<128x128xf32>
    %cst_10 = arith.constant dense<0.000000e+00> : vector<16x128xf32>
    %10 = tpu.matmul %3, %9, %cst_10 {dimension_numbers = #tpu.dot_dimension_numbers<[1], [0], [0], [1], [0, 0, 1, 1], [], []>} : vector<16x128xf32>, vector<128x128xf32>, vector<16x128xf32> -> vector<16x128xf32>
    %11 = arith.addf %1, %10 : vector<16x128xf32>
    %c0_11 = arith.constant 0 : index
    %c1 = arith.constant 1 : index
    %c0_12 = arith.constant 0 : index
    %12 = vector.load %arg1[%c0_11, %c1, %c0_12] : memref<1x24x128xf32, #tpu.memory_space<vmem>>, vector<1x16x128xf32>
    %13 = vector.shape_cast %12 : vector<1x16x128xf32> to vector<16x128xf32>
    %c1_13 = arith.constant 1 : index
    %c0_14 = arith.constant 0 : index
    %c0_15 = arith.constant 0 : index
    %14 = vector.load %arg2[%c1_13, %c0_14, %c0_15] : memref<9x128x128xf32, #tpu.memory_space<vmem>>, vector<1x128x128xf32>
    %15 = vector.shape_cast %14 : vector<1x128x128xf32> to vector<128x128xf32>
    %cst_16 = arith.constant dense<0.000000e+00> : vector<16x128xf32>
    %16 = tpu.matmul %13, %15, %cst_16 {dimension_numbers = #tpu.dot_dimension_numbers<[1], [0], [0], [1], [0, 0, 1, 1], [], []>} : vector<16x128xf32>, vector<128x128xf32>, vector<16x128xf32> -> vector<16x128xf32>
    %17 = arith.addf %7, %16 : vector<16x128xf32>
    %c1_17 = arith.constant 1 : index
    %c0_18 = arith.constant 0 : index
    %c0_19 = arith.constant 0 : index
    %18 = vector.load %arg4[%c1_17, %c0_18, %c0_19] : memref<9x128x128xf32, #tpu.memory_space<vmem>>, vector<1x128x128xf32>
    %19 = vector.shape_cast %18 : vector<1x128x128xf32> to vector<128x128xf32>
    %cst_20 = arith.constant dense<0.000000e+00> : vector<16x128xf32>
    %20 = tpu.matmul %13, %19, %cst_20 {dimension_numbers = #tpu.dot_dimension_numbers<[1], [0], [0], [1], [0, 0, 1, 1], [], []>} : vector<16x128xf32>, vector<128x128xf32>, vector<16x128xf32> -> vector<16x128xf32>
    %21 = arith.addf %11, %20 : vector<16x128xf32>
    %c0_21 = arith.constant 0 : index
    %c2 = arith.constant 2 : index
    %c0_22 = arith.constant 0 : index
    %22 = vector.load %arg1[%c0_21, %c2, %c0_22] : memref<1x24x128xf32, #tpu.memory_space<vmem>>, vector<1x16x128xf32>
    %23 = vector.shape_cast %22 : vector<1x16x128xf32> to vector<16x128xf32>
    %c2_23 = arith.constant 2 : index
    %c0_24 = arith.constant 0 : index
    %c0_25 = arith.constant 0 : index
    %24 = vector.load %arg2[%c2_23, %c0_24, %c0_25] : memref<9x128x128xf32, #tpu.memory_space<vmem>>, vector<1x128x128xf32>
    %25 = vector.shape_cast %24 : vector<1x128x128xf32> to vector<128x128xf32>
    %cst_26 = arith.constant dense<0.000000e+00> : vector<16x128xf32>
    %26 = tpu.matmul %23, %25, %cst_26 {dimension_numbers = #tpu.dot_dimension_numbers<[1], [0], [0], [1], [0, 0, 1, 1], [], []>} : vector<16x128xf32>, vector<128x128xf32>, vector<16x128xf32> -> vector<16x128xf32>
    %27 = arith.addf %17, %26 : vector<16x128xf32>
    %c2_27 = arith.constant 2 : index
    %c0_28 = arith.constant 0 : index
    %c0_29 = arith.constant 0 : index
    %28 = vector.load %arg4[%c2_27, %c0_28, %c0_29] : memref<9x128x128xf32, #tpu.memory_space<vmem>>, vector<1x128x128xf32>
    %29 = vector.shape_cast %28 : vector<1x128x128xf32> to vector<128x128xf32>
    %cst_30 = arith.constant dense<0.000000e+00> : vector<16x128xf32>
    %30 = tpu.matmul %23, %29, %cst_30 {dimension_numbers = #tpu.dot_dimension_numbers<[1], [0], [0], [1], [0, 0, 1, 1], [], []>} : vector<16x128xf32>, vector<128x128xf32>, vector<16x128xf32> -> vector<16x128xf32>
    %31 = arith.addf %21, %30 : vector<16x128xf32>
    %c0_31 = arith.constant 0 : index
    %c3 = arith.constant 3 : index
    %c0_32 = arith.constant 0 : index
    %32 = vector.load %arg1[%c0_31, %c3, %c0_32] : memref<1x24x128xf32, #tpu.memory_space<vmem>>, vector<1x16x128xf32>
    %33 = vector.shape_cast %32 : vector<1x16x128xf32> to vector<16x128xf32>
    %c3_33 = arith.constant 3 : index
    %c0_34 = arith.constant 0 : index
    %c0_35 = arith.constant 0 : index
    %34 = vector.load %arg2[%c3_33, %c0_34, %c0_35] : memref<9x128x128xf32, #tpu.memory_space<vmem>>, vector<1x128x128xf32>
    %35 = vector.shape_cast %34 : vector<1x128x128xf32> to vector<128x128xf32>
    %cst_36 = arith.constant dense<0.000000e+00> : vector<16x128xf32>
    %36 = tpu.matmul %33, %35, %cst_36 {dimension_numbers = #tpu.dot_dimension_numbers<[1], [0], [0], [1], [0, 0, 1, 1], [], []>} : vector<16x128xf32>, vector<128x128xf32>, vector<16x128xf32> -> vector<16x128xf32>
    %37 = arith.addf %27, %36 : vector<16x128xf32>
    %c3_37 = arith.constant 3 : index
    %c0_38 = arith.constant 0 : index
    %c0_39 = arith.constant 0 : index
    %38 = vector.load %arg4[%c3_37, %c0_38, %c0_39] : memref<9x128x128xf32, #tpu.memory_space<vmem>>, vector<1x128x128xf32>
    %39 = vector.shape_cast %38 : vector<1x128x128xf32> to vector<128x128xf32>
    %cst_40 = arith.constant dense<0.000000e+00> : vector<16x128xf32>
    %40 = tpu.matmul %33, %39, %cst_40 {dimension_numbers = #tpu.dot_dimension_numbers<[1], [0], [0], [1], [0, 0, 1, 1], [], []>} : vector<16x128xf32>, vector<128x128xf32>, vector<16x128xf32> -> vector<16x128xf32>
    %41 = arith.addf %31, %40 : vector<16x128xf32>
    %c0_41 = arith.constant 0 : index
    %c4 = arith.constant 4 : index
    %c0_42 = arith.constant 0 : index
    %42 = vector.load %arg1[%c0_41, %c4, %c0_42] : memref<1x24x128xf32, #tpu.memory_space<vmem>>, vector<1x16x128xf32>
    %43 = vector.shape_cast %42 : vector<1x16x128xf32> to vector<16x128xf32>
    %c4_43 = arith.constant 4 : index
    %c0_44 = arith.constant 0 : index
    %c0_45 = arith.constant 0 : index
    %44 = vector.load %arg2[%c4_43, %c0_44, %c0_45] : memref<9x128x128xf32, #tpu.memory_space<vmem>>, vector<1x128x128xf32>
    %45 = vector.shape_cast %44 : vector<1x128x128xf32> to vector<128x128xf32>
    %cst_46 = arith.constant dense<0.000000e+00> : vector<16x128xf32>
    %46 = tpu.matmul %43, %45, %cst_46 {dimension_numbers = #tpu.dot_dimension_numbers<[1], [0], [0], [1], [0, 0, 1, 1], [], []>} : vector<16x128xf32>, vector<128x128xf32>, vector<16x128xf32> -> vector<16x128xf32>
    %47 = arith.addf %37, %46 : vector<16x128xf32>
    %c4_47 = arith.constant 4 : index
    %c0_48 = arith.constant 0 : index
    %c0_49 = arith.constant 0 : index
    %48 = vector.load %arg4[%c4_47, %c0_48, %c0_49] : memref<9x128x128xf32, #tpu.memory_space<vmem>>, vector<1x128x128xf32>
    %49 = vector.shape_cast %48 : vector<1x128x128xf32> to vector<128x128xf32>
    %cst_50 = arith.constant dense<0.000000e+00> : vector<16x128xf32>
    %50 = tpu.matmul %43, %49, %cst_50 {dimension_numbers = #tpu.dot_dimension_numbers<[1], [0], [0], [1], [0, 0, 1, 1], [], []>} : vector<16x128xf32>, vector<128x128xf32>, vector<16x128xf32> -> vector<16x128xf32>
    %51 = arith.addf %41, %50 : vector<16x128xf32>
    %c0_51 = arith.constant 0 : index
    %c5 = arith.constant 5 : index
    %c0_52 = arith.constant 0 : index
    %52 = vector.load %arg1[%c0_51, %c5, %c0_52] : memref<1x24x128xf32, #tpu.memory_space<vmem>>, vector<1x16x128xf32>
    %53 = vector.shape_cast %52 : vector<1x16x128xf32> to vector<16x128xf32>
    %c5_53 = arith.constant 5 : index
    %c0_54 = arith.constant 0 : index
    %c0_55 = arith.constant 0 : index
    %54 = vector.load %arg2[%c5_53, %c0_54, %c0_55] : memref<9x128x128xf32, #tpu.memory_space<vmem>>, vector<1x128x128xf32>
    %55 = vector.shape_cast %54 : vector<1x128x128xf32> to vector<128x128xf32>
    %cst_56 = arith.constant dense<0.000000e+00> : vector<16x128xf32>
    %56 = tpu.matmul %53, %55, %cst_56 {dimension_numbers = #tpu.dot_dimension_numbers<[1], [0], [0], [1], [0, 0, 1, 1], [], []>} : vector<16x128xf32>, vector<128x128xf32>, vector<16x128xf32> -> vector<16x128xf32>
    %57 = arith.addf %47, %56 : vector<16x128xf32>
    %c5_57 = arith.constant 5 : index
    %c0_58 = arith.constant 0 : index
    %c0_59 = arith.constant 0 : index
    %58 = vector.load %arg4[%c5_57, %c0_58, %c0_59] : memref<9x128x128xf32, #tpu.memory_space<vmem>>, vector<1x128x128xf32>
    %59 = vector.shape_cast %58 : vector<1x128x128xf32> to vector<128x128xf32>
    %cst_60 = arith.constant dense<0.000000e+00> : vector<16x128xf32>
    %60 = tpu.matmul %53, %59, %cst_60 {dimension_numbers = #tpu.dot_dimension_numbers<[1], [0], [0], [1], [0, 0, 1, 1], [], []>} : vector<16x128xf32>, vector<128x128xf32>, vector<16x128xf32> -> vector<16x128xf32>
    %61 = arith.addf %51, %60 : vector<16x128xf32>
    %c0_61 = arith.constant 0 : index
    %c6 = arith.constant 6 : index
    %c0_62 = arith.constant 0 : index
    %62 = vector.load %arg1[%c0_61, %c6, %c0_62] : memref<1x24x128xf32, #tpu.memory_space<vmem>>, vector<1x16x128xf32>
    %63 = vector.shape_cast %62 : vector<1x16x128xf32> to vector<16x128xf32>
    %c6_63 = arith.constant 6 : index
    %c0_64 = arith.constant 0 : index
    %c0_65 = arith.constant 0 : index
    %64 = vector.load %arg2[%c6_63, %c0_64, %c0_65] : memref<9x128x128xf32, #tpu.memory_space<vmem>>, vector<1x128x128xf32>
    %65 = vector.shape_cast %64 : vector<1x128x128xf32> to vector<128x128xf32>
    %cst_66 = arith.constant dense<0.000000e+00> : vector<16x128xf32>
    %66 = tpu.matmul %63, %65, %cst_66 {dimension_numbers = #tpu.dot_dimension_numbers<[1], [0], [0], [1], [0, 0, 1, 1], [], []>} : vector<16x128xf32>, vector<128x128xf32>, vector<16x128xf32> -> vector<16x128xf32>
    %67 = arith.addf %57, %66 : vector<16x128xf32>
    %c6_67 = arith.constant 6 : index
    %c0_68 = arith.constant 0 : index
    %c0_69 = arith.constant 0 : index
    %68 = vector.load %arg4[%c6_67, %c0_68, %c0_69] : memref<9x128x128xf32, #tpu.memory_space<vmem>>, vector<1x128x128xf32>
    %69 = vector.shape_cast %68 : vector<1x128x128xf32> to vector<128x128xf32>
    %cst_70 = arith.constant dense<0.000000e+00> : vector<16x128xf32>
    %70 = tpu.matmul %63, %69, %cst_70 {dimension_numbers = #tpu.dot_dimension_numbers<[1], [0], [0], [1], [0, 0, 1, 1], [], []>} : vector<16x128xf32>, vector<128x128xf32>, vector<16x128xf32> -> vector<16x128xf32>
    %71 = arith.addf %61, %70 : vector<16x128xf32>
    %c0_71 = arith.constant 0 : index
    %c7 = arith.constant 7 : index
    %c0_72 = arith.constant 0 : index
    %72 = vector.load %arg1[%c0_71, %c7, %c0_72] : memref<1x24x128xf32, #tpu.memory_space<vmem>>, vector<1x16x128xf32>
    %73 = vector.shape_cast %72 : vector<1x16x128xf32> to vector<16x128xf32>
    %c7_73 = arith.constant 7 : index
    %c0_74 = arith.constant 0 : index
    %c0_75 = arith.constant 0 : index
    %74 = vector.load %arg2[%c7_73, %c0_74, %c0_75] : memref<9x128x128xf32, #tpu.memory_space<vmem>>, vector<1x128x128xf32>
    %75 = vector.shape_cast %74 : vector<1x128x128xf32> to vector<128x128xf32>
    %cst_76 = arith.constant dense<0.000000e+00> : vector<16x128xf32>
    %76 = tpu.matmul %73, %75, %cst_76 {dimension_numbers = #tpu.dot_dimension_numbers<[1], [0], [0], [1], [0, 0, 1, 1], [], []>} : vector<16x128xf32>, vector<128x128xf32>, vector<16x128xf32> -> vector<16x128xf32>
    %77 = arith.addf %67, %76 : vector<16x128xf32>
    %c7_77 = arith.constant 7 : index
    %c0_78 = arith.constant 0 : index
    %c0_79 = arith.constant 0 : index
    %78 = vector.load %arg4[%c7_77, %c0_78, %c0_79] : memref<9x128x128xf32, #tpu.memory_space<vmem>>, vector<1x128x128xf32>
    %79 = vector.shape_cast %78 : vector<1x128x128xf32> to vector<128x128xf32>
    %cst_80 = arith.constant dense<0.000000e+00> : vector<16x128xf32>
    %80 = tpu.matmul %73, %79, %cst_80 {dimension_numbers = #tpu.dot_dimension_numbers<[1], [0], [0], [1], [0, 0, 1, 1], [], []>} : vector<16x128xf32>, vector<128x128xf32>, vector<16x128xf32> -> vector<16x128xf32>
    %81 = arith.addf %71, %80 : vector<16x128xf32>
    %c0_81 = arith.constant 0 : index
    %c8 = arith.constant 8 : index
    %c0_82 = arith.constant 0 : index
    %82 = vector.load %arg1[%c0_81, %c8, %c0_82] : memref<1x24x128xf32, #tpu.memory_space<vmem>>, vector<1x16x128xf32>
    %83 = vector.shape_cast %82 : vector<1x16x128xf32> to vector<16x128xf32>
    %c8_83 = arith.constant 8 : index
    %c0_84 = arith.constant 0 : index
    %c0_85 = arith.constant 0 : index
    %84 = vector.load %arg2[%c8_83, %c0_84, %c0_85] : memref<9x128x128xf32, #tpu.memory_space<vmem>>, vector<1x128x128xf32>
    %85 = vector.shape_cast %84 : vector<1x128x128xf32> to vector<128x128xf32>
    %cst_86 = arith.constant dense<0.000000e+00> : vector<16x128xf32>
    %86 = tpu.matmul %83, %85, %cst_86 {dimension_numbers = #tpu.dot_dimension_numbers<[1], [0], [0], [1], [0, 0, 1, 1], [], []>} : vector<16x128xf32>, vector<128x128xf32>, vector<16x128xf32> -> vector<16x128xf32>
    %87 = arith.addf %77, %86 : vector<16x128xf32>
    %c8_87 = arith.constant 8 : index
    %c0_88 = arith.constant 0 : index
    %c0_89 = arith.constant 0 : index
    %88 = vector.load %arg4[%c8_87, %c0_88, %c0_89] : memref<9x128x128xf32, #tpu.memory_space<vmem>>, vector<1x128x128xf32>
    %89 = vector.shape_cast %88 : vector<1x128x128xf32> to vector<128x128xf32>
    %cst_90 = arith.constant dense<0.000000e+00> : vector<16x128xf32>
    %90 = tpu.matmul %83, %89, %cst_90 {dimension_numbers = #tpu.dot_dimension_numbers<[1], [0], [0], [1], [0, 0, 1, 1], [], []>} : vector<16x128xf32>, vector<128x128xf32>, vector<16x128xf32> -> vector<16x128xf32>
    %91 = arith.addf %81, %90 : vector<16x128xf32>
    %c0_91 = arith.constant 0 : index
    %c0_92 = arith.constant 0 : index
    %92 = vector.load %arg3[%c0_91, %c0_92] : memref<1x128xf32, #tpu.memory_space<vmem>>, vector<1x128xf32>
    %93 = vector.broadcast %92 : vector<1x128xf32> to vector<16x128xf32>
    %94 = arith.addf %87, %93 : vector<16x128xf32>
    %c0_93 = arith.constant 0 : index
    %c0_94 = arith.constant 0 : index
    %95 = vector.load %arg5[%c0_93, %c0_94] : memref<1x128xf32, #tpu.memory_space<vmem>>, vector<1x128xf32>
    %96 = vector.broadcast %95 : vector<1x128xf32> to vector<16x128xf32>
    %97 = arith.addf %91, %96 : vector<16x128xf32>
    %cst_95 = arith.constant dense<0xFF800000> : vector<128xf32>
    %98 = vector.multi_reduction <maximumf>, %97, %cst_95 [0] : vector<16x128xf32> to vector<128xf32>
    %99 = vector.shape_cast %98 : vector<128xf32> to vector<1x128xf32>
    %100 = vector.broadcast %99 : vector<1x128xf32> to vector<16x128xf32>
    %101 = arith.subf %97, %100 : vector<16x128xf32>
    %102 = math.exp %101 : vector<16x128xf32>
    %cst_96 = arith.constant dense<0.000000e+00> : vector<128xf32>
    %103 = vector.multi_reduction <add>, %102, %cst_96 [0] : vector<16x128xf32> to vector<128xf32>
    %104 = vector.shape_cast %103 : vector<128xf32> to vector<1x128xf32>
    %105 = vector.broadcast %104 : vector<1x128xf32> to vector<16x128xf32>
    %106 = arith.divf %102, %105 : vector<16x128xf32>
    %107 = arith.mulf %94, %106 : vector<16x128xf32>
    %cst_97 = arith.constant dense<0.000000e+00> : vector<128xf32>
    %108 = vector.multi_reduction <add>, %107, %cst_97 [0] : vector<16x128xf32> to vector<128xf32>
    %109 = vector.shape_cast %108 : vector<128xf32> to vector<1x128xf32>
    %cst_98 = arith.constant dense<0xFF800000> : vector<128xf32>
    %110 = vector.multi_reduction <maximumf>, %94, %cst_98 [0] : vector<16x128xf32> to vector<128xf32>
    %111 = vector.shape_cast %110 : vector<128xf32> to vector<1x128xf32>
    %c0_99 = arith.constant 0 : index
    %c0_100 = arith.constant 0 : index
    %112 = vector.load %arg6[%c0_99, %c0_100] : memref<128x32xf32, #tpu.memory_space<vmem>>, vector<128x32xf32>
    %cst_101 = arith.constant dense<0.000000e+00> : vector<1x32xf32>
    %113 = tpu.matmul %109, %112, %cst_101 {dimension_numbers = #tpu.dot_dimension_numbers<[1], [0], [0], [1], [0, 0, 1, 1], [], []>} : vector<1x128xf32>, vector<128x32xf32>, vector<1x32xf32> -> vector<1x32xf32>
    %c0_102 = arith.constant 0 : index
    %c0_103 = arith.constant 0 : index
    %114 = vector.load %arg7[%c0_102, %c0_103] : memref<128x32xf32, #tpu.memory_space<vmem>>, vector<128x32xf32>
    %cst_104 = arith.constant dense<0.000000e+00> : vector<1x32xf32>
    %115 = tpu.matmul %111, %114, %cst_104 {dimension_numbers = #tpu.dot_dimension_numbers<[1], [0], [0], [1], [0, 0, 1, 1], [], []>} : vector<1x128xf32>, vector<128x32xf32>, vector<1x32xf32> -> vector<1x32xf32>
    %116 = arith.addf %113, %115 : vector<1x32xf32>
    %c0_105 = arith.constant 0 : index
    %c0_106 = arith.constant 0 : index
    %117 = vector.load %arg8[%c0_105, %c0_106] : memref<1x32xf32, #tpu.memory_space<vmem>>, vector<1x32xf32>
    %118 = arith.addf %116, %117 : vector<1x32xf32>
    %cst_107 = arith.constant 0.000000e+00 : f32
    %119 = vector.broadcast %cst_107 : f32 to vector<1x32xf32>
    %120 = arith.maximumf %118, %119 : vector<1x32xf32>
    %c0_108 = arith.constant 0 : index
    %c0_109 = arith.constant 0 : index
    %121 = vector.load %arg9[%c0_108, %c0_109] : memref<1x32xf32, #tpu.memory_space<vmem>>, vector<1x32xf32>
    %122 = arith.mulf %120, %121 : vector<1x32xf32>
    %c0_110 = arith.constant 0 : index
    %c0_111 = arith.constant 0 : index
    %123 = vector.load %arg10[%c0_110, %c0_111] : memref<1x32xf32, #tpu.memory_space<vmem>>, vector<1x32xf32>
    %124 = arith.addf %122, %123 : vector<1x32xf32>
    %c0_112 = arith.constant 0 : index
    %c0_113 = arith.constant 0 : index
    %125 = vector.load %arg11[%c0_112, %c0_113] : memref<32x128xf32, #tpu.memory_space<vmem>>, vector<32x128xf32>
    %cst_114 = arith.constant dense<0.000000e+00> : vector<1x128xf32>
    %126 = tpu.matmul %124, %125, %cst_114 {dimension_numbers = #tpu.dot_dimension_numbers<[1], [0], [0], [1], [0, 0, 1, 1], [], []>} : vector<1x32xf32>, vector<32x128xf32>, vector<1x128xf32> -> vector<1x128xf32>
    %c0_115 = arith.constant 0 : index
    %c0_116 = arith.constant 0 : index
    %127 = vector.load %arg12[%c0_115, %c0_116] : memref<1x128xf32, #tpu.memory_space<vmem>>, vector<1x128xf32>
    %128 = arith.addf %126, %127 : vector<1x128xf32>
    %c0_117 = arith.constant 0 : index
    %c0_118 = arith.constant 0 : index
    %129 = vector.load %arg13[%c0_117, %c0_118] : memref<128x128xf32, #tpu.memory_space<vmem>>, vector<128x128xf32>
    %cst_119 = arith.constant dense<0.000000e+00> : vector<1x128xf32>
    %130 = tpu.matmul %128, %129, %cst_119 {dimension_numbers = #tpu.dot_dimension_numbers<[1], [0], [0], [1], [0, 0, 1, 1], [], []>} : vector<1x128xf32>, vector<128x128xf32>, vector<1x128xf32> -> vector<1x128xf32>
    %c0_120 = arith.constant 0 : index
    %c0_121 = arith.constant 0 : index
    %131 = vector.load %arg14[%c0_120, %c0_121] : memref<1x128xf32, #tpu.memory_space<vmem>>, vector<1x128xf32>
    %132 = arith.addf %130, %131 : vector<1x128xf32>
    %cst_122 = arith.constant 0.000000e+00 : f32
    %133 = vector.broadcast %cst_122 : f32 to vector<1x128xf32>
    %134 = arith.cmpf ogt, %132, %133 : vector<1x128xf32>
    %cst_123 = arith.constant 1.000000e-01 : f32
    %135 = vector.broadcast %cst_123 : f32 to vector<1x128xf32>
    %136 = arith.mulf %135, %132 : vector<1x128xf32>
    %137 = arith.select %134, %132, %136 : vector<1x128xi1>, vector<1x128xf32>
    %c0_124 = arith.constant 0 : index
    %c0_125 = arith.constant 0 : index
    %138 = vector.load %arg15[%c0_124, %c0_125] : memref<128x64xf32, #tpu.memory_space<vmem>>, vector<128x64xf32>
    %cst_126 = arith.constant dense<0.000000e+00> : vector<1x64xf32>
    %139 = tpu.matmul %137, %138, %cst_126 {dimension_numbers = #tpu.dot_dimension_numbers<[1], [0], [0], [1], [0, 0, 1, 1], [], []>} : vector<1x128xf32>, vector<128x64xf32>, vector<1x64xf32> -> vector<1x64xf32>
    %c0_127 = arith.constant 0 : index
    %c0_128 = arith.constant 0 : index
    %140 = vector.load %arg16[%c0_127, %c0_128] : memref<1x64xf32, #tpu.memory_space<vmem>>, vector<1x64xf32>
    %141 = arith.addf %139, %140 : vector<1x64xf32>
    %cst_129 = arith.constant 0.000000e+00 : f32
    %142 = vector.broadcast %cst_129 : f32 to vector<1x64xf32>
    %143 = arith.cmpf ogt, %141, %142 : vector<1x64xf32>
    %cst_130 = arith.constant 1.000000e-01 : f32
    %144 = vector.broadcast %cst_130 : f32 to vector<1x64xf32>
    %145 = arith.mulf %144, %141 : vector<1x64xf32>
    %146 = arith.select %143, %141, %145 : vector<1x64xi1>, vector<1x64xf32>
    %c0_131 = arith.constant 0 : index
    %c0_132 = arith.constant 0 : index
    %147 = vector.load %arg17[%c0_131, %c0_132] : memref<64x128xf32, #tpu.memory_space<vmem>>, vector<64x128xf32>
    %cst_133 = arith.constant dense<0.000000e+00> : vector<1x128xf32>
    %148 = tpu.matmul %146, %147, %cst_133 {dimension_numbers = #tpu.dot_dimension_numbers<[1], [0], [0], [1], [0, 0, 1, 1], [], []>} : vector<1x64xf32>, vector<64x128xf32>, vector<1x128xf32> -> vector<1x128xf32>
    %c0_134 = arith.constant 0 : index
    %c0_135 = arith.constant 0 : index
    %149 = vector.load %arg18[%c0_134, %c0_135] : memref<1x128xf32, #tpu.memory_space<vmem>>, vector<1x128xf32>
    %150 = arith.addf %148, %149 : vector<1x128xf32>
    %c0_136 = arith.constant 0 : index
    %c0_137 = arith.constant 0 : index
    %c0_138 = arith.constant 0 : index
    %151 = vector.load %arg20[%c0_136, %c0_137, %c0_138] : memref<1x1x128xf32, #tpu.memory_space<vmem>>, vector<1x1x128xf32>
    %152 = vector.shape_cast %151 : vector<1x1x128xf32> to vector<1x128xf32>
    %153 = vector.shape_cast %128 : vector<1x128xf32> to vector<1x1x128xf32>
    tpu.vector_store %arg20[%c0_136, %c0_137, %c0_138], %153 {strides = array<i32>} : memref<1x1x128xf32, #tpu.memory_space<vmem>>, vector<1x1x128xf32>,
    %c0_139 = arith.constant 0 : index
    %c0_140 = arith.constant 0 : index
    %c0_141 = arith.constant 0 : index
    %154 = vector.load %arg19[%c0_139, %c0_140, %c0_141] : memref<1x1x128xf32, #tpu.memory_space<vmem>>, vector<1x1x128xf32>
    %155 = vector.shape_cast %154 : vector<1x1x128xf32> to vector<1x128xf32>
    %156 = vector.shape_cast %150 : vector<1x128xf32> to vector<1x1x128xf32>
    tpu.vector_store %arg19[%c0_139, %c0_140, %c0_141], %156 {strides = array<i32>} : memref<1x1x128xf32, #tpu.memory_space<vmem>>, vector<1x1x128xf32>,
    return
  }
  func.func @transform_0(%arg0: i32) -> (i32, i32, i32) {
    %c0_i32 = arith.constant 0 : i32
    %c0_i32_0 = arith.constant 0 : i32
    %c0_i32_1 = arith.constant 0 : i32
    return %arg0, %c0_i32, %c0_i32_0 : i32, i32, i32
  }
  func.func @transform_1(%arg0: i32) -> (i32, i32, i32) {
    %c0_i32 = arith.constant 0 : i32
    %c0_i32_0 = arith.constant 0 : i32
    %c0_i32_1 = arith.constant 0 : i32
    %c0_i32_2 = arith.constant 0 : i32
    return %c0_i32, %c0_i32_0, %c0_i32_1 : i32, i32, i32
  }
  func.func @transform_2(%arg0: i32) -> (i32, i32) {
    %c0_i32 = arith.constant 0 : i32
    %c0_i32_0 = arith.constant 0 : i32
    %c0_i32_1 = arith.constant 0 : i32
    return %c0_i32, %c0_i32_0 : i32, i32
  }
  func.func @transform_3(%arg0: i32) -> (i32, i32, i32) {
    %c0_i32 = arith.constant 0 : i32
    %c0_i32_0 = arith.constant 0 : i32
    %c0_i32_1 = arith.constant 0 : i32
    %c0_i32_2 = arith.constant 0 : i32
    return %c0_i32, %c0_i32_0, %c0_i32_1 : i32, i32, i32
  }
  func.func @transform_4(%arg0: i32) -> (i32, i32) {
    %c0_i32 = arith.constant 0 : i32
    %c0_i32_0 = arith.constant 0 : i32
    %c0_i32_1 = arith.constant 0 : i32
    return %c0_i32, %c0_i32_0 : i32, i32
  }
  func.func @transform_5(%arg0: i32) -> (i32, i32) {
    %c0_i32 = arith.constant 0 : i32
    %c0_i32_0 = arith.constant 0 : i32
    %c0_i32_1 = arith.constant 0 : i32
    return %c0_i32, %c0_i32_0 : i32, i32
  }
  func.func @transform_6(%arg0: i32) -> (i32, i32) {
    %c0_i32 = arith.constant 0 : i32
    %c0_i32_0 = arith.constant 0 : i32
    %c0_i32_1 = arith.constant 0 : i32
    return %c0_i32, %c0_i32_0 : i32, i32
  }
  func.func @transform_7(%arg0: i32) -> (i32, i32) {
    %c0_i32 = arith.constant 0 : i32
    %c0_i32_0 = arith.constant 0 : i32
    %c0_i32_1 = arith.constant 0 : i32
    return %c0_i32, %c0_i32_0 : i32, i32
  }
  func.func @transform_8(%arg0: i32) -> (i32, i32) {
    %c0_i32 = arith.constant 0 : i32
    %c0_i32_0 = arith.constant 0 : i32
    %c0_i32_1 = arith.constant 0 : i32
    return %c0_i32, %c0_i32_0 : i32, i32
  }
  func.func @transform_9(%arg0: i32) -> (i32, i32) {
    %c0_i32 = arith.constant 0 : i32
    %c0_i32_0 = arith.constant 0 : i32
    %c0_i32_1 = arith.constant 0 : i32
    return %c0_i32, %c0_i32_0 : i32, i32
  }
  func.func @transform_10(%arg0: i32) -> (i32, i32) {
    %c0_i32 = arith.constant 0 : i32
    %c0_i32_0 = arith.constant 0 : i32
    %c0_i32_1 = arith.constant 0 : i32
    return %c0_i32, %c0_i32_0 : i32, i32
  }
  func.func @transform_11(%arg0: i32) -> (i32, i32) {
    %c0_i32 = arith.constant 0 : i32
    %c0_i32_0 = arith.constant 0 : i32
    %c0_i32_1 = arith.constant 0 : i32
    return %c0_i32, %c0_i32_0 : i32, i32
  }
  func.func @transform_12(%arg0: i32) -> (i32, i32) {
    %c0_i32 = arith.constant 0 : i32
    %c0_i32_0 = arith.constant 0 : i32
    %c0_i32_1 = arith.constant 0 : i32
    return %c0_i32, %c0_i32_0 : i32, i32
  }
  func.func @transform_13(%arg0: i32) -> (i32, i32) {
    %c0_i32 = arith.constant 0 : i32
    %c0_i32_0 = arith.constant 0 : i32
    %c0_i32_1 = arith.constant 0 : i32
    return %c0_i32, %c0_i32_0 : i32, i32
  }
  func.func @transform_14(%arg0: i32) -> (i32, i32) {
    %c0_i32 = arith.constant 0 : i32
    %c0_i32_0 = arith.constant 0 : i32
    %c0_i32_1 = arith.constant 0 : i32
    return %c0_i32, %c0_i32_0 : i32, i32
  }
  func.func @transform_15(%arg0: i32) -> (i32, i32) {
    %c0_i32 = arith.constant 0 : i32
    %c0_i32_0 = arith.constant 0 : i32
    %c0_i32_1 = arith.constant 0 : i32
    return %c0_i32, %c0_i32_0 : i32, i32
  }
  func.func @transform_16(%arg0: i32) -> (i32, i32) {
    %c0_i32 = arith.constant 0 : i32
    %c0_i32_0 = arith.constant 0 : i32
    %c0_i32_1 = arith.constant 0 : i32
    return %c0_i32, %c0_i32_0 : i32, i32
  }
  func.func @transform_17(%arg0: i32) -> (i32, i32) {
    %c0_i32 = arith.constant 0 : i32
    %c0_i32_0 = arith.constant 0 : i32
    %c0_i32_1 = arith.constant 0 : i32
    return %c0_i32, %c0_i32_0 : i32, i32
  }
  func.func @transform_18(%arg0: i32) -> (i32, i32, i32) {
    %c0_i32 = arith.constant 0 : i32
    %c0_i32_0 = arith.constant 0 : i32
    %c0_i32_1 = arith.constant 0 : i32
    return %arg0, %c0_i32, %c0_i32_0 : i32, i32, i32
  }
  func.func @transform_19(%arg0: i32) -> (i32, i32, i32) {
    %c0_i32 = arith.constant 0 : i32
    %c0_i32_0 = arith.constant 0 : i32
    %c0_i32_1 = arith.constant 0 : i32
    return %arg0, %c0_i32, %c0_i32_0 : i32, i32, i32
  }
}

</mosaic_0001>

<llo_original>
// kernel: tpu_custom_call.1
$region0: #{tpu_custom_call.1}
  #allocation0 [shape = 'u32[]', space=smem, size = 0x4, offset = 0x4, fixed_abs, tag = 'smem constant byte address 0x4 - core index']
  #allocation1 [shape = 'u32[144,128]{1,0:T(1,128)}', space=vmem, size = 0x12000, scoped, tag = 'internal scratch']
  %s0 = inlined_call_operand.vmem [shape: f32[2,24,128], index: 0, kind: input, shape index: {}]
  %s1 = inlined_call_operand.hbm [shape: f32[9,128,128], index: 1, kind: input, shape index: {}]
  %s2 = inlined_call_operand.vmem [shape: f32[1,128], index: 2, kind: input, shape index: {}]
  %s3 = inlined_call_operand.hbm [shape: f32[9,128,128], index: 3, kind: input, shape index: {}]
  %s4 = inlined_call_operand.vmem [shape: f32[1,128], index: 4, kind: input, shape index: {}]
  %s5 = inlined_call_operand.vmem [shape: f32[128,32], index: 5, kind: input, shape index: {}]
  %s6 = inlined_call_operand.vmem [shape: f32[128,32], index: 6, kind: input, shape index: {}]
  %s7 = inlined_call_operand.vmem [shape: f32[1,32], index: 7, kind: input, shape index: {}]
  %s8 = inlined_call_operand.vmem [shape: f32[1,32], index: 8, kind: input, shape index: {}]
  %s9 = inlined_call_operand.vmem [shape: f32[1,32], index: 9, kind: input, shape index: {}]
  %s10 = inlined_call_operand.vmem [shape: f32[32,128], index: 10, kind: input, shape index: {}]
  %s11 = inlined_call_operand.vmem [shape: f32[1,128], index: 11, kind: input, shape index: {}]
  %s12 = inlined_call_operand.vmem [shape: f32[128,128], index: 12, kind: input, shape index: {}]
  %s13 = inlined_call_operand.vmem [shape: f32[1,128], index: 13, kind: input, shape index: {}]
  %s14 = inlined_call_operand.vmem [shape: f32[128,64], index: 14, kind: input, shape index: {}]
  %s15 = inlined_call_operand.vmem [shape: f32[1,64], index: 15, kind: input, shape index: {}]
  %s16 = inlined_call_operand.vmem [shape: f32[64,128], index: 16, kind: input, shape index: {}]
  %s17 = inlined_call_operand.vmem [shape: f32[1,128], index: 17, kind: input, shape index: {}]
  %s18 = inlined_call_operand.hbm [shape: f32[2,1,128], index: 18, kind: output, shape index: {0}]
  %s19 = inlined_call_operand.hbm [shape: f32[2,1,128], index: 19, kind: output, shape index: {1}]
  %20 = xla_tuple %s18, %s19
  %s21 = sld [smem:[#allocation0]]
  $region121: #{tpu_custom_call.1} parent=0
    _
  %s23 = ssub.s32 1, %s21
  %s24 = scalar_select 0, %s23, %s21
  $region1: #{tpu_custom_call.1} parent=0
    #allocation2 [shape = 'u8[589824]{0}', space=vmem, size = 0x90000, scoped, tag = 'input window, operand 1, single buffered']
    #allocation3 [shape = 's32[2]{0}', space=sflag, size = 0x8, scoped, tag = 'scoped memory for tpu_custom_call.1']
    #allocation4 [shape = 's32[2]{0}', space=sflag, size = 0x8, scoped, tag = 'scoped memory for tpu_custom_call.1']
    #allocation5 [shape = 'u8[589824]{0}', space=vmem, size = 0x90000, scoped, tag = 'input window, operand 3, single buffered']
    #allocation6 [shape = 's32[1]{0}', space=sflag, size = 0x4, scoped, tag = 'scoped memory for tpu_custom_call.1']
    #allocation7 [shape = 'u8[1024]{0}', space=vmem, size = 0x400, scoped, tag = 'output window, operand 0']
    #allocation8 [shape = 'u8[1024]{0}', space=vmem, size = 0x400, scoped, tag = 'output window, operand 1']
    #allocation9 [shape = 's32[2]{0}', space=sflag, size = 0x8, scoped, tag = 'scoped memory for tpu_custom_call.1']
    %25 = vsyncpa [#allocation3], 0
    %26 = vsyncpa [#allocation6], 0
    %27 = vsyncpa [#allocation4], 0
    %s28 = scalar_lea.sflag [#allocation4], 1
    %29 = vsyncpa %s28, 0
    %30 = vsyncpa [#allocation9], 0
    %s31 = scalar_lea.sflag [#allocation9], 1
    %32 = vsyncpa %s31, 0
    loop: start=0, step=1, limit=4
    $region2: #{tpu_custom_call.1} parent=1 // loop_pre_header
      _
    $region3: #{tpu_custom_call.1} parent=1 // loop_header
      %s34 = sphi 0, %s38
      %p35 = scmp.ge.s32.totalorder %s34, 4
      %s44 = sphi 0, %s46
      %s47 = sphi 0, %s44
      %s48 = sphi 0, %s47
      %s64 = sphi 0, %s48
      %s68 = sphi 0, %s68
      %s70 = sphi 0, %s68
      %s71 = sphi 0, %s70
      %s85 = sphi 0, %s71
      %s89 = sphi 0, %s89
      %s91 = sphi 0, %s89
      %s92 = sphi 0, %s91
      %s106 = sphi 0, %s92
      %s110 = sphi 0, %s110
      %s112 = sphi 0, %s110
      %s113 = sphi 0, %s112
      %s127 = sphi 0, %s113
      %s131 = sphi 0, %s131
      %s133 = sphi 0, %s131
      %s134 = sphi 0, %s133
      %s148 = sphi 0, %s134
      %s152 = sphi 0, %s152
      %s154 = sphi 0, %s152
      %s155 = sphi 0, %s154
      %s169 = sphi 0, %s155
      %s173 = sphi 0, %s173
      %s175 = sphi 0, %s173
      %s176 = sphi 0, %s175
      %s190 = sphi 0, %s176
      %s194 = sphi 0, %s194
      %s196 = sphi 0, %s194
      %s197 = sphi 0, %s196
      %s211 = sphi 0, %s197
      %s215 = sphi 0, %s215
      %s217 = sphi 0, %s215
      %s218 = sphi 0, %s217
      %s232 = sphi 0, %s218
      %s236 = sphi 0, %s236
      %s238 = sphi 0, %s236
      %s239 = sphi 0, %s238
      %s253 = sphi 0, %s239
      %s257 = sphi 0, %s257
      %s259 = sphi 0, %s257
      %s260 = sphi 0, %s259
      %s274 = sphi 0, %s260
      %s278 = sphi 0, %s278
      %s280 = sphi 0, %s278
      %s281 = sphi 0, %s280
      %s295 = sphi 0, %s281
      %s299 = sphi 0, %s299
      %s301 = sphi 0, %s299
      %s302 = sphi 0, %s301
      %s316 = sphi 0, %s302
      %s320 = sphi 0, %s320
      %s322 = sphi 0, %s320
      %s323 = sphi 0, %s322
      %s337 = sphi 0, %s323
      %s341 = sphi 0, %s341
      %s343 = sphi 0, %s341
      %s344 = sphi 0, %s343
      %s358 = sphi 0, %s344
      %s362 = sphi 0, %s362
      %s364 = sphi 0, %s362
      %s365 = sphi 0, %s364
      %s379 = sphi 0, %s365
      %s383 = sphi 0, %s383
      %s385 = sphi 0, %s383
      %s386 = sphi 0, %s385
      %s400 = sphi 0, %s386
      %s404 = sphi 0, %s404
      %s406 = sphi 0, %s404
      %s407 = sphi 0, %s406
      %s421 = sphi 0, %s407
      %s427 = sphi 0, %s429
      %s430 = sphi 0, %s427
      %s431 = sphi 0, %s430
      %s447 = sphi 0, %s431
      %s453 = sphi 0, %s455
      %s456 = sphi 0, %s453
      %s457 = sphi 0, %s456
      %s473 = sphi 0, %s457
    $region4: #{tpu_custom_call.1} parent=1 // loop_header_branch
      %37 = sbr.rel (%p35) target = $region8
    $region5: #{tpu_custom_call.1} parent=1 // loop_body
      %s39 = ssub.s32 %s34, 1
      %s40 = ssub.s32 %s34, 2
      %s41 = sadd.s32 %s34, 1
      %s42 = ssub.s32 %s34, %s41
      %p43 = scmp.eq.s32.totalorder %s42, 0
      %s45 = sadd.s32 %s44, 1
      %s46 = scalar_select %p43, %s44, %s45
      %p49 = pneg %p43
      %p50 = scmp.eq.s32.totalorder %s34, 1
      %p51 = por %p49, %p50
      %p52 = scmp.ne.s32.totalorder %s44, %s47
      %p53 = scmp.eq.s32.totalorder %s34, 0
      %p54 = por %p52, %p53
      %p55 = scmp.ne.s32.totalorder %s44, %s47
      %p56 = scmp.eq.s32.totalorder %s39, 1
      %p57 = por %p55, %p56
      %p58 = scmp.ne.s32.totalorder %s47, %s48
      %p59 = scmp.eq.s32.totalorder %s39, 0
      %p60 = por %p58, %p59
      %p61 = scmp.ne.s32.totalorder %s47, %s48
      %p62 = scmp.eq.s32.totalorder %s40, 1
      %p63 = por %p61, %p62
      %p65 = scmp.ne.s32.totalorder %s48, %s64
      %p66 = scmp.eq.s32.totalorder %s40, 0
      %p67 = por %p65, %p66
      %s69 = sadd.s32 %s68, 1
      %p72 = scmp.eq.s32.totalorder %s34, 1
      %p73 = scmp.ne.s32.totalorder %s68, %s70
      %p74 = scmp.eq.s32.totalorder %s34, 0
      %p75 = por %p73, %p74
      %p76 = scmp.ne.s32.totalorder %s68, %s70
      %p77 = scmp.eq.s32.totalorder %s39, 1
      %p78 = por %p76, %p77
      %p79 = scmp.ne.s32.totalorder %s70, %s71
      %p80 = scmp.eq.s32.totalorder %s39, 0
      %p81 = por %p79, %p80
      %p82 = scmp.ne.s32.totalorder %s70, %s71
      %p83 = scmp.eq.s32.totalorder %s40, 1
      %p84 = por %p82, %p83
      %p86 = scmp.ne.s32.totalorder %s71, %s85
      %p87 = scmp.eq.s32.totalorder %s40, 0
      %p88 = por %p86, %p87
      %s90 = sadd.s32 %s89, 1
      %p93 = scmp.eq.s32.totalorder %s34, 1
      %p94 = scmp.ne.s32.totalorder %s89, %s91
      %p95 = scmp.eq.s32.totalorder %s34, 0
      %p96 = por %p94, %p95
      %p97 = scmp.ne.s32.totalorder %s89, %s91
      %p98 = scmp.eq.s32.totalorder %s39, 1
      %p99 = por %p97, %p98
      %p100 = scmp.ne.s32.totalorder %s91, %s92
      %p101 = scmp.eq.s32.totalorder %s39, 0
      %p102 = por %p100, %p101
      %p103 = scmp.ne.s32.totalorder %s91, %s92
      %p104 = scmp.eq.s32.totalorder %s40, 1
      %p105 = por %p103, %p104
      %p107 = scmp.ne.s32.totalorder %s92, %s106
      %p108 = scmp.eq.s32.totalorder %s40, 0
      %p109 = por %p107, %p108
      %s111 = sadd.s32 %s110, 1
      %p114 = scmp.eq.s32.totalorder %s34, 1
      %p115 = scmp.ne.s32.totalorder %s110, %s112
      %p116 = scmp.eq.s32.totalorder %s34, 0
      %p117 = por %p115, %p116
      %p118 = scmp.ne.s32.totalorder %s110, %s112
      %p119 = scmp.eq.s32.totalorder %s39, 1
      %p120 = por %p118, %p119
      %p121 = scmp.ne.s32.totalorder %s112, %s113
      %p122 = scmp.eq.s32.totalorder %s39, 0
      %p123 = por %p121, %p122
      %p124 = scmp.ne.s32.totalorder %s112, %s113
      %p125 = scmp.eq.s32.totalorder %s40, 1
      %p126 = por %p124, %p125
      %p128 = scmp.ne.s32.totalorder %s113, %s127
      %p129 = scmp.eq.s32.totalorder %s40, 0
      %p130 = por %p128, %p129
      %s132 = sadd.s32 %s131, 1
      %p135 = scmp.eq.s32.totalorder %s34, 1
      %p136 = scmp.ne.s32.totalorder %s131, %s133
      %p137 = scmp.eq.s32.totalorder %s34, 0
      %p138 = por %p136, %p137
      %p139 = scmp.ne.s32.totalorder %s131, %s133
      %p140 = scmp.eq.s32.totalorder %s39, 1
      %p141 = por %p139, %p140
      %p142 = scmp.ne.s32.totalorder %s133, %s134
      %p143 = scmp.eq.s32.totalorder %s39, 0
      %p144 = por %p142, %p143
      %p145 = scmp.ne.s32.totalorder %s133, %s134
      %p146 = scmp.eq.s32.totalorder %s40, 1
      %p147 = por %p145, %p146
      %p149 = scmp.ne.s32.totalorder %s134, %s148
      %p150 = scmp.eq.s32.totalorder %s40, 0
      %p151 = por %p149, %p150
      %s153 = sadd.s32 %s152, 1
      %p156 = scmp.eq.s32.totalorder %s34, 1
      %p157 = scmp.ne.s32.totalorder %s152, %s154
      %p158 = scmp.eq.s32.totalorder %s34, 0
      %p159 = por %p157, %p158
      %p160 = scmp.ne.s32.totalorder %s152, %s154
      %p161 = scmp.eq.s32.totalorder %s39, 1
      %p162 = por %p160, %p161
      %p163 = scmp.ne.s32.totalorder %s154, %s155
      %p164 = scmp.eq.s32.totalorder %s39, 0
      %p165 = por %p163, %p164
      %p166 = scmp.ne.s32.totalorder %s154, %s155
      %p167 = scmp.eq.s32.totalorder %s40, 1
      %p168 = por %p166, %p167
      %p170 = scmp.ne.s32.totalorder %s155, %s169
      %p171 = scmp.eq.s32.totalorder %s40, 0
      %p172 = por %p170, %p171
      %s174 = sadd.s32 %s173, 1
      %p177 = scmp.eq.s32.totalorder %s34, 1
      %p178 = scmp.ne.s32.totalorder %s173, %s175
      %p179 = scmp.eq.s32.totalorder %s34, 0
      %p180 = por %p178, %p179
      %p181 = scmp.ne.s32.totalorder %s173, %s175
      %p182 = scmp.eq.s32.totalorder %s39, 1
      %p183 = por %p181, %p182
      %p184 = scmp.ne.s32.totalorder %s175, %s176
      %p185 = scmp.eq.s32.totalorder %s39, 0
      %p186 = por %p184, %p185
      %p187 = scmp.ne.s32.totalorder %s175, %s176
      %p188 = scmp.eq.s32.totalorder %s40, 1
      %p189 = por %p187, %p188
      %p191 = scmp.ne.s32.totalorder %s176, %s190
      %p192 = scmp.eq.s32.totalorder %s40, 0
      %p193 = por %p191, %p192
      %s195 = sadd.s32 %s194, 1
      %p198 = scmp.eq.s32.totalorder %s34, 1
      %p199 = scmp.ne.s32.totalorder %s194, %s196
      %p200 = scmp.eq.s32.totalorder %s34, 0
      %p201 = por %p199, %p200
      %p202 = scmp.ne.s32.totalorder %s194, %s196
      %p203 = scmp.eq.s32.totalorder %s39, 1
      %p204 = por %p202, %p203
      %p205 = scmp.ne.s32.totalorder %s196, %s197
      %p206 = scmp.eq.s32.totalorder %s39, 0
      %p207 = por %p205, %p206
      %p208 = scmp.ne.s32.totalorder %s196, %s197
      %p209 = scmp.eq.s32.totalorder %s40, 1
      %p210 = por %p208, %p209
      %p212 = scmp.ne.s32.totalorder %s197, %s211
      %p213 = scmp.eq.s32.totalorder %s40, 0
      %p214 = por %p212, %p213
      %s216 = sadd.s32 %s215, 1
      %p219 = scmp.eq.s32.totalorder %s34, 1
      %p220 = scmp.ne.s32.totalorder %s215, %s217
      %p221 = scmp.eq.s32.totalorder %s34, 0
      %p222 = por %p220, %p221
      %p223 = scmp.ne.s32.totalorder %s215, %s217
      %p224 = scmp.eq.s32.totalorder %s39, 1
      %p225 = por %p223, %p224
      %p226 = scmp.ne.s32.totalorder %s217, %s218
      %p227 = scmp.eq.s32.totalorder %s39, 0
      %p228 = por %p226, %p227
      %p229 = scmp.ne.s32.totalorder %s217, %s218
      %p230 = scmp.eq.s32.totalorder %s40, 1
      %p231 = por %p229, %p230
      %p233 = scmp.ne.s32.totalorder %s218, %s232
      %p234 = scmp.eq.s32.totalorder %s40, 0
      %p235 = por %p233, %p234
      %s237 = sadd.s32 %s236, 1
      %p240 = scmp.eq.s32.totalorder %s34, 1
      %p241 = scmp.ne.s32.totalorder %s236, %s238
      %p242 = scmp.eq.s32.totalorder %s34, 0
      %p243 = por %p241, %p242
      %p244 = scmp.ne.s32.totalorder %s236, %s238
      %p245 = scmp.eq.s32.totalorder %s39, 1
      %p246 = por %p244, %p245
      %p247 = scmp.ne.s32.totalorder %s238, %s239
      %p248 = scmp.eq.s32.totalorder %s39, 0
      %p249 = por %p247, %p248
      %p250 = scmp.ne.s32.totalorder %s238, %s239
      %p251 = scmp.eq.s32.totalorder %s40, 1
      %p252 = por %p250, %p251
      %p254 = scmp.ne.s32.totalorder %s239, %s253
      %p255 = scmp.eq.s32.totalorder %s40, 0
      %p256 = por %p254, %p255
      %s258 = sadd.s32 %s257, 1
      %p261 = scmp.eq.s32.totalorder %s34, 1
      %p262 = scmp.ne.s32.totalorder %s257, %s259
      %p263 = scmp.eq.s32.totalorder %s34, 0
      %p264 = por %p262, %p263
      %p265 = scmp.ne.s32.totalorder %s257, %s259
      %p266 = scmp.eq.s32.totalorder %s39, 1
      %p267 = por %p265, %p266
      %p268 = scmp.ne.s32.totalorder %s259, %s260
      %p269 = scmp.eq.s32.totalorder %s39, 0
      %p270 = por %p268, %p269
      %p271 = scmp.ne.s32.totalorder %s259, %s260
      %p272 = scmp.eq.s32.totalorder %s40, 1
      %p273 = por %p271, %p272
      %p275 = scmp.ne.s32.totalorder %s260, %s274
      %p276 = scmp.eq.s32.totalorder %s40, 0
      %p277 = por %p275, %p276
      %s279 = sadd.s32 %s278, 1
      %p282 = scmp.eq.s32.totalorder %s34, 1
      %p283 = scmp.ne.s32.totalorder %s278, %s280
      %p284 = scmp.eq.s32.totalorder %s34, 0
      %p285 = por %p283, %p284
      %p286 = scmp.ne.s32.totalorder %s278, %s280
      %p287 = scmp.eq.s32.totalorder %s39, 1
      %p288 = por %p286, %p287
      %p289 = scmp.ne.s32.totalorder %s280, %s281
      %p290 = scmp.eq.s32.totalorder %s39, 0
      %p291 = por %p289, %p290
      %p292 = scmp.ne.s32.totalorder %s280, %s281
      %p293 = scmp.eq.s32.totalorder %s40, 1
      %p294 = por %p292, %p293
      %p296 = scmp.ne.s32.totalorder %s281, %s295
      %p297 = scmp.eq.s32.totalorder %s40, 0
      %p298 = por %p296, %p297
      %s300 = sadd.s32 %s299, 1
      %p303 = scmp.eq.s32.totalorder %s34, 1
      %p304 = scmp.ne.s32.totalorder %s299, %s301
      %p305 = scmp.eq.s32.totalorder %s34, 0
      %p306 = por %p304, %p305
      %p307 = scmp.ne.s32.totalorder %s299, %s301
      %p308 = scmp.eq.s32.totalorder %s39, 1
      %p309 = por %p307, %p308
      %p310 = scmp.ne.s32.totalorder %s301, %s302
      %p311 = scmp.eq.s32.totalorder %s39, 0
      %p312 = por %p310, %p311
      %p313 = scmp.ne.s32.totalorder %s301, %s302
      %p314 = scmp.eq.s32.totalorder %s40, 1
      %p315 = por %p313, %p314
      %p317 = scmp.ne.s32.totalorder %s302, %s316
      %p318 = scmp.eq.s32.totalorder %s40, 0
      %p319 = por %p317, %p318
      %s321 = sadd.s32 %s320, 1
      %p324 = scmp.eq.s32.totalorder %s34, 1
      %p325 = scmp.ne.s32.totalorder %s320, %s322
      %p326 = scmp.eq.s32.totalorder %s34, 0
      %p327 = por %p325, %p326
      %p328 = scmp.ne.s32.totalorder %s320, %s322
      %p329 = scmp.eq.s32.totalorder %s39, 1
      %p330 = por %p328, %p329
      %p331 = scmp.ne.s32.totalorder %s322, %s323
      %p332 = scmp.eq.s32.totalorder %s39, 0
      %p333 = por %p331, %p332
      %p334 = scmp.ne.s32.totalorder %s322, %s323
      %p335 = scmp.eq.s32.totalorder %s40, 1
      %p336 = por %p334, %p335
      %p338 = scmp.ne.s32.totalorder %s323, %s337
      %p339 = scmp.eq.s32.totalorder %s40, 0
      %p340 = por %p338, %p339
      %s342 = sadd.s32 %s341, 1
      %p345 = scmp.eq.s32.totalorder %s34, 1
      %p346 = scmp.ne.s32.totalorder %s341, %s343
      %p347 = scmp.eq.s32.totalorder %s34, 0
      %p348 = por %p346, %p347
      %p349 = scmp.ne.s32.totalorder %s341, %s343
      %p350 = scmp.eq.s32.totalorder %s39, 1
      %p351 = por %p349, %p350
      %p352 = scmp.ne.s32.totalorder %s343, %s344
      %p353 = scmp.eq.s32.totalorder %s39, 0
      %p354 = por %p352, %p353
      %p355 = scmp.ne.s32.totalorder %s343, %s344
      %p356 = scmp.eq.s32.totalorder %s40, 1
      %p357 = por %p355, %p356
      %p359 = scmp.ne.s32.totalorder %s344, %s358
      %p360 = scmp.eq.s32.totalorder %s40, 0
      %p361 = por %p359, %p360
      %s363 = sadd.s32 %s362, 1
      %p366 = scmp.eq.s32.totalorder %s34, 1
      %p367 = scmp.ne.s32.totalorder %s362, %s364
      %p368 = scmp.eq.s32.totalorder %s34, 0
      %p369 = por %p367, %p368
      %p370 = scmp.ne.s32.totalorder %s362, %s364
      %p371 = scmp.eq.s32.totalorder %s39, 1
      %p372 = por %p370, %p371
      %p373 = scmp.ne.s32.totalorder %s364, %s365
      %p374 = scmp.eq.s32.totalorder %s39, 0
      %p375 = por %p373, %p374
      %p376 = scmp.ne.s32.totalorder %s364, %s365
      %p377 = scmp.eq.s32.totalorder %s40, 1
      %p378 = por %p376, %p377
      %p380 = scmp.ne.s32.totalorder %s365, %s379
      %p381 = scmp.eq.s32.totalorder %s40, 0
      %p382 = por %p380, %p381
      %s384 = sadd.s32 %s383, 1
      %p387 = scmp.eq.s32.totalorder %s34, 1
      %p388 = scmp.ne.s32.totalorder %s383, %s385
      %p389 = scmp.eq.s32.totalorder %s34, 0
      %p390 = por %p388, %p389
      %p391 = scmp.ne.s32.totalorder %s383, %s385
      %p392 = scmp.eq.s32.totalorder %s39, 1
      %p393 = por %p391, %p392
      %p394 = scmp.ne.s32.totalorder %s385, %s386
      %p395 = scmp.eq.s32.totalorder %s39, 0
      %p396 = por %p394, %p395
      %p397 = scmp.ne.s32.totalorder %s385, %s386
      %p398 = scmp.eq.s32.totalorder %s40, 1
      %p399 = por %p397, %p398
      %p401 = scmp.ne.s32.totalorder %s386, %s400
      %p402 = scmp.eq.s32.totalorder %s40, 0
      %p403 = por %p401, %p402
      %s405 = sadd.s32 %s404, 1
      %p408 = scmp.eq.s32.totalorder %s34, 1
      %p409 = scmp.ne.s32.totalorder %s404, %s406
      %p410 = scmp.eq.s32.totalorder %s34, 0
      %p411 = por %p409, %p410
      %p412 = scmp.ne.s32.totalorder %s404, %s406
      %p413 = scmp.eq.s32.totalorder %s39, 1
      %p414 = por %p412, %p413
      %p415 = scmp.ne.s32.totalorder %s406, %s407
      %p416 = scmp.eq.s32.totalorder %s39, 0
      %p417 = por %p415, %p416
      %p418 = scmp.ne.s32.totalorder %s406, %s407
      %p419 = scmp.eq.s32.totalorder %s40, 1
      %p420 = por %p418, %p419
      %p422 = scmp.ne.s32.totalorder %s407, %s421
      %p423 = scmp.eq.s32.totalorder %s40, 0
      %p424 = por %p422, %p423
      %s425 = ssub.s32 %s34, %s41
      %p426 = scmp.eq.s32.totalorder %s425, 0
      %s428 = sadd.s32 %s427, 1
      %s429 = scalar_select %p426, %s427, %s428
      %p432 = pneg %p426
      %p433 = scmp.eq.s32.totalorder %s34, 1
      %p434 = por %p432, %p433
      %p435 = scmp.ne.s32.totalorder %s427, %s430
      %p436 = scmp.eq.s32.totalorder %s34, 0
      %p437 = por %p435, %p436
      %p438 = scmp.ne.s32.totalorder %s427, %s430
      %p439 = scmp.eq.s32.totalorder %s39, 1
      %p440 = por %p438, %p439
      %p441 = scmp.ne.s32.totalorder %s430, %s431
      %p442 = scmp.eq.s32.totalorder %s39, 0
      %p443 = por %p441, %p442
      %p444 = scmp.ne.s32.totalorder %s430, %s431
      %p445 = scmp.eq.s32.totalorder %s40, 1
      %p446 = por %p444, %p445
      %p448 = scmp.ne.s32.totalorder %s431, %s447
      %p449 = scmp.eq.s32.totalorder %s40, 0
      %p450 = por %p448, %p449
      %s451 = ssub.s32 %s34, %s41
      %p452 = scmp.eq.s32.totalorder %s451, 0
      %s454 = sadd.s32 %s453, 1
      %s455 = scalar_select %p452, %s453, %s454
      %p458 = pneg %p452
      %p459 = scmp.eq.s32.totalorder %s34, 1
      %p460 = por %p458, %p459
      %p461 = scmp.ne.s32.totalorder %s453, %s456
      %p462 = scmp.eq.s32.totalorder %s34, 0
      %p463 = por %p461, %p462
      %p464 = scmp.ne.s32.totalorder %s453, %s456
      %p465 = scmp.eq.s32.totalorder %s39, 1
      %p466 = por %p464, %p465
      %p467 = scmp.ne.s32.totalorder %s456, %s457
      %p468 = scmp.eq.s32.totalorder %s39, 0
      %p469 = por %p467, %p468
      %p470 = scmp.ne.s32.totalorder %s456, %s457
      %p471 = scmp.eq.s32.totalorder %s40, 1
      %p472 = por %p470, %p471
      %p474 = scmp.ne.s32.totalorder %s457, %s473
      %p475 = scmp.eq.s32.totalorder %s40, 0
      %p476 = por %p474, %p475
      %p477 = scmp.le.s32.totalorder 1, %s34
      %p478 = scmp.lt.s32.totalorder %s34, 3
      %p479 = pnand %p477, %p478
      %p480 = pneg %p479
      // Predicated region
      $region9: #{tpu_custom_call.1} parent=5 // pred_check
        _
      $region10: #{tpu_custom_call.1} parent=5 // pred_check_branch
        %482 = sbr.rel (%p479) target = $region12
      $region11: #{tpu_custom_call.1} parent=5 // pred_region
        %s483 = ssub.s32 %s34, 1
        // Predicated region
        $region13: #{tpu_custom_call.1} parent=11 // pred_check
          %p484 = pneg %p81
        $region14: #{tpu_custom_call.1} parent=11 // pred_check_branch
          %486 = sbr.rel (%p484) target = $region16
        $region15: #{tpu_custom_call.1} parent=11 // pred_region
          %s488 = ssub.s32 18432, 18432
          %489 = vsyncadd [#allocation3], %s488
          %s490 = sshll.u32 [#allocation2], 4
          %s491 = int_to_ptr.vmem [resolvable:$true] %s490
          %496 = dma.hbm_to_vmem [thread:$0]  %s1, 18432, %s491, [#allocation3], 128, 128, 8
        $region16: #{tpu_custom_call.1} parent=11 // pred_fallthru
          _
        // Predicated region
        $region17: #{tpu_custom_call.1} parent=11 // pred_check
          %p497 = pneg %p102
        $region18: #{tpu_custom_call.1} parent=11 // pred_check_branch
          %499 = sbr.rel (%p497) target = $region20
        $region19: #{tpu_custom_call.1} parent=11 // pred_region
          _
        $region20: #{tpu_custom_call.1} parent=11 // pred_fallthru
          _
        // Predicated region
        $region21: #{tpu_custom_call.1} parent=11 // pred_check
          %p500 = pneg %p123
        $region22: #{tpu_custom_call.1} parent=11 // pred_check_branch
          %502 = sbr.rel (%p500) target = $region24
        $region23: #{tpu_custom_call.1} parent=11 // pred_region
          %s504 = ssub.s32 18432, 18432
          %505 = vsyncadd [#allocation6], %s504
          %s506 = sshll.u32 [#allocation5], 4
          %s507 = int_to_ptr.vmem [resolvable:$true] %s506
          %512 = dma.hbm_to_vmem [thread:$0]  %s3, 18432, %s507, [#allocation6], 128, 128, 8
        $region24: #{tpu_custom_call.1} parent=11 // pred_fallthru
          _
        // Predicated region
        $region25: #{tpu_custom_call.1} parent=11 // pred_check
          %p513 = pneg %p144
        $region26: #{tpu_custom_call.1} parent=11 // pred_check_branch
          %515 = sbr.rel (%p513) target = $region28
        $region27: #{tpu_custom_call.1} parent=11 // pred_region
          _
        $region28: #{tpu_custom_call.1} parent=11 // pred_fallthru
          _
        // Predicated region
        $region29: #{tpu_custom_call.1} parent=11 // pred_check
          %p516 = pneg %p165
        $region30: #{tpu_custom_call.1} parent=11 // pred_check_branch
          %518 = sbr.rel (%p516) target = $region32
        $region31: #{tpu_custom_call.1} parent=11 // pred_region
          _
        $region32: #{tpu_custom_call.1} parent=11 // pred_fallthru
          _
        // Predicated region
        $region33: #{tpu_custom_call.1} parent=11 // pred_check
          %p519 = pneg %p186
        $region34: #{tpu_custom_call.1} parent=11 // pred_check_branch
          %521 = sbr.rel (%p519) target = $region36
        $region35: #{tpu_custom_call.1} parent=11 // pred_region
          _
        $region36: #{tpu_custom_call.1} parent=11 // pred_fallthru
          _
        // Predicated region
        $region37: #{tpu_custom_call.1} parent=11 // pred_check
          %p522 = pneg %p207
        $region38: #{tpu_custom_call.1} parent=11 // pred_check_branch
          %524 = sbr.rel (%p522) target = $region40
        $region39: #{tpu_custom_call.1} parent=11 // pred_region
          _
        $region40: #{tpu_custom_call.1} parent=11 // pred_fallthru
          _
        // Predicated region
        $region41: #{tpu_custom_call.1} parent=11 // pred_check
          %p525 = pneg %p228
        $region42: #{tpu_custom_call.1} parent=11 // pred_check_branch
          %527 = sbr.rel (%p525) target = $region44
        $region43: #{tpu_custom_call.1} parent=11 // pred_region
          _
        $region44: #{tpu_custom_call.1} parent=11 // pred_fallthru
          _
        // Predicated region
        $region45: #{tpu_custom_call.1} parent=11 // pred_check
          %p528 = pneg %p249
        $region46: #{tpu_custom_call.1} parent=11 // pred_check_branch
          %530 = sbr.rel (%p528) target = $region48
        $region47: #{tpu_custom_call.1} parent=11 // pred_region
          _
        $region48: #{tpu_custom_call.1} parent=11 // pred_fallthru
          _
        // Predicated region
        $region49: #{tpu_custom_call.1} parent=11 // pred_check
          %p531 = pneg %p270
        $region50: #{tpu_custom_call.1} parent=11 // pred_check_branch
          %533 = sbr.rel (%p531) target = $region52
        $region51: #{tpu_custom_call.1} parent=11 // pred_region
          _
        $region52: #{tpu_custom_call.1} parent=11 // pred_fallthru
          _
        // Predicated region
        $region53: #{tpu_custom_call.1} parent=11 // pred_check
          %p534 = pneg %p291
        $region54: #{tpu_custom_call.1} parent=11 // pred_check_branch
          %536 = sbr.rel (%p534) target = $region56
        $region55: #{tpu_custom_call.1} parent=11 // pred_region
          _
        $region56: #{tpu_custom_call.1} parent=11 // pred_fallthru
          _
        // Predicated region
        $region57: #{tpu_custom_call.1} parent=11 // pred_check
          %p537 = pneg %p312
        $region58: #{tpu_custom_call.1} parent=11 // pred_check_branch
          %539 = sbr.rel (%p537) target = $region60
        $region59: #{tpu_custom_call.1} parent=11 // pred_region
          _
        $region60: #{tpu_custom_call.1} parent=11 // pred_fallthru
          _
        // Predicated region
        $region61: #{tpu_custom_call.1} parent=11 // pred_check
          %p540 = pneg %p333
        $region62: #{tpu_custom_call.1} parent=11 // pred_check_branch
          %542 = sbr.rel (%p540) target = $region64
        $region63: #{tpu_custom_call.1} parent=11 // pred_region
          _
        $region64: #{tpu_custom_call.1} parent=11 // pred_fallthru
          _
        // Predicated region
        $region65: #{tpu_custom_call.1} parent=11 // pred_check
          %p543 = pneg %p354
        $region66: #{tpu_custom_call.1} parent=11 // pred_check_branch
          %545 = sbr.rel (%p543) target = $region68
        $region67: #{tpu_custom_call.1} parent=11 // pred_region
          _
        $region68: #{tpu_custom_call.1} parent=11 // pred_fallthru
          _
        // Predicated region
        $region69: #{tpu_custom_call.1} parent=11 // pred_check
          %p546 = pneg %p375
        $region70: #{tpu_custom_call.1} parent=11 // pred_check_branch
          %548 = sbr.rel (%p546) target = $region72
        $region71: #{tpu_custom_call.1} parent=11 // pred_region
          _
        $region72: #{tpu_custom_call.1} parent=11 // pred_fallthru
          _
        // Predicated region
        $region73: #{tpu_custom_call.1} parent=11 // pred_check
          %p549 = pneg %p396
        $region74: #{tpu_custom_call.1} parent=11 // pred_check_branch
          %551 = sbr.rel (%p549) target = $region76
        $region75: #{tpu_custom_call.1} parent=11 // pred_region
          _
        $region76: #{tpu_custom_call.1} parent=11 // pred_fallthru
          _
        // Predicated region
        $region77: #{tpu_custom_call.1} parent=11 // pred_check
          %p552 = pneg %p417
        $region78: #{tpu_custom_call.1} parent=11 // pred_check_branch
          %554 = sbr.rel (%p552) target = $region80
        $region79: #{tpu_custom_call.1} parent=11 // pred_region
          _
        $region80: #{tpu_custom_call.1} parent=11 // pred_fallthru
          _
      $region12: #{tpu_custom_call.1} parent=5 // pred_fallthru
        _
      %p555 = scmp.lt.s32.totalorder %s34, 2
      // Predicated region
      $region81: #{tpu_custom_call.1} parent=5 // pred_check
        %p556 = pneg %p555
      $region82: #{tpu_custom_call.1} parent=5 // pred_check_branch
        %558 = sbr.rel (%p556) target = $region84
      $region83: #{tpu_custom_call.1} parent=5 // pred_region
        // Predicated region
        $region85: #{tpu_custom_call.1} parent=83 // pred_check
          %p559 = pneg %p54
        $region86: #{tpu_custom_call.1} parent=83 // pred_check_branch
          %561 = sbr.rel (%p559) target = $region88
        $region87: #{tpu_custom_call.1} parent=83 // pred_region
          %p562 = scmp.lt.s32.totalorder %s34, 1
          %s563 = scalar_select %p562, %s34, 1
          %s564 = smul.addr %s563, 3
          %s565 = smul.addr %s564, 8
          %s566 = scalar_lea.vmem %s0, %s565
        $region88: #{tpu_custom_call.1} parent=83 // pred_fallthru
          _
      $region84: #{tpu_custom_call.1} parent=5 // pred_fallthru
        _
      %p567 = scmp.le.s32.totalorder 1, %s34
      %p568 = scmp.lt.s32.totalorder %s34, 3
      %p569 = pnand %p567, %p568
      %p570 = pneg %p569
      // Predicated region
      $region89: #{tpu_custom_call.1} parent=5 // pred_check
        _
      $region90: #{tpu_custom_call.1} parent=5 // pred_check_branch
        %572 = sbr.rel (%p569) target = $region92
      $region91: #{tpu_custom_call.1} parent=5 // pred_region
        %s573 = ssub.s32 %s34, 1
        // Predicated region
        $region93: #{tpu_custom_call.1} parent=91 // pred_check
          %p574 = pneg %p81
        $region94: #{tpu_custom_call.1} parent=91 // pred_check_branch
          %576 = sbr.rel (%p574) target = $region96
        $region95: #{tpu_custom_call.1} parent=91 // pred_region
          %577 = dma.done [#allocation3], 18432
        $region96: #{tpu_custom_call.1} parent=91 // pred_fallthru
          _
        // Predicated region
        $region97: #{tpu_custom_call.1} parent=91 // pred_check
          %p578 = pneg %p123
        $region98: #{tpu_custom_call.1} parent=91 // pred_check_branch
          %580 = sbr.rel (%p578) target = $region100
        $region99: #{tpu_custom_call.1} parent=91 // pred_region
          %581 = dma.done [#allocation6], 18432
        $region100: #{tpu_custom_call.1} parent=91 // pred_fallthru
          _
        %p582 = scmp.lt.s32.totalorder %s39, 1
        %s583 = scalar_select %p582, %s39, 1
        %s584 = smul.addr %s583, 3
        %s585 = smul.addr %s584, 8
        %s586 = scalar_lea.vmem %s0, %s585
        %p587 = pneg %p60
        %p588 = pneg %p57
        %p589 = pneg %p81
        %p590 = pneg %p78
        %p591 = pneg %p102
        %p592 = pneg %p99
        %p593 = pneg %p123
        %p594 = pneg %p120
        %p595 = pneg %p144
        %p596 = pneg %p141
        %p597 = pneg %p165
        %p598 = pneg %p162
        %p599 = pneg %p186
        %p600 = pneg %p183
        %p601 = pneg %p207
        %p602 = pneg %p204
        %p603 = pneg %p228
        %p604 = pneg %p225
        %p605 = pneg %p249
        %p606 = pneg %p246
        %p607 = pneg %p270
        %p608 = pneg %p267
        %p609 = pneg %p291
        %p610 = pneg %p288
        %p611 = pneg %p312
        %p612 = pneg %p309
        %p613 = pneg %p333
        %p614 = pneg %p330
        %p615 = pneg %p354
        %p616 = pneg %p351
        %p617 = pneg %p375
        %p618 = pneg %p372
        %p619 = pneg %p396
        %p620 = pneg %p393
        %p621 = pneg %p417
        %p622 = pneg %p414
        %p623 = pneg %p443
        %p624 = pneg %p440
        %s625 = sand.u32 %s430, 1
        %s626 = scalar_lea.sflag [#allocation4], %s625
        %s627 = sand.u32 %s430, 1
        %s628 = scalar_lea.vmem [#allocation7], %s627
        %p629 = pneg %p469
        %p630 = pneg %p466
        %s631 = sand.u32 %s456, 1
        %s632 = scalar_lea.sflag [#allocation9], %s631
        %s633 = sand.u32 %s456, 1
        %s634 = scalar_lea.vmem [#allocation8], %s633
        %p635 = scmp.lt.s32.totalorder %s39, 1
        %s636 = scalar_select %p635, %s39, 1
        %s637 = smul.addr %s636, 3
        %s638 = smul.addr %s637, 8
        %s639 = scalar_lea.vmem %s0, %s638
        %v640 = vld [vmem:[%s639] sm:$0xff]
        %v641 = vld [vmem:[%s639 + $0x8] sm:$0xff]
        %v642 = vld [vmem:[#allocation2] sm:$0xff]
        %v643 = vld [vmem:[#allocation2 + $0x8] sm:$0xff]
        %v644 = vld [vmem:[#allocation2 + $0x10] sm:$0xff]
        %v645 = vld [vmem:[#allocation2 + $0x18] sm:$0xff]
        %v646 = vld [vmem:[#allocation2 + $0x20] sm:$0xff]
        %v647 = vld [vmem:[#allocation2 + $0x28] sm:$0xff]
        %v648 = vld [vmem:[#allocation2 + $0x30] sm:$0xff]
        %v649 = vld [vmem:[#allocation2 + $0x38] sm:$0xff]
        %v650 = vld [vmem:[#allocation2 + $0x40] sm:$0xff]
        %v651 = vld [vmem:[#allocation2 + $0x48] sm:$0xff]
        %v652 = vld [vmem:[#allocation2 + $0x50] sm:$0xff]
        %v653 = vld [vmem:[#allocation2 + $0x58] sm:$0xff]
        %v654 = vld [vmem:[#allocation2 + $0x60] sm:$0xff]
        %v655 = vld [vmem:[#allocation2 + $0x68] sm:$0xff]
        %v656 = vld [vmem:[#allocation2 + $0x70] sm:$0xff]
        %v657 = vld [vmem:[#allocation2 + $0x78] sm:$0xff]
        %v658 = vld [vmem:[#allocation5] sm:$0xff]
        %v659 = vld [vmem:[#allocation5 + $0x8] sm:$0xff]
        %v660 = vld [vmem:[#allocation5 + $0x10] sm:$0xff]
        %v661 = vld [vmem:[#allocation5 + $0x18] sm:$0xff]
        %v662 = vld [vmem:[#allocation5 + $0x20] sm:$0xff]
        %v663 = vld [vmem:[#allocation5 + $0x28] sm:$0xff]
        %v664 = vld [vmem:[#allocation5 + $0x30] sm:$0xff]
        %v665 = vld [vmem:[#allocation5 + $0x38] sm:$0xff]
        %v666 = vld [vmem:[#allocation5 + $0x40] sm:$0xff]
        %v667 = vld [vmem:[#allocation5 + $0x48] sm:$0xff]
        %v668 = vld [vmem:[#allocation5 + $0x50] sm:$0xff]
        %v669 = vld [vmem:[#allocation5 + $0x58] sm:$0xff]
        %v670 = vld [vmem:[#allocation5 + $0x60] sm:$0xff]
        %v671 = vld [vmem:[#allocation5 + $0x68] sm:$0xff]
        %v672 = vld [vmem:[#allocation5 + $0x70] sm:$0xff]
        %v673 = vld [vmem:[#allocation5 + $0x78] sm:$0xff]
        %v674 = vld [vmem:[%s639 + $0x1] sm:$0xff]
        %v675 = vld [vmem:[%s639 + $0x9] sm:$0xff]
        %s676 = scalar_lea.vmem [#allocation2], 128
        %v677 = vld [vmem:[%s676] sm:$0xff]
        %v678 = vld [vmem:[%s676 + $0x8] sm:$0xff]
        %v679 = vld [vmem:[%s676 + $0x10] sm:$0xff]
        %v680 = vld [vmem:[%s676 + $0x18] sm:$0xff]
        %v681 = vld [vmem:[%s676 + $0x20] sm:$0xff]
        %v682 = vld [vmem:[%s676 + $0x28] sm:$0xff]
        %v683 = vld [vmem:[%s676 + $0x30] sm:$0xff]
        %v684 = vld [vmem:[%s676 + $0x38] sm:$0xff]
        %v685 = vld [vmem:[%s676 + $0x40] sm:$0xff]
        %v686 = vld [vmem:[%s676 + $0x48] sm:$0xff]
        %v687 = vld [vmem:[%s676 + $0x50] sm:$0xff]
        %v688 = vld [vmem:[%s676 + $0x58] sm:$0xff]
        %v689 = vld [vmem:[%s676 + $0x60] sm:$0xff]
        %v690 = vld [vmem:[%s676 + $0x68] sm:$0xff]
        %v691 = vld [vmem:[%s676 + $0x70] sm:$0xff]
        %v692 = vld [vmem:[%s676 + $0x78] sm:$0xff]
        %693 = vmatprep.subr.mxu0 0.0
        %694 = vmatpush1.msra.mxu0 %v692
        %695 = vmatprep.subr.mxu0 0.0
        %696 = vmatpush1.msra.mxu0 %v691
        %697 = vmatprep.subr.mxu0 0.0
        %698 = vmatpush1.msra.mxu0 %v690
        %699 = vmatprep.subr.mxu0 0.0
        %700 = vmatpush1.msra.mxu0 %v689
        %701 = vmatprep.subr.mxu0 0.0
        %702 = vmatpush1.msra.mxu0 %v688
        %703 = vmatprep.subr.mxu0 0.0
        %704 = vmatpush1.msra.mxu0 %v687
        %705 = vmatprep.subr.mxu0 0.0
        %706 = vmatpush1.msra.mxu0 %v686
        %707 = vmatprep.subr.mxu0 0.0
        %708 = vmatpush1.msra.mxu0 %v685
        %709 = vmatprep.subr.mxu0 0.0
        %710 = vmatpush1.msra.mxu0 %v684
        %711 = vmatprep.subr.mxu0 0.0
        %712 = vmatpush1.msra.mxu0 %v683
        %713 = vmatprep.subr.mxu0 0.0
        %714 = vmatpush1.msra.mxu0 %v682
        %715 = vmatprep.subr.mxu0 0.0
        %716 = vmatpush1.msra.mxu0 %v681
        %717 = vmatprep.subr.mxu0 0.0
        %718 = vmatpush1.msra.mxu0 %v680
        %719 = vmatprep.subr.mxu0 0.0
        %720 = vmatpush1.msra.mxu0 %v679
        %721 = vmatprep.subr.mxu0 0.0
        %722 = vmatpush1.msra.mxu0 %v678
        %723 = vmatprep.subr.mxu0 0.0
        %724 = vmatpush1.msra.mxu0 %v677
        %725 = vmatprep.subr.mxu0 0.0
        %726 = vmatpush2.msra.mxu0 0.0
        %727 = vmatprep.subr.mxu0 0.0
        %728 = vmatpush2.msra.mxu0 0.0
        %729 = vmatprep.subr.mxu0 0.0
        %730 = vmatpush2.msra.mxu0 0.0
        %731 = vmatprep.subr.mxu0 0.0
        %732 = vmatpush2.msra.mxu0 0.0
        %733 = vmatprep.subr.mxu0 0.0
        %734 = vmatpush2.msra.mxu0 0.0
        %735 = vmatprep.subr.mxu0 0.0
        %736 = vmatpush2.msra.mxu0 0.0
        %737 = vmatprep.subr.mxu0 0.0
        %738 = vmatpush2.msra.mxu0 0.0
        %739 = vmatprep.subr.mxu0 0.0
        %740 = vmatpush2.msra.mxu0 0.0
        %741 = vmatprep.subr.mxu0 0.0
        %742 = vmatpush2.msra.mxu0 0.0
        %743 = vmatprep.subr.mxu0 0.0
        %744 = vmatpush2.msra.mxu0 0.0
        %745 = vmatprep.subr.mxu0 0.0
        %746 = vmatpush2.msra.mxu0 0.0
        %747 = vmatprep.subr.mxu0 0.0
        %748 = vmatpush2.msra.mxu0 0.0
        %749 = vmatprep.subr.mxu0 0.0
        %750 = vmatpush2.msra.mxu0 0.0
        %751 = vmatprep.subr.mxu0 0.0
        %752 = vmatpush2.msra.mxu0 0.0
        %753 = vmatprep.subr.mxu0 0.0
        %754 = vmatpush2.msra.mxu0 0.0
        %755 = vmatprep.subr.mxu0 0.0
        %756 = vmatpush2.msra.mxu0 0.0
        %757 = vmatprep.mubr.f32.mxu0 0.0
        %758 = vmatmul.mubr.f32.gmra.mxu0 %v674
        %v759 = vpop.f32.mrf.mxu0
        %v760 = vadd.f32 0.0, %v759
        %v761 = vpop.f32.mrf.mxu0
        %762 = vmatprep.mubr.f32.mxu0 0.0
        %763 = vmatmul.mubr.f32.gmra.mxu0 %v675
        %v764 = vpop.f32.mrf.mxu0
        %v765 = vadd.f32 0.0, %v764
        %v766 = vpop.f32.mrf.mxu0
        %767 = vdwg.mxu0
        %768 = vmatprep.subr.mxu0 0.0
        %769 = vmatpush1.msra.mxu0 %v657
        %770 = vmatprep.subr.mxu0 0.0
        %771 = vmatpush1.msra.mxu0 %v656
        %772 = vmatprep.subr.mxu0 0.0
        %773 = vmatpush1.msra.mxu0 %v655
        %774 = vmatprep.subr.mxu0 0.0
        %775 = vmatpush1.msra.mxu0 %v654
        %776 = vmatprep.subr.mxu0 0.0
        %777 = vmatpush1.msra.mxu0 %v653
        %778 = vmatprep.subr.mxu0 0.0
        %779 = vmatpush1.msra.mxu0 %v652
        %780 = vmatprep.subr.mxu0 0.0
        %781 = vmatpush1.msra.mxu0 %v651
        %782 = vmatprep.subr.mxu0 0.0
        %783 = vmatpush1.msra.mxu0 %v650
        %784 = vmatprep.subr.mxu0 0.0
        %785 = vmatpush1.msra.mxu0 %v649
        %786 = vmatprep.subr.mxu0 0.0
        %787 = vmatpush1.msra.mxu0 %v648
        %788 = vmatprep.subr.mxu0 0.0
        %789 = vmatpush1.msra.mxu0 %v647
        %790 = vmatprep.subr.mxu0 0.0
        %791 = vmatpush1.msra.mxu0 %v646
        %792 = vmatprep.subr.mxu0 0.0
        %793 = vmatpush1.msra.mxu0 %v645
        %794 = vmatprep.subr.mxu0 0.0
        %795 = vmatpush1.msra.mxu0 %v644
        %796 = vmatprep.subr.mxu0 0.0
        %797 = vmatpush1.msra.mxu0 %v643
        %798 = vmatprep.subr.mxu0 0.0
        %799 = vmatpush1.msra.mxu0 %v642
        %800 = vmatprep.subr.mxu0 0.0
        %801 = vmatpush2.msra.mxu0 0.0
        %802 = vmatprep.subr.mxu0 0.0
        %803 = vmatpush2.msra.mxu0 0.0
        %804 = vmatprep.subr.mxu0 0.0
        %805 = vmatpush2.msra.mxu0 0.0
        %806 = vmatprep.subr.mxu0 0.0
        %807 = vmatpush2.msra.mxu0 0.0
        %808 = vmatprep.subr.mxu0 0.0
        %809 = vmatpush2.msra.mxu0 0.0
        %810 = vmatprep.subr.mxu0 0.0
        %811 = vmatpush2.msra.mxu0 0.0
        %812 = vmatprep.subr.mxu0 0.0
        %813 = vmatpush2.msra.mxu0 0.0
        %814 = vmatprep.subr.mxu0 0.0
        %815 = vmatpush2.msra.mxu0 0.0
        %816 = vmatprep.subr.mxu0 0.0
        %817 = vmatpush2.msra.mxu0 0.0
        %818 = vmatprep.subr.mxu0 0.0
        %819 = vmatpush2.msra.mxu0 0.0
        %820 = vmatprep.subr.mxu0 0.0
        %821 = vmatpush2.msra.mxu0 0.0
        %822 = vmatprep.subr.mxu0 0.0
        %823 = vmatpush2.msra.mxu0 0.0
        %824 = vmatprep.subr.mxu0 0.0
        %825 = vmatpush2.msra.mxu0 0.0
        %826 = vmatprep.subr.mxu0 0.0
        %827 = vmatpush2.msra.mxu0 0.0
        %828 = vmatprep.subr.mxu0 0.0
        %829 = vmatpush2.msra.mxu0 0.0
        %830 = vmatprep.subr.mxu0 0.0
        %831 = vmatpush2.msra.mxu0 0.0
        %832 = vmatprep.mubr.f32.mxu0 0.0
        %833 = vmatmul.mubr.f32.gmra.mxu0 %v640
        %v834 = vpop.f32.mrf.mxu0
        %v835 = vadd.f32 %v760, %v834
        %v836 = vpop.f32.mrf.mxu0
        %837 = vmatprep.mubr.f32.mxu0 0.0
        %838 = vmatmul.mubr.f32.gmra.mxu0 %v641
        %v839 = vpop.f32.mrf.mxu0
        %v840 = vadd.f32 %v765, %v839
        %v841 = vpop.f32.mrf.mxu0
        %842 = vdwg.mxu0
        %s843 = scalar_lea.vmem [#allocation5], 128
        %v844 = vld [vmem:[%s843] sm:$0xff]
        %v845 = vld [vmem:[%s843 + $0x8] sm:$0xff]
        %v846 = vld [vmem:[%s843 + $0x10] sm:$0xff]
        %v847 = vld [vmem:[%s843 + $0x18] sm:$0xff]
        %v848 = vld [vmem:[%s843 + $0x20] sm:$0xff]
        %v849 = vld [vmem:[%s843 + $0x28] sm:$0xff]
        %v850 = vld [vmem:[%s843 + $0x30] sm:$0xff]
        %v851 = vld [vmem:[%s843 + $0x38] sm:$0xff]
        %v852 = vld [vmem:[%s843 + $0x40] sm:$0xff]
        %v853 = vld [vmem:[%s843 + $0x48] sm:$0xff]
        %v854 = vld [vmem:[%s843 + $0x50] sm:$0xff]
        %v855 = vld [vmem:[%s843 + $0x58] sm:$0xff]
        %v856 = vld [vmem:[%s843 + $0x60] sm:$0xff]
        %v857 = vld [vmem:[%s843 + $0x68] sm:$0xff]
        %v858 = vld [vmem:[%s843 + $0x70] sm:$0xff]
        %v859 = vld [vmem:[%s843 + $0x78] sm:$0xff]
        %860 = vmatprep.subr.mxu0 0.0
        %861 = vmatpush1.msra.mxu0 %v859
        %862 = vmatprep.subr.mxu0 0.0
        %863 = vmatpush1.msra.mxu0 %v858
        %864 = vmatprep.subr.mxu0 0.0
        %865 = vmatpush1.msra.mxu0 %v857
        %866 = vmatprep.subr.mxu0 0.0
        %867 = vmatpush1.msra.mxu0 %v856
        %868 = vmatprep.subr.mxu0 0.0
        %869 = vmatpush1.msra.mxu0 %v855
        %870 = vmatprep.subr.mxu0 0.0
        %871 = vmatpush1.msra.mxu0 %v854
        %872 = vmatprep.subr.mxu0 0.0
        %873 = vmatpush1.msra.mxu0 %v853
        %874 = vmatprep.subr.mxu0 0.0
        %875 = vmatpush1.msra.mxu0 %v852
        %876 = vmatprep.subr.mxu0 0.0
        %877 = vmatpush1.msra.mxu0 %v851
        %878 = vmatprep.subr.mxu0 0.0
        %879 = vmatpush1.msra.mxu0 %v850
        %880 = vmatprep.subr.mxu0 0.0
        %881 = vmatpush1.msra.mxu0 %v849
        %882 = vmatprep.subr.mxu0 0.0
        %883 = vmatpush1.msra.mxu0 %v848
        %884 = vmatprep.subr.mxu0 0.0
        %885 = vmatpush1.msra.mxu0 %v847
        %886 = vmatprep.subr.mxu0 0.0
        %887 = vmatpush1.msra.mxu0 %v846
        %888 = vmatprep.subr.mxu0 0.0
        %889 = vmatpush1.msra.mxu0 %v845
        %890 = vmatprep.subr.mxu0 0.0
        %891 = vmatpush1.msra.mxu0 %v844
        %892 = vmatprep.subr.mxu0 0.0
        %893 = vmatpush2.msra.mxu0 0.0
        %894 = vmatprep.subr.mxu0 0.0
        %895 = vmatpush2.msra.mxu0 0.0
        %896 = vmatprep.subr.mxu0 0.0
        %897 = vmatpush2.msra.mxu0 0.0
        %898 = vmatprep.subr.mxu0 0.0
        %899 = vmatpush2.msra.mxu0 0.0
        %900 = vmatprep.subr.mxu0 0.0
        %901 = vmatpush2.msra.mxu0 0.0
        %902 = vmatprep.subr.mxu0 0.0
        %903 = vmatpush2.msra.mxu0 0.0
        %904 = vmatprep.subr.mxu0 0.0
        %905 = vmatpush2.msra.mxu0 0.0
        %906 = vmatprep.subr.mxu0 0.0
        %907 = vmatpush2.msra.mxu0 0.0
        %908 = vmatprep.subr.mxu0 0.0
        %909 = vmatpush2.msra.mxu0 0.0
        %910 = vmatprep.subr.mxu0 0.0
        %911 = vmatpush2.msra.mxu0 0.0
        %912 = vmatprep.subr.mxu0 0.0
        %913 = vmatpush2.msra.mxu0 0.0
        %914 = vmatprep.subr.mxu0 0.0
        %915 = vmatpush2.msra.mxu0 0.0
        %916 = vmatprep.subr.mxu0 0.0
        %917 = vmatpush2.msra.mxu0 0.0
        %918 = vmatprep.subr.mxu0 0.0
        %919 = vmatpush2.msra.mxu0 0.0
        %920 = vmatprep.subr.mxu0 0.0
        %921 = vmatpush2.msra.mxu0 0.0
        %922 = vmatprep.subr.mxu0 0.0
        %923 = vmatpush2.msra.mxu0 0.0
        %924 = vmatprep.mubr.f32.mxu0 0.0
        %925 = vmatmul.mubr.f32.gmra.mxu0 %v674
        %v926 = vpop.f32.mrf.mxu0
        %v927 = vadd.f32 0.0, %v926
        %v928 = vpop.f32.mrf.mxu0
        %929 = vmatprep.mubr.f32.mxu0 0.0
        %930 = vmatmul.mubr.f32.gmra.mxu0 %v675
        %v931 = vpop.f32.mrf.mxu0
        %v932 = vadd.f32 0.0, %v931
        %v933 = vpop.f32.mrf.mxu0
        %934 = vdwg.mxu0
        %935 = vmatprep.subr.mxu0 0.0
        %936 = vmatpush1.msra.mxu0 %v673
        %937 = vmatprep.subr.mxu0 0.0
        %938 = vmatpush1.msra.mxu0 %v672
        %939 = vmatprep.subr.mxu0 0.0
        %940 = vmatpush1.msra.mxu0 %v671
        %941 = vmatprep.subr.mxu0 0.0
        %942 = vmatpush1.msra.mxu0 %v670
        %943 = vmatprep.subr.mxu0 0.0
        %944 = vmatpush1.msra.mxu0 %v669
        %945 = vmatprep.subr.mxu0 0.0
        %946 = vmatpush1.msra.mxu0 %v668
        %947 = vmatprep.subr.mxu0 0.0
        %948 = vmatpush1.msra.mxu0 %v667
        %949 = vmatprep.subr.mxu0 0.0
        %950 = vmatpush1.msra.mxu0 %v666
        %951 = vmatprep.subr.mxu0 0.0
        %952 = vmatpush1.msra.mxu0 %v665
        %953 = vmatprep.subr.mxu0 0.0
        %954 = vmatpush1.msra.mxu0 %v664
        %955 = vmatprep.subr.mxu0 0.0
        %956 = vmatpush1.msra.mxu0 %v663
        %957 = vmatprep.subr.mxu0 0.0
        %958 = vmatpush1.msra.mxu0 %v662
        %959 = vmatprep.subr.mxu0 0.0
        %960 = vmatpush1.msra.mxu0 %v661
        %961 = vmatprep.subr.mxu0 0.0
        %962 = vmatpush1.msra.mxu0 %v660
        %963 = vmatprep.subr.mxu0 0.0
        %964 = vmatpush1.msra.mxu0 %v659
        %965 = vmatprep.subr.mxu0 0.0
        %966 = vmatpush1.msra.mxu0 %v658
        %967 = vmatprep.subr.mxu0 0.0
        %968 = vmatpush2.msra.mxu0 0.0
        %969 = vmatprep.subr.mxu0 0.0
        %970 = vmatpush2.msra.mxu0 0.0
        %971 = vmatprep.subr.mxu0 0.0
        %972 = vmatpush2.msra.mxu0 0.0
        %973 = vmatprep.subr.mxu0 0.0
        %974 = vmatpush2.msra.mxu0 0.0
        %975 = vmatprep.subr.mxu0 0.0
        %976 = vmatpush2.msra.mxu0 0.0
        %977 = vmatprep.subr.mxu0 0.0
        %978 = vmatpush2.msra.mxu0 0.0
        %979 = vmatprep.subr.mxu0 0.0
        %980 = vmatpush2.msra.mxu0 0.0
        %981 = vmatprep.subr.mxu0 0.0
        %982 = vmatpush2.msra.mxu0 0.0
        %983 = vmatprep.subr.mxu0 0.0
        %984 = vmatpush2.msra.mxu0 0.0
        %985 = vmatprep.subr.mxu0 0.0
        %986 = vmatpush2.msra.mxu0 0.0
        %987 = vmatprep.subr.mxu0 0.0
        %988 = vmatpush2.msra.mxu0 0.0
        %989 = vmatprep.subr.mxu0 0.0
        %990 = vmatpush2.msra.mxu0 0.0
        %991 = vmatprep.subr.mxu0 0.0
        %992 = vmatpush2.msra.mxu0 0.0
        %993 = vmatprep.subr.mxu0 0.0
        %994 = vmatpush2.msra.mxu0 0.0
        %995 = vmatprep.subr.mxu0 0.0
        %996 = vmatpush2.msra.mxu0 0.0
        %997 = vmatprep.subr.mxu0 0.0
        %998 = vmatpush2.msra.mxu0 0.0
        %999 = vmatprep.mubr.f32.mxu0 0.0
        %1000 = vmatmul.mubr.f32.gmra.mxu0 %v640
        %v1001 = vpop.f32.mrf.mxu0
        %v1002 = vadd.f32 %v927, %v1001
        %v1003 = vpop.f32.mrf.mxu0
        %1004 = vmatprep.mubr.f32.mxu0 0.0
        %1005 = vmatmul.mubr.f32.gmra.mxu0 %v641
        %v1006 = vpop.f32.mrf.mxu0
        %v1007 = vadd.f32 %v932, %v1006
        %v1008 = vpop.f32.mrf.mxu0
        %1009 = vdwg.mxu0
        %v1010 = vld [vmem:[%s639 + $0x2] sm:$0xff]
        %v1011 = vld [vmem:[%s639 + $0xa] sm:$0xff]
        %s1012 = scalar_lea.vmem [#allocation2], 256
        %v1013 = vld [vmem:[%s1012] sm:$0xff]
        %v1014 = vld [vmem:[%s1012 + $0x8] sm:$0xff]
        %v1015 = vld [vmem:[%s1012 + $0x10] sm:$0xff]
        %v1016 = vld [vmem:[%s1012 + $0x18] sm:$0xff]
        %v1017 = vld [vmem:[%s1012 + $0x20] sm:$0xff]
        %v1018 = vld [vmem:[%s1012 + $0x28] sm:$0xff]
        %v1019 = vld [vmem:[%s1012 + $0x30] sm:$0xff]
        %v1020 = vld [vmem:[%s1012 + $0x38] sm:$0xff]
        %v1021 = vld [vmem:[%s1012 + $0x40] sm:$0xff]
        %v1022 = vld [vmem:[%s1012 + $0x48] sm:$0xff]
        %v1023 = vld [vmem:[%s1012 + $0x50] sm:$0xff]
        %v1024 = vld [vmem:[%s1012 + $0x58] sm:$0xff]
        %v1025 = vld [vmem:[%s1012 + $0x60] sm:$0xff]
        %v1026 = vld [vmem:[%s1012 + $0x68] sm:$0xff]
        %v1027 = vld [vmem:[%s1012 + $0x70] sm:$0xff]
        %v1028 = vld [vmem:[%s1012 + $0x78] sm:$0xff]
        %1029 = vmatprep.subr.mxu0 0.0
        %1030 = vmatpush1.msra.mxu0 %v1028
        %1031 = vmatprep.subr.mxu0 0.0
        %1032 = vmatpush1.msra.mxu0 %v1027
        %1033 = vmatprep.subr.mxu0 0.0
        %1034 = vmatpush1.msra.mxu0 %v1026
        %1035 = vmatprep.subr.mxu0 0.0
        %1036 = vmatpush1.msra.mxu0 %v1025
        %1037 = vmatprep.subr.mxu0 0.0
        %1038 = vmatpush1.msra.mxu0 %v1024
        %1039 = vmatprep.subr.mxu0 0.0
        %1040 = vmatpush1.msra.mxu0 %v1023
        %1041 = vmatprep.subr.mxu0 0.0
        %1042 = vmatpush1.msra.mxu0 %v1022
        %1043 = vmatprep.subr.mxu0 0.0
        %1044 = vmatpush1.msra.mxu0 %v1021
        %1045 = vmatprep.subr.mxu0 0.0
        %1046 = vmatpush1.msra.mxu0 %v1020
        %1047 = vmatprep.subr.mxu0 0.0
        %1048 = vmatpush1.msra.mxu0 %v1019
        %1049 = vmatprep.subr.mxu0 0.0
        %1050 = vmatpush1.msra.mxu0 %v1018
        %1051 = vmatprep.subr.mxu0 0.0
        %1052 = vmatpush1.msra.mxu0 %v1017
        %1053 = vmatprep.subr.mxu0 0.0
        %1054 = vmatpush1.msra.mxu0 %v1016
        %1055 = vmatprep.subr.mxu0 0.0
        %1056 = vmatpush1.msra.mxu0 %v1015
        %1057 = vmatprep.subr.mxu0 0.0
        %1058 = vmatpush1.msra.mxu0 %v1014
        %1059 = vmatprep.subr.mxu0 0.0
        %1060 = vmatpush1.msra.mxu0 %v1013
        %1061 = vmatprep.subr.mxu0 0.0
        %1062 = vmatpush2.msra.mxu0 0.0
        %1063 = vmatprep.subr.mxu0 0.0
        %1064 = vmatpush2.msra.mxu0 0.0
        %1065 = vmatprep.subr.mxu0 0.0
        %1066 = vmatpush2.msra.mxu0 0.0
        %1067 = vmatprep.subr.mxu0 0.0
        %1068 = vmatpush2.msra.mxu0 0.0
        %1069 = vmatprep.subr.mxu0 0.0
        %1070 = vmatpush2.msra.mxu0 0.0
        %1071 = vmatprep.subr.mxu0 0.0
        %1072 = vmatpush2.msra.mxu0 0.0
        %1073 = vmatprep.subr.mxu0 0.0
        %1074 = vmatpush2.msra.mxu0 0.0
        %1075 = vmatprep.subr.mxu0 0.0
        %1076 = vmatpush2.msra.mxu0 0.0
        %1077 = vmatprep.subr.mxu0 0.0
        %1078 = vmatpush2.msra.mxu0 0.0
        %1079 = vmatprep.subr.mxu0 0.0
        %1080 = vmatpush2.msra.mxu0 0.0
        %1081 = vmatprep.subr.mxu0 0.0
        %1082 = vmatpush2.msra.mxu0 0.0
        %1083 = vmatprep.subr.mxu0 0.0
        %1084 = vmatpush2.msra.mxu0 0.0
        %1085 = vmatprep.subr.mxu0 0.0
        %1086 = vmatpush2.msra.mxu0 0.0
        %1087 = vmatprep.subr.mxu0 0.0
        %1088 = vmatpush2.msra.mxu0 0.0
        %1089 = vmatprep.subr.mxu0 0.0
        %1090 = vmatpush2.msra.mxu0 0.0
        %1091 = vmatprep.subr.mxu0 0.0
        %1092 = vmatpush2.msra.mxu0 0.0
        %1093 = vmatprep.mubr.f32.mxu0 0.0
        %1094 = vmatmul.mubr.f32.gmra.mxu0 %v1010
        %v1095 = vpop.f32.mrf.mxu0
        %v1096 = vadd.f32 0.0, %v1095
        %v1097 = vpop.f32.mrf.mxu0
        %1098 = vmatprep.mubr.f32.mxu0 0.0
        %1099 = vmatmul.mubr.f32.gmra.mxu0 %v1011
        %v1100 = vpop.f32.mrf.mxu0
        %v1101 = vadd.f32 0.0, %v1100
        %v1102 = vpop.f32.mrf.mxu0
        %1103 = vdwg.mxu0
        %v1104 = vadd.f32 %v835, %v1096
        %v1105 = vadd.f32 %v840, %v1101
        %s1106 = scalar_lea.vmem [#allocation5], 256
        %v1107 = vld [vmem:[%s1106] sm:$0xff]
        %v1108 = vld [vmem:[%s1106 + $0x8] sm:$0xff]
        %v1109 = vld [vmem:[%s1106 + $0x10] sm:$0xff]
        %v1110 = vld [vmem:[%s1106 + $0x18] sm:$0xff]
        %v1111 = vld [vmem:[%s1106 + $0x20] sm:$0xff]
        %v1112 = vld [vmem:[%s1106 + $0x28] sm:$0xff]
        %v1113 = vld [vmem:[%s1106 + $0x30] sm:$0xff]
        %v1114 = vld [vmem:[%s1106 + $0x38] sm:$0xff]
        %v1115 = vld [vmem:[%s1106 + $0x40] sm:$0xff]
        %v1116 = vld [vmem:[%s1106 + $0x48] sm:$0xff]
        %v1117 = vld [vmem:[%s1106 + $0x50] sm:$0xff]
        %v1118 = vld [vmem:[%s1106 + $0x58] sm:$0xff]
        %v1119 = vld [vmem:[%s1106 + $0x60] sm:$0xff]
        %v1120 = vld [vmem:[%s1106 + $0x68] sm:$0xff]
        %v1121 = vld [vmem:[%s1106 + $0x70] sm:$0xff]
        %v1122 = vld [vmem:[%s1106 + $0x78] sm:$0xff]
        %1123 = vmatprep.subr.mxu0 0.0
        %1124 = vmatpush1.msra.mxu0 %v1122
        %1125 = vmatprep.subr.mxu0 0.0
        %1126 = vmatpush1.msra.mxu0 %v1121
        %1127 = vmatprep.subr.mxu0 0.0
        %1128 = vmatpush1.msra.mxu0 %v1120
        %1129 = vmatprep.subr.mxu0 0.0
        %1130 = vmatpush1.msra.mxu0 %v1119
        %1131 = vmatprep.subr.mxu0 0.0
        %1132 = vmatpush1.msra.mxu0 %v1118
        %1133 = vmatprep.subr.mxu0 0.0
        %1134 = vmatpush1.msra.mxu0 %v1117
        %1135 = vmatprep.subr.mxu0 0.0
        %1136 = vmatpush1.msra.mxu0 %v1116
        %1137 = vmatprep.subr.mxu0 0.0
        %1138 = vmatpush1.msra.mxu0 %v1115
        %1139 = vmatprep.subr.mxu0 0.0
        %1140 = vmatpush1.msra.mxu0 %v1114
        %1141 = vmatprep.subr.mxu0 0.0
        %1142 = vmatpush1.msra.mxu0 %v1113
        %1143 = vmatprep.subr.mxu0 0.0
        %1144 = vmatpush1.msra.mxu0 %v1112
        %1145 = vmatprep.subr.mxu0 0.0
        %1146 = vmatpush1.msra.mxu0 %v1111
        %1147 = vmatprep.subr.mxu0 0.0
        %1148 = vmatpush1.msra.mxu0 %v1110
        %1149 = vmatprep.subr.mxu0 0.0
        %1150 = vmatpush1.msra.mxu0 %v1109
        %1151 = vmatprep.subr.mxu0 0.0
        %1152 = vmatpush1.msra.mxu0 %v1108
        %1153 = vmatprep.subr.mxu0 0.0
        %1154 = vmatpush1.msra.mxu0 %v1107
        %1155 = vmatprep.subr.mxu0 0.0
        %1156 = vmatpush2.msra.mxu0 0.0
        %1157 = vmatprep.subr.mxu0 0.0
        %1158 = vmatpush2.msra.mxu0 0.0
        %1159 = vmatprep.subr.mxu0 0.0
        %1160 = vmatpush2.msra.mxu0 0.0
        %1161 = vmatprep.subr.mxu0 0.0
        %1162 = vmatpush2.msra.mxu0 0.0
        %1163 = vmatprep.subr.mxu0 0.0
        %1164 = vmatpush2.msra.mxu0 0.0
        %1165 = vmatprep.subr.mxu0 0.0
        %1166 = vmatpush2.msra.mxu0 0.0
        %1167 = vmatprep.subr.mxu0 0.0
        %1168 = vmatpush2.msra.mxu0 0.0
        %1169 = vmatprep.subr.mxu0 0.0
        %1170 = vmatpush2.msra.mxu0 0.0
        %1171 = vmatprep.subr.mxu0 0.0
        %1172 = vmatpush2.msra.mxu0 0.0
        %1173 = vmatprep.subr.mxu0 0.0
        %1174 = vmatpush2.msra.mxu0 0.0
        %1175 = vmatprep.subr.mxu0 0.0
        %1176 = vmatpush2.msra.mxu0 0.0
        %1177 = vmatprep.subr.mxu0 0.0
        %1178 = vmatpush2.msra.mxu0 0.0
        %1179 = vmatprep.subr.mxu0 0.0
        %1180 = vmatpush2.msra.mxu0 0.0
        %1181 = vmatprep.subr.mxu0 0.0
        %1182 = vmatpush2.msra.mxu0 0.0
        %1183 = vmatprep.subr.mxu0 0.0
        %1184 = vmatpush2.msra.mxu0 0.0
        %1185 = vmatprep.subr.mxu0 0.0
        %1186 = vmatpush2.msra.mxu0 0.0
        %1187 = vmatprep.mubr.f32.mxu0 0.0
        %1188 = vmatmul.mubr.f32.gmra.mxu0 %v1010
        %v1189 = vpop.f32.mrf.mxu0
        %v1190 = vadd.f32 0.0, %v1189
        %v1191 = vpop.f32.mrf.mxu0
        %1192 = vmatprep.mubr.f32.mxu0 0.0
        %1193 = vmatmul.mubr.f32.gmra.mxu0 %v1011
        %v1194 = vpop.f32.mrf.mxu0
        %v1195 = vadd.f32 0.0, %v1194
        %v1196 = vpop.f32.mrf.mxu0
        %1197 = vdwg.mxu0
        %v1198 = vadd.f32 %v1002, %v1190
        %v1199 = vadd.f32 %v1007, %v1195
        %v1200 = vld [vmem:[%s639 + $0x3] sm:$0xff]
        %v1201 = vld [vmem:[%s639 + $0xb] sm:$0xff]
        %s1202 = scalar_lea.vmem [#allocation2], 384
        %v1203 = vld [vmem:[%s1202] sm:$0xff]
        %v1204 = vld [vmem:[%s1202 + $0x8] sm:$0xff]
        %v1205 = vld [vmem:[%s1202 + $0x10] sm:$0xff]
        %v1206 = vld [vmem:[%s1202 + $0x18] sm:$0xff]
        %v1207 = vld [vmem:[%s1202 + $0x20] sm:$0xff]
        %v1208 = vld [vmem:[%s1202 + $0x28] sm:$0xff]
        %v1209 = vld [vmem:[%s1202 + $0x30] sm:$0xff]
        %v1210 = vld [vmem:[%s1202 + $0x38] sm:$0xff]
        %v1211 = vld [vmem:[%s1202 + $0x40] sm:$0xff]
        %v1212 = vld [vmem:[%s1202 + $0x48] sm:$0xff]
        %v1213 = vld [vmem:[%s1202 + $0x50] sm:$0xff]
        %v1214 = vld [vmem:[%s1202 + $0x58] sm:$0xff]
        %v1215 = vld [vmem:[%s1202 + $0x60] sm:$0xff]
        %v1216 = vld [vmem:[%s1202 + $0x68] sm:$0xff]
        %v1217 = vld [vmem:[%s1202 + $0x70] sm:$0xff]
        %v1218 = vld [vmem:[%s1202 + $0x78] sm:$0xff]
        %1219 = vmatprep.subr.mxu0 0.0
        %1220 = vmatpush1.msra.mxu0 %v1218
        %1221 = vmatprep.subr.mxu0 0.0
        %1222 = vmatpush1.msra.mxu0 %v1217
        %1223 = vmatprep.subr.mxu0 0.0
        %1224 = vmatpush1.msra.mxu0 %v1216
        %1225 = vmatprep.subr.mxu0 0.0
        %1226 = vmatpush1.msra.mxu0 %v1215
        %1227 = vmatprep.subr.mxu0 0.0
        %1228 = vmatpush1.msra.mxu0 %v1214
        %1229 = vmatprep.subr.mxu0 0.0
        %1230 = vmatpush1.msra.mxu0 %v1213
        %1231 = vmatprep.subr.mxu0 0.0
        %1232 = vmatpush1.msra.mxu0 %v1212
        %1233 = vmatprep.subr.mxu0 0.0
        %1234 = vmatpush1.msra.mxu0 %v1211
        %1235 = vmatprep.subr.mxu0 0.0
        %1236 = vmatpush1.msra.mxu0 %v1210
        %1237 = vmatprep.subr.mxu0 0.0
        %1238 = vmatpush1.msra.mxu0 %v1209
        %1239 = vmatprep.subr.mxu0 0.0
        %1240 = vmatpush1.msra.mxu0 %v1208
        %1241 = vmatprep.subr.mxu0 0.0
        %1242 = vmatpush1.msra.mxu0 %v1207
        %1243 = vmatprep.subr.mxu0 0.0
        %1244 = vmatpush1.msra.mxu0 %v1206
        %1245 = vmatprep.subr.mxu0 0.0
        %1246 = vmatpush1.msra.mxu0 %v1205
        %1247 = vmatprep.subr.mxu0 0.0
        %1248 = vmatpush1.msra.mxu0 %v1204
        %1249 = vmatprep.subr.mxu0 0.0
        %1250 = vmatpush1.msra.mxu0 %v1203
        %1251 = vmatprep.subr.mxu0 0.0
        %1252 = vmatpush2.msra.mxu0 0.0
        %1253 = vmatprep.subr.mxu0 0.0
        %1254 = vmatpush2.msra.mxu0 0.0
        %1255 = vmatprep.subr.mxu0 0.0
        %1256 = vmatpush2.msra.mxu0 0.0
        %1257 = vmatprep.subr.mxu0 0.0
        %1258 = vmatpush2.msra.mxu0 0.0
        %1259 = vmatprep.subr.mxu0 0.0
        %1260 = vmatpush2.msra.mxu0 0.0
        %1261 = vmatprep.subr.mxu0 0.0
        %1262 = vmatpush2.msra.mxu0 0.0
        %1263 = vmatprep.subr.mxu0 0.0
        %1264 = vmatpush2.msra.mxu0 0.0
        %1265 = vmatprep.subr.mxu0 0.0
        %1266 = vmatpush2.msra.mxu0 0.0
        %1267 = vmatprep.subr.mxu0 0.0
        %1268 = vmatpush2.msra.mxu0 0.0
        %1269 = vmatprep.subr.mxu0 0.0
        %1270 = vmatpush2.msra.mxu0 0.0
        %1271 = vmatprep.subr.mxu0 0.0
        %1272 = vmatpush2.msra.mxu0 0.0
        %1273 = vmatprep.subr.mxu0 0.0
        %1274 = vmatpush2.msra.mxu0 0.0
        %1275 = vmatprep.subr.mxu0 0.0
        %1276 = vmatpush2.msra.mxu0 0.0
        %1277 = vmatprep.subr.mxu0 0.0
        %1278 = vmatpush2.msra.mxu0 0.0
        %1279 = vmatprep.subr.mxu0 0.0
        %1280 = vmatpush2.msra.mxu0 0.0
        %1281 = vmatprep.subr.mxu0 0.0
        %1282 = vmatpush2.msra.mxu0 0.0
        %1283 = vmatprep.mubr.f32.mxu0 0.0
        %1284 = vmatmul.mubr.f32.gmra.mxu0 %v1200
        %v1285 = vpop.f32.mrf.mxu0
        %v1286 = vadd.f32 0.0, %v1285
        %v1287 = vpop.f32.mrf.mxu0
        %1288 = vmatprep.mubr.f32.mxu0 0.0
        %1289 = vmatmul.mubr.f32.gmra.mxu0 %v1201
        %v1290 = vpop.f32.mrf.mxu0
        %v1291 = vadd.f32 0.0, %v1290
        %v1292 = vpop.f32.mrf.mxu0
        %1293 = vdwg.mxu0
        %v1294 = vadd.f32 %v1104, %v1286
        %v1295 = vadd.f32 %v1105, %v1291
        %s1296 = scalar_lea.vmem [#allocation5], 384
        %v1297 = vld [vmem:[%s1296] sm:$0xff]
        %v1298 = vld [vmem:[%s1296 + $0x8] sm:$0xff]
        %v1299 = vld [vmem:[%s1296 + $0x10] sm:$0xff]
        %v1300 = vld [vmem:[%s1296 + $0x18] sm:$0xff]
        %v1301 = vld [vmem:[%s1296 + $0x20] sm:$0xff]
        %v1302 = vld [vmem:[%s1296 + $0x28] sm:$0xff]
        %v1303 = vld [vmem:[%s1296 + $0x30] sm:$0xff]
        %v1304 = vld [vmem:[%s1296 + $0x38] sm:$0xff]
        %v1305 = vld [vmem:[%s1296 + $0x40] sm:$0xff]
        %v1306 = vld [vmem:[%s1296 + $0x48] sm:$0xff]
        %v1307 = vld [vmem:[%s1296 + $0x50] sm:$0xff]
        %v1308 = vld [vmem:[%s1296 + $0x58] sm:$0xff]
        %v1309 = vld [vmem:[%s1296 + $0x60] sm:$0xff]
        %v1310 = vld [vmem:[%s1296 + $0x68] sm:$0xff]
        %v1311 = vld [vmem:[%s1296 + $0x70] sm:$0xff]
        %v1312 = vld [vmem:[%s1296 + $0x78] sm:$0xff]
        %1313 = vmatprep.subr.mxu0 0.0
        %1314 = vmatpush1.msra.mxu0 %v1312
        %1315 = vmatprep.subr.mxu0 0.0
        %1316 = vmatpush1.msra.mxu0 %v1311
        %1317 = vmatprep.subr.mxu0 0.0
        %1318 = vmatpush1.msra.mxu0 %v1310
        %1319 = vmatprep.subr.mxu0 0.0
        %1320 = vmatpush1.msra.mxu0 %v1309
        %1321 = vmatprep.subr.mxu0 0.0
        %1322 = vmatpush1.msra.mxu0 %v1308
        %1323 = vmatprep.subr.mxu0 0.0
        %1324 = vmatpush1.msra.mxu0 %v1307
        %1325 = vmatprep.subr.mxu0 0.0
        %1326 = vmatpush1.msra.mxu0 %v1306
        %1327 = vmatprep.subr.mxu0 0.0
        %1328 = vmatpush1.msra.mxu0 %v1305
        %1329 = vmatprep.subr.mxu0 0.0
        %1330 = vmatpush1.msra.mxu0 %v1304
        %1331 = vmatprep.subr.mxu0 0.0
        %1332 = vmatpush1.msra.mxu0 %v1303
        %1333 = vmatprep.subr.mxu0 0.0
        %1334 = vmatpush1.msra.mxu0 %v1302
        %1335 = vmatprep.subr.mxu0 0.0
        %1336 = vmatpush1.msra.mxu0 %v1301
        %1337 = vmatprep.subr.mxu0 0.0
        %1338 = vmatpush1.msra.mxu0 %v1300
        %1339 = vmatprep.subr.mxu0 0.0
        %1340 = vmatpush1.msra.mxu0 %v1299
        %1341 = vmatprep.subr.mxu0 0.0
        %1342 = vmatpush1.msra.mxu0 %v1298
        %1343 = vmatprep.subr.mxu0 0.0
        %1344 = vmatpush1.msra.mxu0 %v1297
        %1345 = vmatprep.subr.mxu0 0.0
        %1346 = vmatpush2.msra.mxu0 0.0
        %1347 = vmatprep.subr.mxu0 0.0
        %1348 = vmatpush2.msra.mxu0 0.0
        %1349 = vmatprep.subr.mxu0 0.0
        %1350 = vmatpush2.msra.mxu0 0.0
        %1351 = vmatprep.subr.mxu0 0.0
        %1352 = vmatpush2.msra.mxu0 0.0
        %1353 = vmatprep.subr.mxu0 0.0
        %1354 = vmatpush2.msra.mxu0 0.0
        %1355 = vmatprep.subr.mxu0 0.0
        %1356 = vmatpush2.msra.mxu0 0.0
        %1357 = vmatprep.subr.mxu0 0.0
        %1358 = vmatpush2.msra.mxu0 0.0
        %1359 = vmatprep.subr.mxu0 0.0
        %1360 = vmatpush2.msra.mxu0 0.0
        %1361 = vmatprep.subr.mxu0 0.0
        %1362 = vmatpush2.msra.mxu0 0.0
        %1363 = vmatprep.subr.mxu0 0.0
        %1364 = vmatpush2.msra.mxu0 0.0
        %1365 = vmatprep.subr.mxu0 0.0
        %1366 = vmatpush2.msra.mxu0 0.0
        %1367 = vmatprep.subr.mxu0 0.0
        %1368 = vmatpush2.msra.mxu0 0.0
        %1369 = vmatprep.subr.mxu0 0.0
        %1370 = vmatpush2.msra.mxu0 0.0
        %1371 = vmatprep.subr.mxu0 0.0
        %1372 = vmatpush2.msra.mxu0 0.0
        %1373 = vmatprep.subr.mxu0 0.0
        %1374 = vmatpush2.msra.mxu0 0.0
        %1375 = vmatprep.subr.mxu0 0.0
        %1376 = vmatpush2.msra.mxu0 0.0
        %1377 = vmatprep.mubr.f32.mxu0 0.0
        %1378 = vmatmul.mubr.f32.gmra.mxu0 %v1200
        %v1379 = vpop.f32.mrf.mxu0
        %v1380 = vadd.f32 0.0, %v1379
        %v1381 = vpop.f32.mrf.mxu0
        %1382 = vmatprep.mubr.f32.mxu0 0.0
        %1383 = vmatmul.mubr.f32.gmra.mxu0 %v1201
        %v1384 = vpop.f32.mrf.mxu0
        %v1385 = vadd.f32 0.0, %v1384
        %v1386 = vpop.f32.mrf.mxu0
        %1387 = vdwg.mxu0
        %v1388 = vadd.f32 %v1198, %v1380
        %v1389 = vadd.f32 %v1199, %v1385
        %v1390 = vld [vmem:[%s639 + $0x4] sm:$0xff]
        %v1391 = vld [vmem:[%s639 + $0xc] sm:$0xff]
        %s1392 = scalar_lea.vmem [#allocation2], 512
        %v1393 = vld [vmem:[%s1392] sm:$0xff]
        %v1394 = vld [vmem:[%s1392 + $0x8] sm:$0xff]
        %v1395 = vld [vmem:[%s1392 + $0x10] sm:$0xff]
        %v1396 = vld [vmem:[%s1392 + $0x18] sm:$0xff]
        %v1397 = vld [vmem:[%s1392 + $0x20] sm:$0xff]
        %v1398 = vld [vmem:[%s1392 + $0x28] sm:$0xff]
        %v1399 = vld [vmem:[%s1392 + $0x30] sm:$0xff]
        %v1400 = vld [vmem:[%s1392 + $0x38] sm:$0xff]
        %v1401 = vld [vmem:[%s1392 + $0x40] sm:$0xff]
        %v1402 = vld [vmem:[%s1392 + $0x48] sm:$0xff]
        %v1403 = vld [vmem:[%s1392 + $0x50] sm:$0xff]
        %v1404 = vld [vmem:[%s1392 + $0x58] sm:$0xff]
        %v1405 = vld [vmem:[%s1392 + $0x60] sm:$0xff]
        %v1406 = vld [vmem:[%s1392 + $0x68] sm:$0xff]
        %v1407 = vld [vmem:[%s1392 + $0x70] sm:$0xff]
        %v1408 = vld [vmem:[%s1392 + $0x78] sm:$0xff]
        %1409 = vmatprep.subr.mxu0 0.0
        %1410 = vmatpush1.msra.mxu0 %v1408
        %1411 = vmatprep.subr.mxu0 0.0
        %1412 = vmatpush1.msra.mxu0 %v1407
        %1413 = vmatprep.subr.mxu0 0.0
        %1414 = vmatpush1.msra.mxu0 %v1406
        %1415 = vmatprep.subr.mxu0 0.0
        %1416 = vmatpush1.msra.mxu0 %v1405
        %1417 = vmatprep.subr.mxu0 0.0
        %1418 = vmatpush1.msra.mxu0 %v1404
        %1419 = vmatprep.subr.mxu0 0.0
        %1420 = vmatpush1.msra.mxu0 %v1403
        %1421 = vmatprep.subr.mxu0 0.0
        %1422 = vmatpush1.msra.mxu0 %v1402
        %1423 = vmatprep.subr.mxu0 0.0
        %1424 = vmatpush1.msra.mxu0 %v1401
        %1425 = vmatprep.subr.mxu0 0.0
        %1426 = vmatpush1.msra.mxu0 %v1400
        %1427 = vmatprep.subr.mxu0 0.0
        %1428 = vmatpush1.msra.mxu0 %v1399
        %1429 = vmatprep.subr.mxu0 0.0
        %1430 = vmatpush1.msra.mxu0 %v1398
        %1431 = vmatprep.subr.mxu0 0.0
        %1432 = vmatpush1.msra.mxu0 %v1397
        %1433 = vmatprep.subr.mxu0 0.0
        %1434 = vmatpush1.msra.mxu0 %v1396
        %1435 = vmatprep.subr.mxu0 0.0
        %1436 = vmatpush1.msra.mxu0 %v1395
        %1437 = vmatprep.subr.mxu0 0.0
        %1438 = vmatpush1.msra.mxu0 %v1394
        %1439 = vmatprep.subr.mxu0 0.0
        %1440 = vmatpush1.msra.mxu0 %v1393
        %1441 = vmatprep.subr.mxu0 0.0
        %1442 = vmatpush2.msra.mxu0 0.0
        %1443 = vmatprep.subr.mxu0 0.0
        %1444 = vmatpush2.msra.mxu0 0.0
        %1445 = vmatprep.subr.mxu0 0.0
        %1446 = vmatpush2.msra.mxu0 0.0
        %1447 = vmatprep.subr.mxu0 0.0
        %1448 = vmatpush2.msra.mxu0 0.0
        %1449 = vmatprep.subr.mxu0 0.0
        %1450 = vmatpush2.msra.mxu0 0.0
        %1451 = vmatprep.subr.mxu0 0.0
        %1452 = vmatpush2.msra.mxu0 0.0
        %1453 = vmatprep.subr.mxu0 0.0
        %1454 = vmatpush2.msra.mxu0 0.0
        %1455 = vmatprep.subr.mxu0 0.0
        %1456 = vmatpush2.msra.mxu0 0.0
        %1457 = vmatprep.subr.mxu0 0.0
        %1458 = vmatpush2.msra.mxu0 0.0
        %1459 = vmatprep.subr.mxu0 0.0
        %1460 = vmatpush2.msra.mxu0 0.0
        %1461 = vmatprep.subr.mxu0 0.0
        %1462 = vmatpush2.msra.mxu0 0.0
        %1463 = vmatprep.subr.mxu0 0.0
        %1464 = vmatpush2.msra.mxu0 0.0
        %1465 = vmatprep.subr.mxu0 0.0
        %1466 = vmatpush2.msra.mxu0 0.0
        %1467 = vmatprep.subr.mxu0 0.0
        %1468 = vmatpush2.msra.mxu0 0.0
        %1469 = vmatprep.subr.mxu0 0.0
        %1470 = vmatpush2.msra.mxu0 0.0
        %1471 = vmatprep.subr.mxu0 0.0
        %1472 = vmatpush2.msra.mxu0 0.0
        %1473 = vmatprep.mubr.f32.mxu0 0.0
        %1474 = vmatmul.mubr.f32.gmra.mxu0 %v1390
        %v1475 = vpop.f32.mrf.mxu0
        %v1476 = vadd.f32 0.0, %v1475
        %v1477 = vpop.f32.mrf.mxu0
        %1478 = vmatprep.mubr.f32.mxu0 0.0
        %1479 = vmatmul.mubr.f32.gmra.mxu0 %v1391
        %v1480 = vpop.f32.mrf.mxu0
        %v1481 = vadd.f32 0.0, %v1480
        %v1482 = vpop.f32.mrf.mxu0
        %1483 = vdwg.mxu0
        %v1484 = vadd.f32 %v1294, %v1476
        %v1485 = vadd.f32 %v1295, %v1481
        %s1486 = scalar_lea.vmem [#allocation5], 512
        %v1487 = vld [vmem:[%s1486] sm:$0xff]
        %v1488 = vld [vmem:[%s1486 + $0x8] sm:$0xff]
        %v1489 = vld [vmem:[%s1486 + $0x10] sm:$0xff]
        %v1490 = vld [vmem:[%s1486 + $0x18] sm:$0xff]
        %v1491 = vld [vmem:[%s1486 + $0x20] sm:$0xff]
        %v1492 = vld [vmem:[%s1486 + $0x28] sm:$0xff]
        %v1493 = vld [vmem:[%s1486 + $0x30] sm:$0xff]
        %v1494 = vld [vmem:[%s1486 + $0x38] sm:$0xff]
        %v1495 = vld [vmem:[%s1486 + $0x40] sm:$0xff]
        %v1496 = vld [vmem:[%s1486 + $0x48] sm:$0xff]
        %v1497 = vld [vmem:[%s1486 + $0x50] sm:$0xff]
        %v1498 = vld [vmem:[%s1486 + $0x58] sm:$0xff]
        %v1499 = vld [vmem:[%s1486 + $0x60] sm:$0xff]
        %v1500 = vld [vmem:[%s1486 + $0x68] sm:$0xff]
        %v1501 = vld [vmem:[%s1486 + $0x70] sm:$0xff]
        %v1502 = vld [vmem:[%s1486 + $0x78] sm:$0xff]
        %1503 = vmatprep.subr.mxu0 0.0
        %1504 = vmatpush1.msra.mxu0 %v1502
        %1505 = vmatprep.subr.mxu0 0.0
        %1506 = vmatpush1.msra.mxu0 %v1501
        %1507 = vmatprep.subr.mxu0 0.0
        %1508 = vmatpush1.msra.mxu0 %v1500
        %1509 = vmatprep.subr.mxu0 0.0
        %1510 = vmatpush1.msra.mxu0 %v1499
        %1511 = vmatprep.subr.mxu0 0.0
        %1512 = vmatpush1.msra.mxu0 %v1498
        %1513 = vmatprep.subr.mxu0 0.0
        %1514 = vmatpush1.msra.mxu0 %v1497
        %1515 = vmatprep.subr.mxu0 0.0
        %1516 = vmatpush1.msra.mxu0 %v1496
        %1517 = vmatprep.subr.mxu0 0.0
        %1518 = vmatpush1.msra.mxu0 %v1495
        %1519 = vmatprep.subr.mxu0 0.0
        %1520 = vmatpush1.msra.mxu0 %v1494
        %1521 = vmatprep.subr.mxu0 0.0
        %1522 = vmatpush1.msra.mxu0 %v1493
        %1523 = vmatprep.subr.mxu0 0.0
        %1524 = vmatpush1.msra.mxu0 %v1492
        %1525 = vmatprep.subr.mxu0 0.0
        %1526 = vmatpush1.msra.mxu0 %v1491
        %1527 = vmatprep.subr.mxu0 0.0
        %1528 = vmatpush1.msra.mxu0 %v1490
        %1529 = vmatprep.subr.mxu0 0.0
        %1530 = vmatpush1.msra.mxu0 %v1489
        %1531 = vmatprep.subr.mxu0 0.0
        %1532 = vmatpush1.msra.mxu0 %v1488
        %1533 = vmatprep.subr.mxu0 0.0
        %1534 = vmatpush1.msra.mxu0 %v1487
        %1535 = vmatprep.subr.mxu0 0.0
        %1536 = vmatpush2.msra.mxu0 0.0
        %1537 = vmatprep.subr.mxu0 0.0
        %1538 = vmatpush2.msra.mxu0 0.0
        %1539 = vmatprep.subr.mxu0 0.0
        %1540 = vmatpush2.msra.mxu0 0.0
        %1541 = vmatprep.subr.mxu0 0.0
        %1542 = vmatpush2.msra.mxu0 0.0
        %1543 = vmatprep.subr.mxu0 0.0
        %1544 = vmatpush2.msra.mxu0 0.0
        %1545 = vmatprep.subr.mxu0 0.0
        %1546 = vmatpush2.msra.mxu0 0.0
        %1547 = vmatprep.subr.mxu0 0.0
        %1548 = vmatpush2.msra.mxu0 0.0
        %1549 = vmatprep.subr.mxu0 0.0
        %1550 = vmatpush2.msra.mxu0 0.0
        %1551 = vmatprep.subr.mxu0 0.0
        %1552 = vmatpush2.msra.mxu0 0.0
        %1553 = vmatprep.subr.mxu0 0.0
        %1554 = vmatpush2.msra.mxu0 0.0
        %1555 = vmatprep.subr.mxu0 0.0
        %1556 = vmatpush2.msra.mxu0 0.0
        %1557 = vmatprep.subr.mxu0 0.0
        %1558 = vmatpush2.msra.mxu0 0.0
        %1559 = vmatprep.subr.mxu0 0.0
        %1560 = vmatpush2.msra.mxu0 0.0
        %1561 = vmatprep.subr.mxu0 0.0
        %1562 = vmatpush2.msra.mxu0 0.0
        %1563 = vmatprep.subr.mxu0 0.0
        %1564 = vmatpush2.msra.mxu0 0.0
        %1565 = vmatprep.subr.mxu0 0.0
        %1566 = vmatpush2.msra.mxu0 0.0
        %1567 = vmatprep.mubr.f32.mxu0 0.0
        %1568 = vmatmul.mubr.f32.gmra.mxu0 %v1390
        %v1569 = vpop.f32.mrf.mxu0
        %v1570 = vadd.f32 0.0, %v1569
        %v1571 = vpop.f32.mrf.mxu0
        %1572 = vmatprep.mubr.f32.mxu0 0.0
        %1573 = vmatmul.mubr.f32.gmra.mxu0 %v1391
        %v1574 = vpop.f32.mrf.mxu0
        %v1575 = vadd.f32 0.0, %v1574
        %v1576 = vpop.f32.mrf.mxu0
        %1577 = vdwg.mxu0
        %v1578 = vadd.f32 %v1388, %v1570
        %v1579 = vadd.f32 %v1389, %v1575
        %v1580 = vld [vmem:[%s639 + $0x5] sm:$0xff]
        %v1581 = vld [vmem:[%s639 + $0xd] sm:$0xff]
        %s1582 = scalar_lea.vmem [#allocation2], 640
        %v1583 = vld [vmem:[%s1582] sm:$0xff]
        %v1584 = vld [vmem:[%s1582 + $0x8] sm:$0xff]
        %v1585 = vld [vmem:[%s1582 + $0x10] sm:$0xff]
        %v1586 = vld [vmem:[%s1582 + $0x18] sm:$0xff]
        %v1587 = vld [vmem:[%s1582 + $0x20] sm:$0xff]
        %v1588 = vld [vmem:[%s1582 + $0x28] sm:$0xff]
        %v1589 = vld [vmem:[%s1582 + $0x30] sm:$0xff]
        %v1590 = vld [vmem:[%s1582 + $0x38] sm:$0xff]
        %v1591 = vld [vmem:[%s1582 + $0x40] sm:$0xff]
        %v1592 = vld [vmem:[%s1582 + $0x48] sm:$0xff]
        %v1593 = vld [vmem:[%s1582 + $0x50] sm:$0xff]
        %v1594 = vld [vmem:[%s1582 + $0x58] sm:$0xff]
        %v1595 = vld [vmem:[%s1582 + $0x60] sm:$0xff]
        %v1596 = vld [vmem:[%s1582 + $0x68] sm:$0xff]
        %v1597 = vld [vmem:[%s1582 + $0x70] sm:$0xff]
        %v1598 = vld [vmem:[%s1582 + $0x78] sm:$0xff]
        %1599 = vmatprep.subr.mxu0 0.0
        %1600 = vmatpush1.msra.mxu0 %v1598
        %1601 = vmatprep.subr.mxu0 0.0
        %1602 = vmatpush1.msra.mxu0 %v1597
        %1603 = vmatprep.subr.mxu0 0.0
        %1604 = vmatpush1.msra.mxu0 %v1596
        %1605 = vmatprep.subr.mxu0 0.0
        %1606 = vmatpush1.msra.mxu0 %v1595
        %1607 = vmatprep.subr.mxu0 0.0
        %1608 = vmatpush1.msra.mxu0 %v1594
        %1609 = vmatprep.subr.mxu0 0.0
        %1610 = vmatpush1.msra.mxu0 %v1593
        %1611 = vmatprep.subr.mxu0 0.0
        %1612 = vmatpush1.msra.mxu0 %v1592
        %1613 = vmatprep.subr.mxu0 0.0
        %1614 = vmatpush1.msra.mxu0 %v1591
        %1615 = vmatprep.subr.mxu0 0.0
        %1616 = vmatpush1.msra.mxu0 %v1590
        %1617 = vmatprep.subr.mxu0 0.0
        %1618 = vmatpush1.msra.mxu0 %v1589
        %1619 = vmatprep.subr.mxu0 0.0
        %1620 = vmatpush1.msra.mxu0 %v1588
        %1621 = vmatprep.subr.mxu0 0.0
        %1622 = vmatpush1.msra.mxu0 %v1587
        %1623 = vmatprep.subr.mxu0 0.0
        %1624 = vmatpush1.msra.mxu0 %v1586
        %1625 = vmatprep.subr.mxu0 0.0
        %1626 = vmatpush1.msra.mxu0 %v1585
        %1627 = vmatprep.subr.mxu0 0.0
        %1628 = vmatpush1.msra.mxu0 %v1584
        %1629 = vmatprep.subr.mxu0 0.0
        %1630 = vmatpush1.msra.mxu0 %v1583
        %1631 = vmatprep.subr.mxu0 0.0
        %1632 = vmatpush2.msra.mxu0 0.0
        %1633 = vmatprep.subr.mxu0 0.0
        %1634 = vmatpush2.msra.mxu0 0.0
        %1635 = vmatprep.subr.mxu0 0.0
        %1636 = vmatpush2.msra.mxu0 0.0
        %1637 = vmatprep.subr.mxu0 0.0
        %1638 = vmatpush2.msra.mxu0 0.0
        %1639 = vmatprep.subr.mxu0 0.0
        %1640 = vmatpush2.msra.mxu0 0.0
        %1641 = vmatprep.subr.mxu0 0.0
        %1642 = vmatpush2.msra.mxu0 0.0
        %1643 = vmatprep.subr.mxu0 0.0
        %1644 = vmatpush2.msra.mxu0 0.0
        %1645 = vmatprep.subr.mxu0 0.0
        %1646 = vmatpush2.msra.mxu0 0.0
        %1647 = vmatprep.subr.mxu0 0.0
        %1648 = vmatpush2.msra.mxu0 0.0
        %1649 = vmatprep.subr.mxu0 0.0
        %1650 = vmatpush2.msra.mxu0 0.0
        %1651 = vmatprep.subr.mxu0 0.0
        %1652 = vmatpush2.msra.mxu0 0.0
        %1653 = vmatprep.subr.mxu0 0.0
        %1654 = vmatpush2.msra.mxu0 0.0
        %1655 = vmatprep.subr.mxu0 0.0
        %1656 = vmatpush2.msra.mxu0 0.0
        %1657 = vmatprep.subr.mxu0 0.0
        %1658 = vmatpush2.msra.mxu0 0.0
        %1659 = vmatprep.subr.mxu0 0.0
        %1660 = vmatpush2.msra.mxu0 0.0
        %1661 = vmatprep.subr.mxu0 0.0
        %1662 = vmatpush2.msra.mxu0 0.0
        %1663 = vmatprep.mubr.f32.mxu0 0.0
        %1664 = vmatmul.mubr.f32.gmra.mxu0 %v1580
        %v1665 = vpop.f32.mrf.mxu0
        %v1666 = vadd.f32 0.0, %v1665
        %v1667 = vpop.f32.mrf.mxu0
        %1668 = vmatprep.mubr.f32.mxu0 0.0
        %1669 = vmatmul.mubr.f32.gmra.mxu0 %v1581
        %v1670 = vpop.f32.mrf.mxu0
        %v1671 = vadd.f32 0.0, %v1670
        %v1672 = vpop.f32.mrf.mxu0
        %1673 = vdwg.mxu0
        %v1674 = vadd.f32 %v1484, %v1666
        %v1675 = vadd.f32 %v1485, %v1671
        %s1676 = scalar_lea.vmem [#allocation5], 640
        %v1677 = vld [vmem:[%s1676] sm:$0xff]
        %v1678 = vld [vmem:[%s1676 + $0x8] sm:$0xff]
        %v1679 = vld [vmem:[%s1676 + $0x10] sm:$0xff]
        %v1680 = vld [vmem:[%s1676 + $0x18] sm:$0xff]
        %v1681 = vld [vmem:[%s1676 + $0x20] sm:$0xff]
        %v1682 = vld [vmem:[%s1676 + $0x28] sm:$0xff]
        %v1683 = vld [vmem:[%s1676 + $0x30] sm:$0xff]
        %v1684 = vld [vmem:[%s1676 + $0x38] sm:$0xff]
        %v1685 = vld [vmem:[%s1676 + $0x40] sm:$0xff]
        %v1686 = vld [vmem:[%s1676 + $0x48] sm:$0xff]
        %v1687 = vld [vmem:[%s1676 + $0x50] sm:$0xff]
        %v1688 = vld [vmem:[%s1676 + $0x58] sm:$0xff]
        %v1689 = vld [vmem:[%s1676 + $0x60] sm:$0xff]
        %v1690 = vld [vmem:[%s1676 + $0x68] sm:$0xff]
        %v1691 = vld [vmem:[%s1676 + $0x70] sm:$0xff]
        %v1692 = vld [vmem:[%s1676 + $0x78] sm:$0xff]
        %1693 = vmatprep.subr.mxu0 0.0
        %1694 = vmatpush1.msra.mxu0 %v1692
        %1695 = vmatprep.subr.mxu0 0.0
        %1696 = vmatpush1.msra.mxu0 %v1691
        %1697 = vmatprep.subr.mxu0 0.0
        %1698 = vmatpush1.msra.mxu0 %v1690
        %1699 = vmatprep.subr.mxu0 0.0
        %1700 = vmatpush1.msra.mxu0 %v1689
        %1701 = vmatprep.subr.mxu0 0.0
        %1702 = vmatpush1.msra.mxu0 %v1688
        %1703 = vmatprep.subr.mxu0 0.0
        %1704 = vmatpush1.msra.mxu0 %v1687
        %1705 = vmatprep.subr.mxu0 0.0
        %1706 = vmatpush1.msra.mxu0 %v1686
        %1707 = vmatprep.subr.mxu0 0.0
        %1708 = vmatpush1.msra.mxu0 %v1685
        %1709 = vmatprep.subr.mxu0 0.0
        %1710 = vmatpush1.msra.mxu0 %v1684
        %1711 = vmatprep.subr.mxu0 0.0
        %1712 = vmatpush1.msra.mxu0 %v1683
        %1713 = vmatprep.subr.mxu0 0.0
        %1714 = vmatpush1.msra.mxu0 %v1682
        %1715 = vmatprep.subr.mxu0 0.0
        %1716 = vmatpush1.msra.mxu0 %v1681
        %1717 = vmatprep.subr.mxu0 0.0
        %1718 = vmatpush1.msra.mxu0 %v1680
        %1719 = vmatprep.subr.mxu0 0.0
        %1720 = vmatpush1.msra.mxu0 %v1679
        %1721 = vmatprep.subr.mxu0 0.0
        %1722 = vmatpush1.msra.mxu0 %v1678
        %1723 = vmatprep.subr.mxu0 0.0
        %1724 = vmatpush1.msra.mxu0 %v1677
        %1725 = vmatprep.subr.mxu0 0.0
        %1726 = vmatpush2.msra.mxu0 0.0
        %1727 = vmatprep.subr.mxu0 0.0
        %1728 = vmatpush2.msra.mxu0 0.0
        %1729 = vmatprep.subr.mxu0 0.0
        %1730 = vmatpush2.msra.mxu0 0.0
        %1731 = vmatprep.subr.mxu0 0.0
        %1732 = vmatpush2.msra.mxu0 0.0
        %1733 = vmatprep.subr.mxu0 0.0
        %1734 = vmatpush2.msra.mxu0 0.0
        %1735 = vmatprep.subr.mxu0 0.0
        %1736 = vmatpush2.msra.mxu0 0.0
        %1737 = vmatprep.subr.mxu0 0.0
        %1738 = vmatpush2.msra.mxu0 0.0
        %1739 = vmatprep.subr.mxu0 0.0
        %1740 = vmatpush2.msra.mxu0 0.0
        %1741 = vmatprep.subr.mxu0 0.0
        %1742 = vmatpush2.msra.mxu0 0.0
        %1743 = vmatprep.subr.mxu0 0.0
        %1744 = vmatpush2.msra.mxu0 0.0
        %1745 = vmatprep.subr.mxu0 0.0
        %1746 = vmatpush2.msra.mxu0 0.0
        %1747 = vmatprep.subr.mxu0 0.0
        %1748 = vmatpush2.msra.mxu0 0.0
        %1749 = vmatprep.subr.mxu0 0.0
        %1750 = vmatpush2.msra.mxu0 0.0
        %1751 = vmatprep.subr.mxu0 0.0
        %1752 = vmatpush2.msra.mxu0 0.0
        %1753 = vmatprep.subr.mxu0 0.0
        %1754 = vmatpush2.msra.mxu0 0.0
        %1755 = vmatprep.subr.mxu0 0.0
        %1756 = vmatpush2.msra.mxu0 0.0
        %1757 = vmatprep.mubr.f32.mxu0 0.0
        %1758 = vmatmul.mubr.f32.gmra.mxu0 %v1580
        %v1759 = vpop.f32.mrf.mxu0
        %v1760 = vadd.f32 0.0, %v1759
        %v1761 = vpop.f32.mrf.mxu0
        %1762 = vmatprep.mubr.f32.mxu0 0.0
        %1763 = vmatmul.mubr.f32.gmra.mxu0 %v1581
        %v1764 = vpop.f32.mrf.mxu0
        %v1765 = vadd.f32 0.0, %v1764
        %v1766 = vpop.f32.mrf.mxu0
        %1767 = vdwg.mxu0
        %v1768 = vadd.f32 %v1578, %v1760
        %v1769 = vadd.f32 %v1579, %v1765
        %v1770 = vld [vmem:[%s639 + $0x6] sm:$0xff]
        %v1771 = vld [vmem:[%s639 + $0xe] sm:$0xff]
        %s1772 = scalar_lea.vmem [#allocation2], 768
        %v1773 = vld [vmem:[%s1772] sm:$0xff]
        %v1774 = vld [vmem:[%s1772 + $0x8] sm:$0xff]
        %v1775 = vld [vmem:[%s1772 + $0x10] sm:$0xff]
        %v1776 = vld [vmem:[%s1772 + $0x18] sm:$0xff]
        %v1777 = vld [vmem:[%s1772 + $0x20] sm:$0xff]
        %v1778 = vld [vmem:[%s1772 + $0x28] sm:$0xff]
        %v1779 = vld [vmem:[%s1772 + $0x30] sm:$0xff]
        %v1780 = vld [vmem:[%s1772 + $0x38] sm:$0xff]
        %v1781 = vld [vmem:[%s1772 + $0x40] sm:$0xff]
        %v1782 = vld [vmem:[%s1772 + $0x48] sm:$0xff]
        %v1783 = vld [vmem:[%s1772 + $0x50] sm:$0xff]
        %v1784 = vld [vmem:[%s1772 + $0x58] sm:$0xff]
        %v1785 = vld [vmem:[%s1772 + $0x60] sm:$0xff]
        %v1786 = vld [vmem:[%s1772 + $0x68] sm:$0xff]
        %v1787 = vld [vmem:[%s1772 + $0x70] sm:$0xff]
        %v1788 = vld [vmem:[%s1772 + $0x78] sm:$0xff]
        %1789 = vmatprep.subr.mxu0 0.0
        %1790 = vmatpush1.msra.mxu0 %v1788
        %1791 = vmatprep.subr.mxu0 0.0
        %1792 = vmatpush1.msra.mxu0 %v1787
        %1793 = vmatprep.subr.mxu0 0.0
        %1794 = vmatpush1.msra.mxu0 %v1786
        %1795 = vmatprep.subr.mxu0 0.0
        %1796 = vmatpush1.msra.mxu0 %v1785
        %1797 = vmatprep.subr.mxu0 0.0
        %1798 = vmatpush1.msra.mxu0 %v1784
        %1799 = vmatprep.subr.mxu0 0.0
        %1800 = vmatpush1.msra.mxu0 %v1783
        %1801 = vmatprep.subr.mxu0 0.0
        %1802 = vmatpush1.msra.mxu0 %v1782
        %1803 = vmatprep.subr.mxu0 0.0
        %1804 = vmatpush1.msra.mxu0 %v1781
        %1805 = vmatprep.subr.mxu0 0.0
        %1806 = vmatpush1.msra.mxu0 %v1780
        %1807 = vmatprep.subr.mxu0 0.0
        %1808 = vmatpush1.msra.mxu0 %v1779
        %1809 = vmatprep.subr.mxu0 0.0
        %1810 = vmatpush1.msra.mxu0 %v1778
        %1811 = vmatprep.subr.mxu0 0.0
        %1812 = vmatpush1.msra.mxu0 %v1777
        %1813 = vmatprep.subr.mxu0 0.0
        %1814 = vmatpush1.msra.mxu0 %v1776
        %1815 = vmatprep.subr.mxu0 0.0
        %1816 = vmatpush1.msra.mxu0 %v1775
        %1817 = vmatprep.subr.mxu0 0.0
        %1818 = vmatpush1.msra.mxu0 %v1774
        %1819 = vmatprep.subr.mxu0 0.0
        %1820 = vmatpush1.msra.mxu0 %v1773
        %1821 = vmatprep.subr.mxu0 0.0
        %1822 = vmatpush2.msra.mxu0 0.0
        %1823 = vmatprep.subr.mxu0 0.0
        %1824 = vmatpush2.msra.mxu0 0.0
        %1825 = vmatprep.subr.mxu0 0.0
        %1826 = vmatpush2.msra.mxu0 0.0
        %1827 = vmatprep.subr.mxu0 0.0
        %1828 = vmatpush2.msra.mxu0 0.0
        %1829 = vmatprep.subr.mxu0 0.0
        %1830 = vmatpush2.msra.mxu0 0.0
        %1831 = vmatprep.subr.mxu0 0.0
        %1832 = vmatpush2.msra.mxu0 0.0
        %1833 = vmatprep.subr.mxu0 0.0
        %1834 = vmatpush2.msra.mxu0 0.0
        %1835 = vmatprep.subr.mxu0 0.0
        %1836 = vmatpush2.msra.mxu0 0.0
        %1837 = vmatprep.subr.mxu0 0.0
        %1838 = vmatpush2.msra.mxu0 0.0
        %1839 = vmatprep.subr.mxu0 0.0
        %1840 = vmatpush2.msra.mxu0 0.0
        %1841 = vmatprep.subr.mxu0 0.0
        %1842 = vmatpush2.msra.mxu0 0.0
        %1843 = vmatprep.subr.mxu0 0.0
        %1844 = vmatpush2.msra.mxu0 0.0
        %1845 = vmatprep.subr.mxu0 0.0
        %1846 = vmatpush2.msra.mxu0 0.0
        %1847 = vmatprep.subr.mxu0 0.0
        %1848 = vmatpush2.msra.mxu0 0.0
        %1849 = vmatprep.subr.mxu0 0.0
        %1850 = vmatpush2.msra.mxu0 0.0
        %1851 = vmatprep.subr.mxu0 0.0
        %1852 = vmatpush2.msra.mxu0 0.0
        %1853 = vmatprep.mubr.f32.mxu0 0.0
        %1854 = vmatmul.mubr.f32.gmra.mxu0 %v1770
        %v1855 = vpop.f32.mrf.mxu0
        %v1856 = vadd.f32 0.0, %v1855
        %v1857 = vpop.f32.mrf.mxu0
        %1858 = vmatprep.mubr.f32.mxu0 0.0
        %1859 = vmatmul.mubr.f32.gmra.mxu0 %v1771
        %v1860 = vpop.f32.mrf.mxu0
        %v1861 = vadd.f32 0.0, %v1860
        %v1862 = vpop.f32.mrf.mxu0
        %1863 = vdwg.mxu0
        %v1864 = vadd.f32 %v1674, %v1856
        %v1865 = vadd.f32 %v1675, %v1861
        %s1866 = scalar_lea.vmem [#allocation5], 768
        %v1867 = vld [vmem:[%s1866] sm:$0xff]
        %v1868 = vld [vmem:[%s1866 + $0x8] sm:$0xff]
        %v1869 = vld [vmem:[%s1866 + $0x10] sm:$0xff]
        %v1870 = vld [vmem:[%s1866 + $0x18] sm:$0xff]
        %v1871 = vld [vmem:[%s1866 + $0x20] sm:$0xff]
        %v1872 = vld [vmem:[%s1866 + $0x28] sm:$0xff]
        %v1873 = vld [vmem:[%s1866 + $0x30] sm:$0xff]
        %v1874 = vld [vmem:[%s1866 + $0x38] sm:$0xff]
        %v1875 = vld [vmem:[%s1866 + $0x40] sm:$0xff]
        %v1876 = vld [vmem:[%s1866 + $0x48] sm:$0xff]
        %v1877 = vld [vmem:[%s1866 + $0x50] sm:$0xff]
        %v1878 = vld [vmem:[%s1866 + $0x58] sm:$0xff]
        %v1879 = vld [vmem:[%s1866 + $0x60] sm:$0xff]
        %v1880 = vld [vmem:[%s1866 + $0x68] sm:$0xff]
        %v1881 = vld [vmem:[%s1866 + $0x70] sm:$0xff]
        %v1882 = vld [vmem:[%s1866 + $0x78] sm:$0xff]
        %1883 = vmatprep.subr.mxu0 0.0
        %1884 = vmatpush1.msra.mxu0 %v1882
        %1885 = vmatprep.subr.mxu0 0.0
        %1886 = vmatpush1.msra.mxu0 %v1881
        %1887 = vmatprep.subr.mxu0 0.0
        %1888 = vmatpush1.msra.mxu0 %v1880
        %1889 = vmatprep.subr.mxu0 0.0
        %1890 = vmatpush1.msra.mxu0 %v1879
        %1891 = vmatprep.subr.mxu0 0.0
        %1892 = vmatpush1.msra.mxu0 %v1878
        %1893 = vmatprep.subr.mxu0 0.0
        %1894 = vmatpush1.msra.mxu0 %v1877
        %1895 = vmatprep.subr.mxu0 0.0
        %1896 = vmatpush1.msra.mxu0 %v1876
        %1897 = vmatprep.subr.mxu0 0.0
        %1898 = vmatpush1.msra.mxu0 %v1875
        %1899 = vmatprep.subr.mxu0 0.0
        %1900 = vmatpush1.msra.mxu0 %v1874
        %1901 = vmatprep.subr.mxu0 0.0
        %1902 = vmatpush1.msra.mxu0 %v1873
        %1903 = vmatprep.subr.mxu0 0.0
        %1904 = vmatpush1.msra.mxu0 %v1872
        %1905 = vmatprep.subr.mxu0 0.0
        %1906 = vmatpush1.msra.mxu0 %v1871
        %1907 = vmatprep.subr.mxu0 0.0
        %1908 = vmatpush1.msra.mxu0 %v1870
        %1909 = vmatprep.subr.mxu0 0.0
        %1910 = vmatpush1.msra.mxu0 %v1869
        %1911 = vmatprep.subr.mxu0 0.0
        %1912 = vmatpush1.msra.mxu0 %v1868
        %1913 = vmatprep.subr.mxu0 0.0
        %1914 = vmatpush1.msra.mxu0 %v1867
        %1915 = vmatprep.subr.mxu0 0.0
        %1916 = vmatpush2.msra.mxu0 0.0
        %1917 = vmatprep.subr.mxu0 0.0
        %1918 = vmatpush2.msra.mxu0 0.0
        %1919 = vmatprep.subr.mxu0 0.0
        %1920 = vmatpush2.msra.mxu0 0.0
        %1921 = vmatprep.subr.mxu0 0.0
        %1922 = vmatpush2.msra.mxu0 0.0
        %1923 = vmatprep.subr.mxu0 0.0
        %1924 = vmatpush2.msra.mxu0 0.0
        %1925 = vmatprep.subr.mxu0 0.0
        %1926 = vmatpush2.msra.mxu0 0.0
        %1927 = vmatprep.subr.mxu0 0.0
        %1928 = vmatpush2.msra.mxu0 0.0
        %1929 = vmatprep.subr.mxu0 0.0
        %1930 = vmatpush2.msra.mxu0 0.0
        %1931 = vmatprep.subr.mxu0 0.0
        %1932 = vmatpush2.msra.mxu0 0.0
        %1933 = vmatprep.subr.mxu0 0.0
        %1934 = vmatpush2.msra.mxu0 0.0
        %1935 = vmatprep.subr.mxu0 0.0
        %1936 = vmatpush2.msra.mxu0 0.0
        %1937 = vmatprep.subr.mxu0 0.0
        %1938 = vmatpush2.msra.mxu0 0.0
        %1939 = vmatprep.subr.mxu0 0.0
        %1940 = vmatpush2.msra.mxu0 0.0
        %1941 = vmatprep.subr.mxu0 0.0
        %1942 = vmatpush2.msra.mxu0 0.0
        %1943 = vmatprep.subr.mxu0 0.0
        %1944 = vmatpush2.msra.mxu0 0.0
        %1945 = vmatprep.subr.mxu0 0.0
        %1946 = vmatpush2.msra.mxu0 0.0
        %1947 = vmatprep.mubr.f32.mxu0 0.0
        %1948 = vmatmul.mubr.f32.gmra.mxu0 %v1770
        %v1949 = vpop.f32.mrf.mxu0
        %v1950 = vadd.f32 0.0, %v1949
        %v1951 = vpop.f32.mrf.mxu0
        %1952 = vmatprep.mubr.f32.mxu0 0.0
        %1953 = vmatmul.mubr.f32.gmra.mxu0 %v1771
        %v1954 = vpop.f32.mrf.mxu0
        %v1955 = vadd.f32 0.0, %v1954
        %v1956 = vpop.f32.mrf.mxu0
        %1957 = vdwg.mxu0
        %v1958 = vadd.f32 %v1768, %v1950
        %v1959 = vadd.f32 %v1769, %v1955
        %v1960 = vld [vmem:[%s639 + $0x7] sm:$0xff]
        %v1961 = vld [vmem:[%s639 + $0xf] sm:$0xff]
        %s1962 = scalar_lea.vmem [#allocation2], 896
        %v1963 = vld [vmem:[%s1962] sm:$0xff]
        %v1964 = vld [vmem:[%s1962 + $0x8] sm:$0xff]
        %v1965 = vld [vmem:[%s1962 + $0x10] sm:$0xff]
        %v1966 = vld [vmem:[%s1962 + $0x18] sm:$0xff]
        %v1967 = vld [vmem:[%s1962 + $0x20] sm:$0xff]
        %v1968 = vld [vmem:[%s1962 + $0x28] sm:$0xff]
        %v1969 = vld [vmem:[%s1962 + $0x30] sm:$0xff]
        %v1970 = vld [vmem:[%s1962 + $0x38] sm:$0xff]
        %v1971 = vld [vmem:[%s1962 + $0x40] sm:$0xff]
        %v1972 = vld [vmem:[%s1962 + $0x48] sm:$0xff]
        %v1973 = vld [vmem:[%s1962 + $0x50] sm:$0xff]
        %v1974 = vld [vmem:[%s1962 + $0x58] sm:$0xff]
        %v1975 = vld [vmem:[%s1962 + $0x60] sm:$0xff]
        %v1976 = vld [vmem:[%s1962 + $0x68] sm:$0xff]
        %v1977 = vld [vmem:[%s1962 + $0x70] sm:$0xff]
        %v1978 = vld [vmem:[%s1962 + $0x78] sm:$0xff]
        %1979 = vmatprep.subr.mxu0 0.0
        %1980 = vmatpush1.msra.mxu0 %v1978
        %1981 = vmatprep.subr.mxu0 0.0
        %1982 = vmatpush1.msra.mxu0 %v1977
        %1983 = vmatprep.subr.mxu0 0.0
        %1984 = vmatpush1.msra.mxu0 %v1976
        %1985 = vmatprep.subr.mxu0 0.0
        %1986 = vmatpush1.msra.mxu0 %v1975
        %1987 = vmatprep.subr.mxu0 0.0
        %1988 = vmatpush1.msra.mxu0 %v1974
        %1989 = vmatprep.subr.mxu0 0.0
        %1990 = vmatpush1.msra.mxu0 %v1973
        %1991 = vmatprep.subr.mxu0 0.0
        %1992 = vmatpush1.msra.mxu0 %v1972
        %1993 = vmatprep.subr.mxu0 0.0
        %1994 = vmatpush1.msra.mxu0 %v1971
        %1995 = vmatprep.subr.mxu0 0.0
        %1996 = vmatpush1.msra.mxu0 %v1970
        %1997 = vmatprep.subr.mxu0 0.0
        %1998 = vmatpush1.msra.mxu0 %v1969
        %1999 = vmatprep.subr.mxu0 0.0
        %2000 = vmatpush1.msra.mxu0 %v1968
        %2001 = vmatprep.subr.mxu0 0.0
        %2002 = vmatpush1.msra.mxu0 %v1967
        %2003 = vmatprep.subr.mxu0 0.0
        %2004 = vmatpush1.msra.mxu0 %v1966
        %2005 = vmatprep.subr.mxu0 0.0
        %2006 = vmatpush1.msra.mxu0 %v1965
        %2007 = vmatprep.subr.mxu0 0.0
        %2008 = vmatpush1.msra.mxu0 %v1964
        %2009 = vmatprep.subr.mxu0 0.0
        %2010 = vmatpush1.msra.mxu0 %v1963
        %2011 = vmatprep.subr.mxu0 0.0
        %2012 = vmatpush2.msra.mxu0 0.0
        %2013 = vmatprep.subr.mxu0 0.0
        %2014 = vmatpush2.msra.mxu0 0.0
        %2015 = vmatprep.subr.mxu0 0.0
        %2016 = vmatpush2.msra.mxu0 0.0
        %2017 = vmatprep.subr.mxu0 0.0
        %2018 = vmatpush2.msra.mxu0 0.0
        %2019 = vmatprep.subr.mxu0 0.0
        %2020 = vmatpush2.msra.mxu0 0.0
        %2021 = vmatprep.subr.mxu0 0.0
        %2022 = vmatpush2.msra.mxu0 0.0
        %2023 = vmatprep.subr.mxu0 0.0
        %2024 = vmatpush2.msra.mxu0 0.0
        %2025 = vmatprep.subr.mxu0 0.0
        %2026 = vmatpush2.msra.mxu0 0.0
        %2027 = vmatprep.subr.mxu0 0.0
        %2028 = vmatpush2.msra.mxu0 0.0
        %2029 = vmatprep.subr.mxu0 0.0
        %2030 = vmatpush2.msra.mxu0 0.0
        %2031 = vmatprep.subr.mxu0 0.0
        %2032 = vmatpush2.msra.mxu0 0.0
        %2033 = vmatprep.subr.mxu0 0.0
        %2034 = vmatpush2.msra.mxu0 0.0
        %2035 = vmatprep.subr.mxu0 0.0
        %2036 = vmatpush2.msra.mxu0 0.0
        %2037 = vmatprep.subr.mxu0 0.0
        %2038 = vmatpush2.msra.mxu0 0.0
        %2039 = vmatprep.subr.mxu0 0.0
        %2040 = vmatpush2.msra.mxu0 0.0
        %2041 = vmatprep.subr.mxu0 0.0
        %2042 = vmatpush2.msra.mxu0 0.0
        %2043 = vmatprep.mubr.f32.mxu0 0.0
        %2044 = vmatmul.mubr.f32.gmra.mxu0 %v1960
        %v2045 = vpop.f32.mrf.mxu0
        %v2046 = vadd.f32 0.0, %v2045
        %v2047 = vpop.f32.mrf.mxu0
        %2048 = vmatprep.mubr.f32.mxu0 0.0
        %2049 = vmatmul.mubr.f32.gmra.mxu0 %v1961
        %v2050 = vpop.f32.mrf.mxu0
        %v2051 = vadd.f32 0.0, %v2050
        %v2052 = vpop.f32.mrf.mxu0
        %2053 = vdwg.mxu0
        %v2054 = vadd.f32 %v1864, %v2046
        %v2055 = vadd.f32 %v1865, %v2051
        %s2056 = scalar_lea.vmem [#allocation5], 896
        %v2057 = vld [vmem:[%s2056] sm:$0xff]
        %v2058 = vld [vmem:[%s2056 + $0x8] sm:$0xff]
        %v2059 = vld [vmem:[%s2056 + $0x10] sm:$0xff]
        %v2060 = vld [vmem:[%s2056 + $0x18] sm:$0xff]
        %v2061 = vld [vmem:[%s2056 + $0x20] sm:$0xff]
        %v2062 = vld [vmem:[%s2056 + $0x28] sm:$0xff]
        %v2063 = vld [vmem:[%s2056 + $0x30] sm:$0xff]
        %v2064 = vld [vmem:[%s2056 + $0x38] sm:$0xff]
        %v2065 = vld [vmem:[%s2056 + $0x40] sm:$0xff]
        %v2066 = vld [vmem:[%s2056 + $0x48] sm:$0xff]
        %v2067 = vld [vmem:[%s2056 + $0x50] sm:$0xff]
        %v2068 = vld [vmem:[%s2056 + $0x58] sm:$0xff]
        %v2069 = vld [vmem:[%s2056 + $0x60] sm:$0xff]
        %v2070 = vld [vmem:[%s2056 + $0x68] sm:$0xff]
        %v2071 = vld [vmem:[%s2056 + $0x70] sm:$0xff]
        %v2072 = vld [vmem:[%s2056 + $0x78] sm:$0xff]
        %2073 = vmatprep.subr.mxu0 0.0
        %2074 = vmatpush1.msra.mxu0 %v2072
        %2075 = vmatprep.subr.mxu0 0.0
        %2076 = vmatpush1.msra.mxu0 %v2071
        %2077 = vmatprep.subr.mxu0 0.0
        %2078 = vmatpush1.msra.mxu0 %v2070
        %2079 = vmatprep.subr.mxu0 0.0
        %2080 = vmatpush1.msra.mxu0 %v2069
        %2081 = vmatprep.subr.mxu0 0.0
        %2082 = vmatpush1.msra.mxu0 %v2068
        %2083 = vmatprep.subr.mxu0 0.0
        %2084 = vmatpush1.msra.mxu0 %v2067
        %2085 = vmatprep.subr.mxu0 0.0
        %2086 = vmatpush1.msra.mxu0 %v2066
        %2087 = vmatprep.subr.mxu0 0.0
        %2088 = vmatpush1.msra.mxu0 %v2065
        %2089 = vmatprep.subr.mxu0 0.0
        %2090 = vmatpush1.msra.mxu0 %v2064
        %2091 = vmatprep.subr.mxu0 0.0
        %2092 = vmatpush1.msra.mxu0 %v2063
        %2093 = vmatprep.subr.mxu0 0.0
        %2094 = vmatpush1.msra.mxu0 %v2062
        %2095 = vmatprep.subr.mxu0 0.0
        %2096 = vmatpush1.msra.mxu0 %v2061
        %2097 = vmatprep.subr.mxu0 0.0
        %2098 = vmatpush1.msra.mxu0 %v2060
        %2099 = vmatprep.subr.mxu0 0.0
        %2100 = vmatpush1.msra.mxu0 %v2059
        %2101 = vmatprep.subr.mxu0 0.0
        %2102 = vmatpush1.msra.mxu0 %v2058
        %2103 = vmatprep.subr.mxu0 0.0
        %2104 = vmatpush1.msra.mxu0 %v2057
        %2105 = vmatprep.subr.mxu0 0.0
        %2106 = vmatpush2.msra.mxu0 0.0
        %2107 = vmatprep.subr.mxu0 0.0
        %2108 = vmatpush2.msra.mxu0 0.0
        %2109 = vmatprep.subr.mxu0 0.0
        %2110 = vmatpush2.msra.mxu0 0.0
        %2111 = vmatprep.subr.mxu0 0.0
        %2112 = vmatpush2.msra.mxu0 0.0
        %2113 = vmatprep.subr.mxu0 0.0
        %2114 = vmatpush2.msra.mxu0 0.0
        %2115 = vmatprep.subr.mxu0 0.0
        %2116 = vmatpush2.msra.mxu0 0.0
        %2117 = vmatprep.subr.mxu0 0.0
        %2118 = vmatpush2.msra.mxu0 0.0
        %2119 = vmatprep.subr.mxu0 0.0
        %2120 = vmatpush2.msra.mxu0 0.0
        %2121 = vmatprep.subr.mxu0 0.0
        %2122 = vmatpush2.msra.mxu0 0.0
        %2123 = vmatprep.subr.mxu0 0.0
        %2124 = vmatpush2.msra.mxu0 0.0
        %2125 = vmatprep.subr.mxu0 0.0
        %2126 = vmatpush2.msra.mxu0 0.0
        %2127 = vmatprep.subr.mxu0 0.0
        %2128 = vmatpush2.msra.mxu0 0.0
        %2129 = vmatprep.subr.mxu0 0.0
        %2130 = vmatpush2.msra.mxu0 0.0
        %2131 = vmatprep.subr.mxu0 0.0
        %2132 = vmatpush2.msra.mxu0 0.0
        %2133 = vmatprep.subr.mxu0 0.0
        %2134 = vmatpush2.msra.mxu0 0.0
        %2135 = vmatprep.subr.mxu0 0.0
        %2136 = vmatpush2.msra.mxu0 0.0
        %2137 = vmatprep.mubr.f32.mxu0 0.0
        %2138 = vmatmul.mubr.f32.gmra.mxu0 %v1960
        %v2139 = vpop.f32.mrf.mxu0
        %v2140 = vadd.f32 0.0, %v2139
        %v2141 = vpop.f32.mrf.mxu0
        %2142 = vmatprep.mubr.f32.mxu0 0.0
        %2143 = vmatmul.mubr.f32.gmra.mxu0 %v1961
        %v2144 = vpop.f32.mrf.mxu0
        %v2145 = vadd.f32 0.0, %v2144
        %v2146 = vpop.f32.mrf.mxu0
        %2147 = vdwg.mxu0
        %v2148 = vadd.f32 %v1958, %v2140
        %v2149 = vadd.f32 %v1959, %v2145
        %v2150 = vld [vmem:[%s639 + $0x8] sm:$0xff]
        %v2151 = vld [vmem:[%s639 + $0x10] sm:$0xff]
        %s2152 = scalar_lea.vmem [#allocation2], 1024
        %v2153 = vld [vmem:[%s2152] sm:$0xff]
        %v2154 = vld [vmem:[%s2152 + $0x8] sm:$0xff]
        %v2155 = vld [vmem:[%s2152 + $0x10] sm:$0xff]
        %v2156 = vld [vmem:[%s2152 + $0x18] sm:$0xff]
        %v2157 = vld [vmem:[%s2152 + $0x20] sm:$0xff]
        %v2158 = vld [vmem:[%s2152 + $0x28] sm:$0xff]
        %v2159 = vld [vmem:[%s2152 + $0x30] sm:$0xff]
        %v2160 = vld [vmem:[%s2152 + $0x38] sm:$0xff]
        %v2161 = vld [vmem:[%s2152 + $0x40] sm:$0xff]
        %v2162 = vld [vmem:[%s2152 + $0x48] sm:$0xff]
        %v2163 = vld [vmem:[%s2152 + $0x50] sm:$0xff]
        %v2164 = vld [vmem:[%s2152 + $0x58] sm:$0xff]
        %v2165 = vld [vmem:[%s2152 + $0x60] sm:$0xff]
        %v2166 = vld [vmem:[%s2152 + $0x68] sm:$0xff]
        %v2167 = vld [vmem:[%s2152 + $0x70] sm:$0xff]
        %v2168 = vld [vmem:[%s2152 + $0x78] sm:$0xff]
        %2169 = vmatprep.subr.mxu0 0.0
        %2170 = vmatpush1.msra.mxu0 %v2168
        %2171 = vmatprep.subr.mxu0 0.0
        %2172 = vmatpush1.msra.mxu0 %v2167
        %2173 = vmatprep.subr.mxu0 0.0
        %2174 = vmatpush1.msra.mxu0 %v2166
        %2175 = vmatprep.subr.mxu0 0.0
        %2176 = vmatpush1.msra.mxu0 %v2165
        %2177 = vmatprep.subr.mxu0 0.0
        %2178 = vmatpush1.msra.mxu0 %v2164
        %2179 = vmatprep.subr.mxu0 0.0
        %2180 = vmatpush1.msra.mxu0 %v2163
        %2181 = vmatprep.subr.mxu0 0.0
        %2182 = vmatpush1.msra.mxu0 %v2162
        %2183 = vmatprep.subr.mxu0 0.0
        %2184 = vmatpush1.msra.mxu0 %v2161
        %2185 = vmatprep.subr.mxu0 0.0
        %2186 = vmatpush1.msra.mxu0 %v2160
        %2187 = vmatprep.subr.mxu0 0.0
        %2188 = vmatpush1.msra.mxu0 %v2159
        %2189 = vmatprep.subr.mxu0 0.0
        %2190 = vmatpush1.msra.mxu0 %v2158
        %2191 = vmatprep.subr.mxu0 0.0
        %2192 = vmatpush1.msra.mxu0 %v2157
        %2193 = vmatprep.subr.mxu0 0.0
        %2194 = vmatpush1.msra.mxu0 %v2156
        %2195 = vmatprep.subr.mxu0 0.0
        %2196 = vmatpush1.msra.mxu0 %v2155
        %2197 = vmatprep.subr.mxu0 0.0
        %2198 = vmatpush1.msra.mxu0 %v2154
        %2199 = vmatprep.subr.mxu0 0.0
        %2200 = vmatpush1.msra.mxu0 %v2153
        %2201 = vmatprep.subr.mxu0 0.0
        %2202 = vmatpush2.msra.mxu0 0.0
        %2203 = vmatprep.subr.mxu0 0.0
        %2204 = vmatpush2.msra.mxu0 0.0
        %2205 = vmatprep.subr.mxu0 0.0
        %2206 = vmatpush2.msra.mxu0 0.0
        %2207 = vmatprep.subr.mxu0 0.0
        %2208 = vmatpush2.msra.mxu0 0.0
        %2209 = vmatprep.subr.mxu0 0.0
        %2210 = vmatpush2.msra.mxu0 0.0
        %2211 = vmatprep.subr.mxu0 0.0
        %2212 = vmatpush2.msra.mxu0 0.0
        %2213 = vmatprep.subr.mxu0 0.0
        %2214 = vmatpush2.msra.mxu0 0.0
        %2215 = vmatprep.subr.mxu0 0.0
        %2216 = vmatpush2.msra.mxu0 0.0
        %2217 = vmatprep.subr.mxu0 0.0
        %2218 = vmatpush2.msra.mxu0 0.0
        %2219 = vmatprep.subr.mxu0 0.0
        %2220 = vmatpush2.msra.mxu0 0.0
        %2221 = vmatprep.subr.mxu0 0.0
        %2222 = vmatpush2.msra.mxu0 0.0
        %2223 = vmatprep.subr.mxu0 0.0
        %2224 = vmatpush2.msra.mxu0 0.0
        %2225 = vmatprep.subr.mxu0 0.0
        %2226 = vmatpush2.msra.mxu0 0.0
        %2227 = vmatprep.subr.mxu0 0.0
        %2228 = vmatpush2.msra.mxu0 0.0
        %2229 = vmatprep.subr.mxu0 0.0
        %2230 = vmatpush2.msra.mxu0 0.0
        %2231 = vmatprep.subr.mxu0 0.0
        %2232 = vmatpush2.msra.mxu0 0.0
        %2233 = vmatprep.mubr.f32.mxu0 0.0
        %2234 = vmatmul.mubr.f32.gmra.mxu0 %v2150
        %v2235 = vpop.f32.mrf.mxu0
        %v2236 = vadd.f32 0.0, %v2235
        %v2237 = vpop.f32.mrf.mxu0
        %2238 = vmatprep.mubr.f32.mxu0 0.0
        %2239 = vmatmul.mubr.f32.gmra.mxu0 %v2151
        %v2240 = vpop.f32.mrf.mxu0
        %v2241 = vadd.f32 0.0, %v2240
        %v2242 = vpop.f32.mrf.mxu0
        %2243 = vdwg.mxu0
        %v2244 = vadd.f32 %v2054, %v2236
        %v2245 = vadd.f32 %v2055, %v2241
        %s2246 = scalar_lea.vmem [#allocation5], 1024
        %v2247 = vld [vmem:[%s2246] sm:$0xff]
        %v2248 = vld [vmem:[%s2246 + $0x8] sm:$0xff]
        %v2249 = vld [vmem:[%s2246 + $0x10] sm:$0xff]
        %v2250 = vld [vmem:[%s2246 + $0x18] sm:$0xff]
        %v2251 = vld [vmem:[%s2246 + $0x20] sm:$0xff]
        %v2252 = vld [vmem:[%s2246 + $0x28] sm:$0xff]
        %v2253 = vld [vmem:[%s2246 + $0x30] sm:$0xff]
        %v2254 = vld [vmem:[%s2246 + $0x38] sm:$0xff]
        %v2255 = vld [vmem:[%s2246 + $0x40] sm:$0xff]
        %v2256 = vld [vmem:[%s2246 + $0x48] sm:$0xff]
        %v2257 = vld [vmem:[%s2246 + $0x50] sm:$0xff]
        %v2258 = vld [vmem:[%s2246 + $0x58] sm:$0xff]
        %v2259 = vld [vmem:[%s2246 + $0x60] sm:$0xff]
        %v2260 = vld [vmem:[%s2246 + $0x68] sm:$0xff]
        %v2261 = vld [vmem:[%s2246 + $0x70] sm:$0xff]
        %v2262 = vld [vmem:[%s2246 + $0x78] sm:$0xff]
        %2263 = vmatprep.subr.mxu0 0.0
        %2264 = vmatpush1.msra.mxu0 %v2262
        %2265 = vmatprep.subr.mxu0 0.0
        %2266 = vmatpush1.msra.mxu0 %v2261
        %2267 = vmatprep.subr.mxu0 0.0
        %2268 = vmatpush1.msra.mxu0 %v2260
        %2269 = vmatprep.subr.mxu0 0.0
        %2270 = vmatpush1.msra.mxu0 %v2259
        %2271 = vmatprep.subr.mxu0 0.0
        %2272 = vmatpush1.msra.mxu0 %v2258
        %2273 = vmatprep.subr.mxu0 0.0
        %2274 = vmatpush1.msra.mxu0 %v2257
        %2275 = vmatprep.subr.mxu0 0.0
        %2276 = vmatpush1.msra.mxu0 %v2256
        %2277 = vmatprep.subr.mxu0 0.0
        %2278 = vmatpush1.msra.mxu0 %v2255
        %2279 = vmatprep.subr.mxu0 0.0
        %2280 = vmatpush1.msra.mxu0 %v2254
        %2281 = vmatprep.subr.mxu0 0.0
        %2282 = vmatpush1.msra.mxu0 %v2253
        %2283 = vmatprep.subr.mxu0 0.0
        %2284 = vmatpush1.msra.mxu0 %v2252
        %2285 = vmatprep.subr.mxu0 0.0
        %2286 = vmatpush1.msra.mxu0 %v2251
        %2287 = vmatprep.subr.mxu0 0.0
        %2288 = vmatpush1.msra.mxu0 %v2250
        %2289 = vmatprep.subr.mxu0 0.0
        %2290 = vmatpush1.msra.mxu0 %v2249
        %2291 = vmatprep.subr.mxu0 0.0
        %2292 = vmatpush1.msra.mxu0 %v2248
        %2293 = vmatprep.subr.mxu0 0.0
        %2294 = vmatpush1.msra.mxu0 %v2247
        %2295 = vmatprep.subr.mxu0 0.0
        %2296 = vmatpush2.msra.mxu0 0.0
        %2297 = vmatprep.subr.mxu0 0.0
        %2298 = vmatpush2.msra.mxu0 0.0
        %2299 = vmatprep.subr.mxu0 0.0
        %2300 = vmatpush2.msra.mxu0 0.0
        %2301 = vmatprep.subr.mxu0 0.0
        %2302 = vmatpush2.msra.mxu0 0.0
        %2303 = vmatprep.subr.mxu0 0.0
        %2304 = vmatpush2.msra.mxu0 0.0
        %2305 = vmatprep.subr.mxu0 0.0
        %2306 = vmatpush2.msra.mxu0 0.0
        %2307 = vmatprep.subr.mxu0 0.0
        %2308 = vmatpush2.msra.mxu0 0.0
        %2309 = vmatprep.subr.mxu0 0.0
        %2310 = vmatpush2.msra.mxu0 0.0
        %2311 = vmatprep.subr.mxu0 0.0
        %2312 = vmatpush2.msra.mxu0 0.0
        %2313 = vmatprep.subr.mxu0 0.0
        %2314 = vmatpush2.msra.mxu0 0.0
        %2315 = vmatprep.subr.mxu0 0.0
        %2316 = vmatpush2.msra.mxu0 0.0
        %2317 = vmatprep.subr.mxu0 0.0
        %2318 = vmatpush2.msra.mxu0 0.0
        %2319 = vmatprep.subr.mxu0 0.0
        %2320 = vmatpush2.msra.mxu0 0.0
        %2321 = vmatprep.subr.mxu0 0.0
        %2322 = vmatpush2.msra.mxu0 0.0
        %2323 = vmatprep.subr.mxu0 0.0
        %2324 = vmatpush2.msra.mxu0 0.0
        %2325 = vmatprep.subr.mxu0 0.0
        %2326 = vmatpush2.msra.mxu0 0.0
        %2327 = vmatprep.mubr.f32.mxu0 0.0
        %2328 = vmatmul.mubr.f32.gmra.mxu0 %v2150
        %v2329 = vpop.f32.mrf.mxu0
        %v2330 = vadd.f32 0.0, %v2329
        %v2331 = vpop.f32.mrf.mxu0
        %2332 = vmatprep.mubr.f32.mxu0 0.0
        %2333 = vmatmul.mubr.f32.gmra.mxu0 %v2151
        %v2334 = vpop.f32.mrf.mxu0
        %v2335 = vadd.f32 0.0, %v2334
        %v2336 = vpop.f32.mrf.mxu0
        %2337 = vdwg.mxu0
        %v2338 = vadd.f32 %v2148, %v2330
        %v2339 = vadd.f32 %v2149, %v2335
        %v2340 = vld [vmem:[%s2] sm:$0x1]
        %v2342 = vlaneseq
        %v2343 = vshrl.u32 %v2342, 7
        %v2344 = vsub.s32 0, %v2343
        %v2345 = vrot.slane %v2340, %v2344
        %v2347 = vadd.f32 %v2244, %v2345
        %v2348 = vadd.f32 %v2245, %v2345
        %v2349 = vld [vmem:[%s4] sm:$0x1]
        %v2351 = vlaneseq
        %v2352 = vshrl.u32 %v2351, 7
        %v2353 = vsub.s32 0, %v2352
        %v2354 = vrot.slane %v2349, %v2353
        %v2356 = vadd.f32 %v2338, %v2354
        %v2357 = vadd.f32 %v2339, %v2354
        %v2358 = vmax.f32 %v2356, %v2357
        %v2359 = vrot.slane %v2358, 4
        %v2360 = vmax.f32 %v2358, %v2359
        %v2361 = vrot.slane %v2360, 2
        %v2362 = vmax.f32 %v2360, %v2361
        %v2363 = vrot.slane %v2362, 1
        %v2364 = vmax.f32 %v2362, %v2363
        %v2365 = vsub.f32 %v2356, %v2364
        %v2366 = vsub.f32 %v2357, %v2364
        %v2367 = vmul.f32 %v2365, 1.442695
        %v2368 = vpow.pop %v2367
        %v2369 = vmul.f32 %v2366, 1.442695
        %v2370 = vpow.pop %v2369
        %v2371 = vadd.f32 %v2368, %v2370
        %v2372 = vrot.slane %v2371, 4
        %v2373 = vadd.f32 %v2371, %v2372
        %v2374 = vrot.slane %v2373, 2
        %v2375 = vadd.f32 %v2373, %v2374
        %v2376 = vrot.slane %v2375, 1
        %v2377 = vadd.f32 %v2375, %v2376
        %v2378 = vrcp.pop %v2377
        %v2379 = vmul.f32 %v2368, %v2378
        %v2380 = vmul.f32 %v2370, %v2378
        %v2381 = vmul.f32 %v2347, %v2379
        %v2382 = vmul.f32 %v2348, %v2380
        %v2383 = vadd.f32 %v2381, %v2382
        %v2384 = vrot.slane %v2383, 4
        %v2385 = vadd.f32 %v2383, %v2384
        %v2386 = vrot.slane %v2385, 2
        %v2387 = vadd.f32 %v2385, %v2386
        %v2388 = vrot.slane %v2387, 1
        %v2389 = vadd.f32 %v2387, %v2388
        %v2390 = vmax.f32 %v2347, %v2348
        %v2391 = vrot.slane %v2390, 4
        %v2392 = vmax.f32 %v2390, %v2391
        %v2393 = vrot.slane %v2392, 2
        %v2394 = vmax.f32 %v2392, %v2393
        %v2395 = vrot.slane %v2394, 1
        %v2396 = vmax.f32 %v2394, %v2395
        %v2397 = vld [vmem:[%s5] sm:$0xff]
        %v2398 = vld [vmem:[%s5 + $0x8] sm:$0xff]
        %v2399 = vld [vmem:[%s5 + $0x10] sm:$0xff]
        %v2400 = vld [vmem:[%s5 + $0x18] sm:$0xff]
        %v2401 = vld [vmem:[%s5 + $0x20] sm:$0xff]
        %v2402 = vld [vmem:[%s5 + $0x28] sm:$0xff]
        %v2403 = vld [vmem:[%s5 + $0x30] sm:$0xff]
        %v2404 = vld [vmem:[%s5 + $0x38] sm:$0xff]
        %v2405 = vld [vmem:[%s5 + $0x40] sm:$0xff]
        %v2406 = vld [vmem:[%s5 + $0x48] sm:$0xff]
        %v2407 = vld [vmem:[%s5 + $0x50] sm:$0xff]
        %v2408 = vld [vmem:[%s5 + $0x58] sm:$0xff]
        %v2409 = vld [vmem:[%s5 + $0x60] sm:$0xff]
        %v2410 = vld [vmem:[%s5 + $0x68] sm:$0xff]
        %v2411 = vld [vmem:[%s5 + $0x70] sm:$0xff]
        %v2412 = vld [vmem:[%s5 + $0x78] sm:$0xff]
        %v2413 = vld [vmem:[%s6] sm:$0xff]
        %v2414 = vld [vmem:[%s6 + $0x8] sm:$0xff]
        %v2415 = vld [vmem:[%s6 + $0x10] sm:$0xff]
        %v2416 = vld [vmem:[%s6 + $0x18] sm:$0xff]
        %v2417 = vld [vmem:[%s6 + $0x20] sm:$0xff]
        %v2418 = vld [vmem:[%s6 + $0x28] sm:$0xff]
        %v2419 = vld [vmem:[%s6 + $0x30] sm:$0xff]
        %v2420 = vld [vmem:[%s6 + $0x38] sm:$0xff]
        %v2421 = vld [vmem:[%s6 + $0x40] sm:$0xff]
        %v2422 = vld [vmem:[%s6 + $0x48] sm:$0xff]
        %v2423 = vld [vmem:[%s6 + $0x50] sm:$0xff]
        %v2424 = vld [vmem:[%s6 + $0x58] sm:$0xff]
        %v2425 = vld [vmem:[%s6 + $0x60] sm:$0xff]
        %v2426 = vld [vmem:[%s6 + $0x68] sm:$0xff]
        %v2427 = vld [vmem:[%s6 + $0x70] sm:$0xff]
        %v2428 = vld [vmem:[%s6 + $0x78] sm:$0xff]
        %2429 = vmatprep.subr.mxu0 0.0
        %2430 = vmatpush1.msra.mxu0 %v2428
        %2431 = vmatprep.subr.mxu0 0.0
        %2432 = vmatpush1.msra.mxu0 %v2427
        %2433 = vmatprep.subr.mxu0 0.0
        %2434 = vmatpush1.msra.mxu0 %v2426
        %2435 = vmatprep.subr.mxu0 0.0
        %2436 = vmatpush1.msra.mxu0 %v2425
        %2437 = vmatprep.subr.mxu0 0.0
        %2438 = vmatpush1.msra.mxu0 %v2424
        %2439 = vmatprep.subr.mxu0 0.0
        %2440 = vmatpush1.msra.mxu0 %v2423
        %2441 = vmatprep.subr.mxu0 0.0
        %2442 = vmatpush1.msra.mxu0 %v2422
        %2443 = vmatprep.subr.mxu0 0.0
        %2444 = vmatpush1.msra.mxu0 %v2421
        %2445 = vmatprep.subr.mxu0 0.0
        %2446 = vmatpush1.msra.mxu0 %v2420
        %2447 = vmatprep.subr.mxu0 0.0
        %2448 = vmatpush1.msra.mxu0 %v2419
        %2449 = vmatprep.subr.mxu0 0.0
        %2450 = vmatpush1.msra.mxu0 %v2418
        %2451 = vmatprep.subr.mxu0 0.0
        %2452 = vmatpush1.msra.mxu0 %v2417
        %2453 = vmatprep.subr.mxu0 0.0
        %2454 = vmatpush1.msra.mxu0 %v2416
        %2455 = vmatprep.subr.mxu0 0.0
        %2456 = vmatpush1.msra.mxu0 %v2415
        %2457 = vmatprep.subr.mxu0 0.0
        %2458 = vmatpush1.msra.mxu0 %v2414
        %2459 = vmatprep.subr.mxu0 0.0
        %2460 = vmatpush1.msra.mxu0 %v2413
        %2461 = vmatprep.subr.mxu0 0.0
        %2462 = vmatpush2.msra.mxu0 0.0
        %2463 = vmatprep.subr.mxu0 0.0
        %2464 = vmatpush2.msra.mxu0 0.0
        %2465 = vmatprep.subr.mxu0 0.0
        %2466 = vmatpush2.msra.mxu0 0.0
        %2467 = vmatprep.subr.mxu0 0.0
        %2468 = vmatpush2.msra.mxu0 0.0
        %2469 = vmatprep.subr.mxu0 0.0
        %2470 = vmatpush2.msra.mxu0 0.0
        %2471 = vmatprep.subr.mxu0 0.0
        %2472 = vmatpush2.msra.mxu0 0.0
        %2473 = vmatprep.subr.mxu0 0.0
        %2474 = vmatpush2.msra.mxu0 0.0
        %2475 = vmatprep.subr.mxu0 0.0
        %2476 = vmatpush2.msra.mxu0 0.0
        %2477 = vmatprep.subr.mxu0 0.0
        %2478 = vmatpush2.msra.mxu0 0.0
        %2479 = vmatprep.subr.mxu0 0.0
        %2480 = vmatpush2.msra.mxu0 0.0
        %2481 = vmatprep.subr.mxu0 0.0
        %2482 = vmatpush2.msra.mxu0 0.0
        %2483 = vmatprep.subr.mxu0 0.0
        %2484 = vmatpush2.msra.mxu0 0.0
        %2485 = vmatprep.subr.mxu0 0.0
        %2486 = vmatpush2.msra.mxu0 0.0
        %2487 = vmatprep.subr.mxu0 0.0
        %2488 = vmatpush2.msra.mxu0 0.0
        %2489 = vmatprep.subr.mxu0 0.0
        %2490 = vmatpush2.msra.mxu0 0.0
        %2491 = vmatprep.subr.mxu0 0.0
        %2492 = vmatpush2.msra.mxu0 0.0
        %2493 = vmatprep.mubr.f32.mxu0 0.0
        %2494 = vmatmul.mubr.f32.gmra.mxu0 %v2396
        %v2495 = vpop.f32.mrf.mxu0
        %v2496 = vadd.f32 0.0, %v2495
        %v2497 = vpop.f32.mrf.mxu0
        %2498 = vdwg.mxu0
        %2499 = vmatprep.subr.mxu0 0.0
        %2500 = vmatpush1.msra.mxu0 %v2412
        %2501 = vmatprep.subr.mxu0 0.0
        %2502 = vmatpush1.msra.mxu0 %v2411
        %2503 = vmatprep.subr.mxu0 0.0
        %2504 = vmatpush1.msra.mxu0 %v2410
        %2505 = vmatprep.subr.mxu0 0.0
        %2506 = vmatpush1.msra.mxu0 %v2409
        %2507 = vmatprep.subr.mxu0 0.0
        %2508 = vmatpush1.msra.mxu0 %v2408
        %2509 = vmatprep.subr.mxu0 0.0
        %2510 = vmatpush1.msra.mxu0 %v2407
        %2511 = vmatprep.subr.mxu0 0.0
        %2512 = vmatpush1.msra.mxu0 %v2406
        %2513 = vmatprep.subr.mxu0 0.0
        %2514 = vmatpush1.msra.mxu0 %v2405
        %2515 = vmatprep.subr.mxu0 0.0
        %2516 = vmatpush1.msra.mxu0 %v2404
        %2517 = vmatprep.subr.mxu0 0.0
        %2518 = vmatpush1.msra.mxu0 %v2403
        %2519 = vmatprep.subr.mxu0 0.0
        %2520 = vmatpush1.msra.mxu0 %v2402
        %2521 = vmatprep.subr.mxu0 0.0
        %2522 = vmatpush1.msra.mxu0 %v2401
        %2523 = vmatprep.subr.mxu0 0.0
        %2524 = vmatpush1.msra.mxu0 %v2400
        %2525 = vmatprep.subr.mxu0 0.0
        %2526 = vmatpush1.msra.mxu0 %v2399
        %2527 = vmatprep.subr.mxu0 0.0
        %2528 = vmatpush1.msra.mxu0 %v2398
        %2529 = vmatprep.subr.mxu0 0.0
        %2530 = vmatpush1.msra.mxu0 %v2397
        %2531 = vmatprep.subr.mxu0 0.0
        %2532 = vmatpush2.msra.mxu0 0.0
        %2533 = vmatprep.subr.mxu0 0.0
        %2534 = vmatpush2.msra.mxu0 0.0
        %2535 = vmatprep.subr.mxu0 0.0
        %2536 = vmatpush2.msra.mxu0 0.0
        %2537 = vmatprep.subr.mxu0 0.0
        %2538 = vmatpush2.msra.mxu0 0.0
        %2539 = vmatprep.subr.mxu0 0.0
        %2540 = vmatpush2.msra.mxu0 0.0
        %2541 = vmatprep.subr.mxu0 0.0
        %2542 = vmatpush2.msra.mxu0 0.0
        %2543 = vmatprep.subr.mxu0 0.0
        %2544 = vmatpush2.msra.mxu0 0.0
        %2545 = vmatprep.subr.mxu0 0.0
        %2546 = vmatpush2.msra.mxu0 0.0
        %2547 = vmatprep.subr.mxu0 0.0
        %2548 = vmatpush2.msra.mxu0 0.0
        %2549 = vmatprep.subr.mxu0 0.0
        %2550 = vmatpush2.msra.mxu0 0.0
        %2551 = vmatprep.subr.mxu0 0.0
        %2552 = vmatpush2.msra.mxu0 0.0
        %2553 = vmatprep.subr.mxu0 0.0
        %2554 = vmatpush2.msra.mxu0 0.0
        %2555 = vmatprep.subr.mxu0 0.0
        %2556 = vmatpush2.msra.mxu0 0.0
        %2557 = vmatprep.subr.mxu0 0.0
        %2558 = vmatpush2.msra.mxu0 0.0
        %2559 = vmatprep.subr.mxu0 0.0
        %2560 = vmatpush2.msra.mxu0 0.0
        %2561 = vmatprep.subr.mxu0 0.0
        %2562 = vmatpush2.msra.mxu0 0.0
        %2563 = vmatprep.mubr.f32.mxu0 0.0
        %2564 = vmatmul.mubr.f32.gmra.mxu0 %v2389
        %v2565 = vpop.f32.mrf.mxu0
        %v2566 = vadd.f32 %v2496, %v2565
        %v2567 = vpop.f32.mrf.mxu0
        %2568 = vdwg.mxu0
        %v2569 = vld [vmem:[%s7] sm:$0x1]
        %v2570 = vadd.f32 %v2566, %v2569
        %v2571 = vmax.f32 %v2570, 0.0
        %v2572 = vld [vmem:[%s8] sm:$0x1]
        %v2573 = vmul.f32 %v2571, %v2572
        %v2574 = vld [vmem:[%s9] sm:$0x1]
        %v2575 = vadd.f32 %v2573, %v2574
        %v2576 = vld [vmem:[%s10] sm:$0xff]
        %v2577 = vld [vmem:[%s10 + $0x8] sm:$0xff]
        %v2578 = vld [vmem:[%s10 + $0x10] sm:$0xff]
        %v2579 = vld [vmem:[%s10 + $0x18] sm:$0xff]
        %v2580 = vld [vmem:[%s11] sm:$0x1]
        %vm2581 = vcmask 261120
        %v2583 = vsel %vm2581, %v2575, 0
        %2585 = vmatprep.subr.mxu0 0.0
        %2586 = vmatpush1.msra.mxu0 0.0
        %2587 = vmatprep.subr.mxu0 0.0
        %2588 = vmatpush1.msra.mxu0 0.0
        %2589 = vmatprep.subr.mxu0 0.0
        %2590 = vmatpush1.msra.mxu0 0.0
        %2591 = vmatprep.subr.mxu0 0.0
        %2592 = vmatpush1.msra.mxu0 0.0
        %2593 = vmatprep.subr.mxu0 0.0
        %2594 = vmatpush1.msra.mxu0 0.0
        %2595 = vmatprep.subr.mxu0 0.0
        %2596 = vmatpush1.msra.mxu0 0.0
        %2597 = vmatprep.subr.mxu0 0.0
        %2598 = vmatpush1.msra.mxu0 0.0
        %2599 = vmatprep.subr.mxu0 0.0
        %2600 = vmatpush1.msra.mxu0 0.0
        %2601 = vmatprep.subr.mxu0 0.0
        %2602 = vmatpush1.msra.mxu0 0.0
        %2603 = vmatprep.subr.mxu0 0.0
        %2604 = vmatpush1.msra.mxu0 0.0
        %2605 = vmatprep.subr.mxu0 0.0
        %2606 = vmatpush1.msra.mxu0 0.0
        %2607 = vmatprep.subr.mxu0 0.0
        %2608 = vmatpush1.msra.mxu0 0.0
        %2609 = vmatprep.subr.mxu0 0.0
        %2610 = vmatpush1.msra.mxu0 %v2579
        %2611 = vmatprep.subr.mxu0 0.0
        %2612 = vmatpush1.msra.mxu0 %v2578
        %2613 = vmatprep.subr.mxu0 0.0
        %2614 = vmatpush1.msra.mxu0 %v2577
        %2615 = vmatprep.subr.mxu0 0.0
        %2616 = vmatpush1.msra.mxu0 %v2576
        %2617 = vmatprep.subr.mxu0 0.0
        %2618 = vmatpush2.msra.mxu0 0.0
        %2619 = vmatprep.subr.mxu0 0.0
        %2620 = vmatpush2.msra.mxu0 0.0
        %2621 = vmatprep.subr.mxu0 0.0
        %2622 = vmatpush2.msra.mxu0 0.0
        %2623 = vmatprep.subr.mxu0 0.0
        %2624 = vmatpush2.msra.mxu0 0.0
        %2625 = vmatprep.subr.mxu0 0.0
        %2626 = vmatpush2.msra.mxu0 0.0
        %2627 = vmatprep.subr.mxu0 0.0
        %2628 = vmatpush2.msra.mxu0 0.0
        %2629 = vmatprep.subr.mxu0 0.0
        %2630 = vmatpush2.msra.mxu0 0.0
        %2631 = vmatprep.subr.mxu0 0.0
        %2632 = vmatpush2.msra.mxu0 0.0
        %2633 = vmatprep.subr.mxu0 0.0
        %2634 = vmatpush2.msra.mxu0 0.0
        %2635 = vmatprep.subr.mxu0 0.0
        %2636 = vmatpush2.msra.mxu0 0.0
        %2637 = vmatprep.subr.mxu0 0.0
        %2638 = vmatpush2.msra.mxu0 0.0
        %2639 = vmatprep.subr.mxu0 0.0
        %2640 = vmatpush2.msra.mxu0 0.0
        %2641 = vmatprep.subr.mxu0 0.0
        %2642 = vmatpush2.msra.mxu0 0.0
        %2643 = vmatprep.subr.mxu0 0.0
        %2644 = vmatpush2.msra.mxu0 0.0
        %2645 = vmatprep.subr.mxu0 0.0
        %2646 = vmatpush2.msra.mxu0 0.0
        %2647 = vmatprep.subr.mxu0 0.0
        %2648 = vmatpush2.msra.mxu0 0.0
        %2649 = vmatprep.mubr.f32.mxu0 0.0
        %2650 = vmatmul.mubr.f32.gmra.mxu0 %v2583
        %v2651 = vpop.f32.mrf.mxu0
        %v2652 = vadd.f32 %v2580, %v2651
        %v2653 = vpop.f32.mrf.mxu0
        %2654 = vdwg.mxu0
        %v2655 = vld [vmem:[%s12] sm:$0xff]
        %v2656 = vld [vmem:[%s12 + $0x8] sm:$0xff]
        %v2657 = vld [vmem:[%s12 + $0x10] sm:$0xff]
        %v2658 = vld [vmem:[%s12 + $0x18] sm:$0xff]
        %v2659 = vld [vmem:[%s12 + $0x20] sm:$0xff]
        %v2660 = vld [vmem:[%s12 + $0x28] sm:$0xff]
        %v2661 = vld [vmem:[%s12 + $0x30] sm:$0xff]
        %v2662 = vld [vmem:[%s12 + $0x38] sm:$0xff]
        %v2663 = vld [vmem:[%s12 + $0x40] sm:$0xff]
        %v2664 = vld [vmem:[%s12 + $0x48] sm:$0xff]
        %v2665 = vld [vmem:[%s12 + $0x50] sm:$0xff]
        %v2666 = vld [vmem:[%s12 + $0x58] sm:$0xff]
        %v2667 = vld [vmem:[%s12 + $0x60] sm:$0xff]
        %v2668 = vld [vmem:[%s12 + $0x68] sm:$0xff]
        %v2669 = vld [vmem:[%s12 + $0x70] sm:$0xff]
        %v2670 = vld [vmem:[%s12 + $0x78] sm:$0xff]
        %v2671 = vld [vmem:[%s13] sm:$0x1]
        %2672 = vmatprep.subr.mxu0 0.0
        %2673 = vmatpush1.msra.mxu0 %v2670
        %2674 = vmatprep.subr.mxu0 0.0
        %2675 = vmatpush1.msra.mxu0 %v2669
        %2676 = vmatprep.subr.mxu0 0.0
        %2677 = vmatpush1.msra.mxu0 %v2668
        %2678 = vmatprep.subr.mxu0 0.0
        %2679 = vmatpush1.msra.mxu0 %v2667
        %2680 = vmatprep.subr.mxu0 0.0
        %2681 = vmatpush1.msra.mxu0 %v2666
        %2682 = vmatprep.subr.mxu0 0.0
        %2683 = vmatpush1.msra.mxu0 %v2665
        %2684 = vmatprep.subr.mxu0 0.0
        %2685 = vmatpush1.msra.mxu0 %v2664
        %2686 = vmatprep.subr.mxu0 0.0
        %2687 = vmatpush1.msra.mxu0 %v2663
        %2688 = vmatprep.subr.mxu0 0.0
        %2689 = vmatpush1.msra.mxu0 %v2662
        %2690 = vmatprep.subr.mxu0 0.0
        %2691 = vmatpush1.msra.mxu0 %v2661
        %2692 = vmatprep.subr.mxu0 0.0
        %2693 = vmatpush1.msra.mxu0 %v2660
        %2694 = vmatprep.subr.mxu0 0.0
        %2695 = vmatpush1.msra.mxu0 %v2659
        %2696 = vmatprep.subr.mxu0 0.0
        %2697 = vmatpush1.msra.mxu0 %v2658
        %2698 = vmatprep.subr.mxu0 0.0
        %2699 = vmatpush1.msra.mxu0 %v2657
        %2700 = vmatprep.subr.mxu0 0.0
        %2701 = vmatpush1.msra.mxu0 %v2656
        %2702 = vmatprep.subr.mxu0 0.0
        %2703 = vmatpush1.msra.mxu0 %v2655
        %2704 = vmatprep.subr.mxu0 0.0
        %2705 = vmatpush2.msra.mxu0 0.0
        %2706 = vmatprep.subr.mxu0 0.0
        %2707 = vmatpush2.msra.mxu0 0.0
        %2708 = vmatprep.subr.mxu0 0.0
        %2709 = vmatpush2.msra.mxu0 0.0
        %2710 = vmatprep.subr.mxu0 0.0
        %2711 = vmatpush2.msra.mxu0 0.0
        %2712 = vmatprep.subr.mxu0 0.0
        %2713 = vmatpush2.msra.mxu0 0.0
        %2714 = vmatprep.subr.mxu0 0.0
        %2715 = vmatpush2.msra.mxu0 0.0
        %2716 = vmatprep.subr.mxu0 0.0
        %2717 = vmatpush2.msra.mxu0 0.0
        %2718 = vmatprep.subr.mxu0 0.0
        %2719 = vmatpush2.msra.mxu0 0.0
        %2720 = vmatprep.subr.mxu0 0.0
        %2721 = vmatpush2.msra.mxu0 0.0
        %2722 = vmatprep.subr.mxu0 0.0
        %2723 = vmatpush2.msra.mxu0 0.0
        %2724 = vmatprep.subr.mxu0 0.0
        %2725 = vmatpush2.msra.mxu0 0.0
        %2726 = vmatprep.subr.mxu0 0.0
        %2727 = vmatpush2.msra.mxu0 0.0
        %2728 = vmatprep.subr.mxu0 0.0
        %2729 = vmatpush2.msra.mxu0 0.0
        %2730 = vmatprep.subr.mxu0 0.0
        %2731 = vmatpush2.msra.mxu0 0.0
        %2732 = vmatprep.subr.mxu0 0.0
        %2733 = vmatpush2.msra.mxu0 0.0
        %2734 = vmatprep.subr.mxu0 0.0
        %2735 = vmatpush2.msra.mxu0 0.0
        %2736 = vmatprep.mubr.f32.mxu0 0.0
        %2737 = vmatmul.mubr.f32.gmra.mxu0 %v2652
        %v2738 = vpop.f32.mrf.mxu0
        %v2739 = vadd.f32 %v2671, %v2738
        %v2740 = vpop.f32.mrf.mxu0
        %2741 = vdwg.mxu0
        %vm2742 = vcmp.gt.f32.partialorder %v2739, 0.0
        %v2743 = vmul.f32 %v2739, 0.1
        %v2744 = vsel %vm2742, %v2739, %v2743
        %v2745 = vld [vmem:[%s14] sm:$0xff]
        %v2746 = vld [vmem:[%s14 + $0x8] sm:$0xff]
        %v2747 = vld [vmem:[%s14 + $0x10] sm:$0xff]
        %v2748 = vld [vmem:[%s14 + $0x18] sm:$0xff]
        %v2749 = vld [vmem:[%s14 + $0x20] sm:$0xff]
        %v2750 = vld [vmem:[%s14 + $0x28] sm:$0xff]
        %v2751 = vld [vmem:[%s14 + $0x30] sm:$0xff]
        %v2752 = vld [vmem:[%s14 + $0x38] sm:$0xff]
        %v2753 = vld [vmem:[%s14 + $0x40] sm:$0xff]
        %v2754 = vld [vmem:[%s14 + $0x48] sm:$0xff]
        %v2755 = vld [vmem:[%s14 + $0x50] sm:$0xff]
        %v2756 = vld [vmem:[%s14 + $0x58] sm:$0xff]
        %v2757 = vld [vmem:[%s14 + $0x60] sm:$0xff]
        %v2758 = vld [vmem:[%s14 + $0x68] sm:$0xff]
        %v2759 = vld [vmem:[%s14 + $0x70] sm:$0xff]
        %v2760 = vld [vmem:[%s14 + $0x78] sm:$0xff]
        %v2761 = vld [vmem:[%s15] sm:$0x1]
        %2762 = vmatprep.subr.mxu0 0.0
        %2763 = vmatpush1.msra.mxu0 %v2760
        %2764 = vmatprep.subr.mxu0 0.0
        %2765 = vmatpush1.msra.mxu0 %v2759
        %2766 = vmatprep.subr.mxu0 0.0
        %2767 = vmatpush1.msra.mxu0 %v2758
        %2768 = vmatprep.subr.mxu0 0.0
        %2769 = vmatpush1.msra.mxu0 %v2757
        %2770 = vmatprep.subr.mxu0 0.0
        %2771 = vmatpush1.msra.mxu0 %v2756
        %2772 = vmatprep.subr.mxu0 0.0
        %2773 = vmatpush1.msra.mxu0 %v2755
        %2774 = vmatprep.subr.mxu0 0.0
        %2775 = vmatpush1.msra.mxu0 %v2754
        %2776 = vmatprep.subr.mxu0 0.0
        %2777 = vmatpush1.msra.mxu0 %v2753
        %2778 = vmatprep.subr.mxu0 0.0
        %2779 = vmatpush1.msra.mxu0 %v2752
        %2780 = vmatprep.subr.mxu0 0.0
        %2781 = vmatpush1.msra.mxu0 %v2751
        %2782 = vmatprep.subr.mxu0 0.0
        %2783 = vmatpush1.msra.mxu0 %v2750
        %2784 = vmatprep.subr.mxu0 0.0
        %2785 = vmatpush1.msra.mxu0 %v2749
        %2786 = vmatprep.subr.mxu0 0.0
        %2787 = vmatpush1.msra.mxu0 %v2748
        %2788 = vmatprep.subr.mxu0 0.0
        %2789 = vmatpush1.msra.mxu0 %v2747
        %2790 = vmatprep.subr.mxu0 0.0
        %2791 = vmatpush1.msra.mxu0 %v2746
        %2792 = vmatprep.subr.mxu0 0.0
        %2793 = vmatpush1.msra.mxu0 %v2745
        %2794 = vmatprep.subr.mxu0 0.0
        %2795 = vmatpush2.msra.mxu0 0.0
        %2796 = vmatprep.subr.mxu0 0.0
        %2797 = vmatpush2.msra.mxu0 0.0
        %2798 = vmatprep.subr.mxu0 0.0
        %2799 = vmatpush2.msra.mxu0 0.0
        %2800 = vmatprep.subr.mxu0 0.0
        %2801 = vmatpush2.msra.mxu0 0.0
        %2802 = vmatprep.subr.mxu0 0.0
        %2803 = vmatpush2.msra.mxu0 0.0
        %2804 = vmatprep.subr.mxu0 0.0
        %2805 = vmatpush2.msra.mxu0 0.0
        %2806 = vmatprep.subr.mxu0 0.0
        %2807 = vmatpush2.msra.mxu0 0.0
        %2808 = vmatprep.subr.mxu0 0.0
        %2809 = vmatpush2.msra.mxu0 0.0
        %2810 = vmatprep.subr.mxu0 0.0
        %2811 = vmatpush2.msra.mxu0 0.0
        %2812 = vmatprep.subr.mxu0 0.0
        %2813 = vmatpush2.msra.mxu0 0.0
        %2814 = vmatprep.subr.mxu0 0.0
        %2815 = vmatpush2.msra.mxu0 0.0
        %2816 = vmatprep.subr.mxu0 0.0
        %2817 = vmatpush2.msra.mxu0 0.0
        %2818 = vmatprep.subr.mxu0 0.0
        %2819 = vmatpush2.msra.mxu0 0.0
        %2820 = vmatprep.subr.mxu0 0.0
        %2821 = vmatpush2.msra.mxu0 0.0
        %2822 = vmatprep.subr.mxu0 0.0
        %2823 = vmatpush2.msra.mxu0 0.0
        %2824 = vmatprep.subr.mxu0 0.0
        %2825 = vmatpush2.msra.mxu0 0.0
        %2826 = vmatprep.mubr.f32.mxu0 0.0
        %2827 = vmatmul.mubr.f32.gmra.mxu0 %v2744
        %v2828 = vpop.f32.mrf.mxu0
        %v2829 = vadd.f32 %v2761, %v2828
        %v2830 = vpop.f32.mrf.mxu0
        %2831 = vdwg.mxu0
        %vm2832 = vcmp.gt.f32.partialorder %v2829, 0.0
        %v2833 = vmul.f32 %v2829, 0.1
        %v2834 = vsel %vm2832, %v2829, %v2833
        %v2835 = vld [vmem:[%s16] sm:$0xff]
        %v2836 = vld [vmem:[%s16 + $0x8] sm:$0xff]
        %v2837 = vld [vmem:[%s16 + $0x10] sm:$0xff]
        %v2838 = vld [vmem:[%s16 + $0x18] sm:$0xff]
        %v2839 = vld [vmem:[%s16 + $0x20] sm:$0xff]
        %v2840 = vld [vmem:[%s16 + $0x28] sm:$0xff]
        %v2841 = vld [vmem:[%s16 + $0x30] sm:$0xff]
        %v2842 = vld [vmem:[%s16 + $0x38] sm:$0xff]
        %v2843 = vld [vmem:[%s17] sm:$0x1]
        %vm2844 = vcmask 523264
        %v2846 = vsel %vm2844, %v2834, 0
        %2848 = vmatprep.subr.mxu0 0.0
        %2849 = vmatpush1.msra.mxu0 0.0
        %2850 = vmatprep.subr.mxu0 0.0
        %2851 = vmatpush1.msra.mxu0 0.0
        %2852 = vmatprep.subr.mxu0 0.0
        %2853 = vmatpush1.msra.mxu0 0.0
        %2854 = vmatprep.subr.mxu0 0.0
        %2855 = vmatpush1.msra.mxu0 0.0
        %2856 = vmatprep.subr.mxu0 0.0
        %2857 = vmatpush1.msra.mxu0 0.0
        %2858 = vmatprep.subr.mxu0 0.0
        %2859 = vmatpush1.msra.mxu0 0.0
        %2860 = vmatprep.subr.mxu0 0.0
        %2861 = vmatpush1.msra.mxu0 0.0
        %2862 = vmatprep.subr.mxu0 0.0
        %2863 = vmatpush1.msra.mxu0 0.0
        %2864 = vmatprep.subr.mxu0 0.0
        %2865 = vmatpush1.msra.mxu0 %v2842
        %2866 = vmatprep.subr.mxu0 0.0
        %2867 = vmatpush1.msra.mxu0 %v2841
        %2868 = vmatprep.subr.mxu0 0.0
        %2869 = vmatpush1.msra.mxu0 %v2840
        %2870 = vmatprep.subr.mxu0 0.0
        %2871 = vmatpush1.msra.mxu0 %v2839
        %2872 = vmatprep.subr.mxu0 0.0
        %2873 = vmatpush1.msra.mxu0 %v2838
        %2874 = vmatprep.subr.mxu0 0.0
        %2875 = vmatpush1.msra.mxu0 %v2837
        %2876 = vmatprep.subr.mxu0 0.0
        %2877 = vmatpush1.msra.mxu0 %v2836
        %2878 = vmatprep.subr.mxu0 0.0
        %2879 = vmatpush1.msra.mxu0 %v2835
        %2880 = vmatprep.subr.mxu0 0.0
        %2881 = vmatpush2.msra.mxu0 0.0
        %2882 = vmatprep.subr.mxu0 0.0
        %2883 = vmatpush2.msra.mxu0 0.0
        %2884 = vmatprep.subr.mxu0 0.0
        %2885 = vmatpush2.msra.mxu0 0.0
        %2886 = vmatprep.subr.mxu0 0.0
        %2887 = vmatpush2.msra.mxu0 0.0
        %2888 = vmatprep.subr.mxu0 0.0
        %2889 = vmatpush2.msra.mxu0 0.0
        %2890 = vmatprep.subr.mxu0 0.0
        %2891 = vmatpush2.msra.mxu0 0.0
        %2892 = vmatprep.subr.mxu0 0.0
        %2893 = vmatpush2.msra.mxu0 0.0
        %2894 = vmatprep.subr.mxu0 0.0
        %2895 = vmatpush2.msra.mxu0 0.0
        %2896 = vmatprep.subr.mxu0 0.0
        %2897 = vmatpush2.msra.mxu0 0.0
        %2898 = vmatprep.subr.mxu0 0.0
        %2899 = vmatpush2.msra.mxu0 0.0
        %2900 = vmatprep.subr.mxu0 0.0
        %2901 = vmatpush2.msra.mxu0 0.0
        %2902 = vmatprep.subr.mxu0 0.0
        %2903 = vmatpush2.msra.mxu0 0.0
        %2904 = vmatprep.subr.mxu0 0.0
        %2905 = vmatpush2.msra.mxu0 0.0
        %2906 = vmatprep.subr.mxu0 0.0
        %2907 = vmatpush2.msra.mxu0 0.0
        %2908 = vmatprep.subr.mxu0 0.0
        %2909 = vmatpush2.msra.mxu0 0.0
        %2910 = vmatprep.subr.mxu0 0.0
        %2911 = vmatpush2.msra.mxu0 0.0
        %2912 = vmatprep.mubr.f32.mxu0 0.0
        %2913 = vmatmul.mubr.f32.gmra.mxu0 %v2846
        %v2914 = vpop.f32.mrf.mxu0
        %v2915 = vadd.f32 %v2843, %v2914
        %v2916 = vpop.f32.mrf.mxu0
        %2917 = vdwg.mxu0
        %2918 = vst [vmem:[%s634] sm:$0x1] %v2652
        %2919 = vst [vmem:[%s628] sm:$0x1] %v2915
        %s2920 = sand.u32 %s430, 1
        %s2921 = scalar_lea.sflag [#allocation4], %s2920
        %s2922 = sand.u32 %s430, 1
        %s2923 = scalar_lea.vmem [#allocation7], %s2922
        %s2924 = sand.u32 %s456, 1
        %s2925 = scalar_lea.sflag [#allocation9], %s2924
        %s2926 = sand.u32 %s456, 1
        %s2927 = scalar_lea.vmem [#allocation8], %s2926
        // Predicated region
        $region101: #{tpu_custom_call.1} parent=91 // pred_check
          %p2928 = pneg %p440
        $region102: #{tpu_custom_call.1} parent=91 // pred_check_branch
          %2930 = sbr.rel (%p2928) target = $region104
        $region103: #{tpu_custom_call.1} parent=91 // pred_region
          %s2932 = ssub.s32 16, 16
          %2933 = vsyncadd %s2921, %s2932
          %s2934 = smul.addr %s39, 16
          %s2935 = scalar_lea.hbm %s18, %s2934
          %s2937 = sshll.u32 %s2923, 4
          %s2938 = int_to_ptr.vmem [resolvable:$true] %s2937
          %2940 = dma.vmem_to_hbm [thread:$0]  %s2938, 16, %s2935, %s2921
        $region104: #{tpu_custom_call.1} parent=91 // pred_fallthru
          _
        // Predicated region
        $region105: #{tpu_custom_call.1} parent=91 // pred_check
          %p2941 = pneg %p466
        $region106: #{tpu_custom_call.1} parent=91 // pred_check_branch
          %2943 = sbr.rel (%p2941) target = $region108
        $region107: #{tpu_custom_call.1} parent=91 // pred_region
          %s2945 = ssub.s32 16, 16
          %2946 = vsyncadd %s2925, %s2945
          %s2947 = smul.addr %s39, 16
          %s2948 = scalar_lea.hbm %s19, %s2947
          %s2950 = sshll.u32 %s2927, 4
          %s2951 = int_to_ptr.vmem [resolvable:$true] %s2950
          %2953 = dma.vmem_to_hbm [thread:$0]  %s2951, 16, %s2948, %s2925
        $region108: #{tpu_custom_call.1} parent=91 // pred_fallthru
          _
      $region92: #{tpu_custom_call.1} parent=5 // pred_fallthru
        _
      %p2954 = scmp.le.s32.totalorder 2, %s34
      // Predicated region
      $region109: #{tpu_custom_call.1} parent=5 // pred_check
        %p2955 = pneg %p2954
      $region110: #{tpu_custom_call.1} parent=5 // pred_check_branch
        %2957 = sbr.rel (%p2955) target = $region112
      $region111: #{tpu_custom_call.1} parent=5 // pred_region
        %s2958 = ssub.s32 %s34, 2
        // Predicated region
        $region113: #{tpu_custom_call.1} parent=111 // pred_check
          %p2959 = pneg %p446
        $region114: #{tpu_custom_call.1} parent=111 // pred_check_branch
          %2961 = sbr.rel (%p2959) target = $region116
        $region115: #{tpu_custom_call.1} parent=111 // pred_region
          %s2962 = sand.u32 %s431, 1
          %s2963 = scalar_lea.sflag [#allocation4], %s2962
          %s2964 = sand.u32 %s431, 1
          %s2965 = scalar_lea.vmem [#allocation7], %s2964
          %2966 = dma.done %s2963, 16
        $region116: #{tpu_custom_call.1} parent=111 // pred_fallthru
          _
        // Predicated region
        $region117: #{tpu_custom_call.1} parent=111 // pred_check
          %p2967 = pneg %p472
        $region118: #{tpu_custom_call.1} parent=111 // pred_check_branch
          %2969 = sbr.rel (%p2967) target = $region120
        $region119: #{tpu_custom_call.1} parent=111 // pred_region
          %s2970 = sand.u32 %s457, 1
          %s2971 = scalar_lea.sflag [#allocation9], %s2970
          %s2972 = sand.u32 %s457, 1
          %s2973 = scalar_lea.vmem [#allocation8], %s2972
          %2974 = dma.done %s2971, 16
        $region120: #{tpu_custom_call.1} parent=111 // pred_fallthru
          _
      $region112: #{tpu_custom_call.1} parent=5 // pred_fallthru
        _
    $region6: #{tpu_custom_call.1} parent=1 // loop_footer
      %s38 = sadd.s32 1, %s34
    $region7: #{tpu_custom_call.1} parent=1 // loop_footer_branch
      %33 = sbr.rel target = $region3
    $region8: #{tpu_custom_call.1} parent=1 // loop_exit
      _
    %2975 = vsyncpa [#allocation3], 1
    %s2976 = scalar_lea.sflag [#allocation3], 1
    %2977 = vsyncpa %s2976, 1
    %2978 = vsyncpa [#allocation6], 1
    %2979 = vsyncpa [#allocation4], 1
    %s2980 = scalar_lea.sflag [#allocation4], 1
    %2981 = vsyncpa %s2980, 1
    %2982 = vsyncpa [#allocation9], 1
    %s2983 = scalar_lea.sflag [#allocation9], 1
    %2984 = vsyncpa %s2983, 1

</llo_original>
